<compile_context>
chip_gen: v7x
topology: tpu7x:2x2x1
jax: 0.10.0
libtpu: 0.0.40
codegen_flags: <defaults>
</compile_context>

<pallas_src>
import math
import functools

import jax
import jax.numpy as jnp
from jax import lax
from jax.experimental import pallas as pl
from jax.experimental.pallas import tpu as pltpu

LANE = 128
SUBLANE = 8


def _round_up(v, m):
    return ((v + m - 1) // m) * m


def _pick_tile(n, cap, align):
    """Largest divisor of n that is <= cap and a multiple of `align` (or n itself)."""
    for t in range(max(1, min(cap, n)), 0, -1):
        if n % t == 0 and (t % align == 0 or t == n):
            return t
    return n


def _layernorm_padded(x, gamma, beta, true_d, eps=1e-5):
    """LayerNorm over the last axis of a zero-padded tensor.

    `x` has `true_d` real columns followed by zero padding; `gamma`/`beta` are zero
    in the padded columns, so padded outputs stay exactly zero.
    """
    col = jax.lax.broadcasted_iota(jnp.int32, x.shape, x.ndim - 1)
    mask = col < true_d
    mean = jnp.sum(x, axis=-1, keepdims=True) * (1.0 / true_d)
    cent = jnp.where(mask, x - mean, 0.0)
    var = jnp.sum(cent * cent, axis=-1, keepdims=True) * (1.0 / true_d)
    inv = jax.lax.rsqrt(var + eps)
    return cent * inv * gamma + beta


def _gelu(x, approximate):
    if approximate:
        return jax.nn.gelu(x, approximate=True)      # tanh form -> EUP
    # PyTorch nn.GELU default: exact erf formulation.
    return 0.5 * x * (1.0 + jax.lax.erf(x * (1.0 / math.sqrt(2.0))))


def token_transformer_kernel(
    x_ref,                    # (Bt, N, Dp)         compute dtype
    g1_ref, b1_ref,           # (1, Dp)             f32
    wq_ref, wk_ref, wv_ref,   # (Dp, Cp)            compute dtype (scale folded in wq)
    wproj_ref, bproj_ref,     # (Cp, Cp), (1, Cp)
    g2_ref, b2_ref,           # (1, Cp)             f32
    w1_ref, bb1_ref,          # (Cp, Hp), (1, Hp)
    w2_ref, bb2_ref,          # (Hp, Cp), (1, Cp)
    o_ref,                    # (Bt*nt, t_blk, Cp)  out dtype
    q_s, k_s, v_s,            # (Bt*nt, t_blk, Cp)  VMEM scratch, compute dtype
    *, dim_true, in_dim_true, bf16_softmax, approx_gelu,
):
    Bt, N, Dp = x_ref.shape
    Cp = wq_ref.shape[1]
    t_blk = q_s.shape[1]
    nt = N // t_blk
    cdtype = wq_ref.dtype
    f32 = jnp.float32

    # ---- norm1 over the full (Bt*N, Dp) slab (f32 stats; padded cols stay zero) ----
    x = x_ref[...].astype(f32).reshape(Bt * N, Dp)
    xn = _layernorm_padded(x, g1_ref[...], b1_ref[...], dim_true).astype(cdtype)

    # ---- QKV projections, M = Bt*N (softmax scale already folded into wq) ----
    # Stored tile-major (Bt*nt, t_blk, Cp) so all dynamic indexing below is on the
    # leading, untiled axis.
    q_s[...] = jnp.dot(xn, wq_ref[...], preferred_element_type=f32
                       ).reshape(Bt * nt, t_blk, Cp).astype(cdtype)
    k_s[...] = jnp.dot(xn, wk_ref[...], preferred_element_type=f32
                       ).reshape(Bt * nt, t_blk, Cp).astype(cdtype)
    v_s[...] = jnp.dot(xn, wv_ref[...], preferred_element_type=f32
                       ).reshape(Bt * nt, t_blk, Cp).astype(cdtype)

    nk = nt   # q and kv share the token tiling

    # ---- per (batch element, q-tile): flash attention + proj + LN2 + MLP ----
    @pl.loop(0, Bt * nt)
    def _(idx):
        t = lax.rem(idx, nt)
        base = idx - t                          # first kv tile of this batch element
        qb = q_s[idx]                           # (t_blk, Cp) compute dtype

        def kv_body(ki, carry):
            m_i, l_i, acc = carry
            kb = k_s[base + ki]
            vb = v_s[base + ki]
            # TODO(synk): verify via pl.lower_as_mlir that contracting kb on its last
            # dim does not force a per-tile XLU relayout; if it does, hoist a single
            # K transpose per grid step instead.
            s = jnp.einsum('qd,kd->qk', qb, kb, preferred_element_type=f32)
            m_new = jnp.maximum(m_i, jnp.max(s, axis=-1, keepdims=True))
            alpha = jnp.exp(m_i - m_new)
            sm = s - m_new
            if bf16_softmax:
                sm = sm.astype(jnp.bfloat16)    # bf16 EUP on v6e/v7x (f32 path untouched)
            p = jnp.exp(sm)
            l_new = alpha * l_i + jnp.sum(p.astype(f32), axis=-1, keepdims=True)
            acc_new = alpha * acc + jnp.dot(p.astype(cdtype), vb,
                                            preferred_element_type=f32)
            return m_new, l_new, acc_new

        m0 = jnp.full((t_blk, 1), -jnp.inf, f32)
        l0 = jnp.zeros((t_blk, 1), f32)
        a0 = jnp.zeros((t_blk, Cp), f32)
        m_i, l_i, acc = lax.fori_loop(0, nk, kv_body, (m0, l0, a0), unroll=nk <= 4)

        av = (acc * pl.reciprocal(l_i)).astype(cdtype)          # (t_blk, Cp)

        # proj + residual: x = v.squeeze(1) + proj(attn @ v)   (num_heads == 1)
        proj = jnp.dot(av, wproj_ref[...], preferred_element_type=f32) + bproj_ref[...]
        a_out = v_s[idx].astype(f32) + proj

        # norm2 + MLP (GELU) + residual
        yn = _layernorm_padded(a_out, g2_ref[...], b2_ref[...], in_dim_true)
        h = jnp.dot(yn.astype(cdtype), w1_ref[...], preferred_element_type=f32) + bb1_ref[...]
        h = _gelu(h, approx_gelu)
        mlp = jnp.dot(h.astype(cdtype), w2_ref[...], preferred_element_type=f32) + bb2_ref[...]

        o_ref[idx] = (a_out + mlp).astype(o_ref.dtype)


def token_transformer_pallas(x, params, *, in_dim, num_heads=1,
                             compute_dtype=jnp.float32, out_dtype=None,
                             batch_block=None, token_block=256,
                             approx_gelu=False):
    assert num_heads == 1, "Token_transformer's Attention reshape requires num_heads == 1"
    B, N, dim = x.shape
    scale = (dim // num_heads) ** (-0.5)
    hidden = params["w1"].shape[1]
    f32 = jnp.float32
    cdtype = jnp.dtype(compute_dtype)
    odtype = jnp.dtype(out_dtype) if out_dtype is not None else cdtype
    csz, osz = cdtype.itemsize, odtype.itemsize
    align = 8 if csz == 4 else 16                 # sublane packing (f32 vs bf16)

    Dp = _round_up(dim, LANE)       # padded input channels
    Cp = _round_up(in_dim, LANE)    # padded attention / output channels
    Hp = _round_up(hidden, LANE)    # padded MLP hidden

    # ---- generation-aware sizing (v7x: 64 MiB VMEM/TC, v5e/v6e: 128 MiB) ----
    try:
        vmem_cap = int(pltpu.get_tpu_info().vmem_capacity_bytes)
    except Exception:
        vmem_cap = 64 * 1024 * 1024
    vmem_limit = min(int(vmem_cap * 0.9), 128 * 1024 * 1024)
    budget = max(int(vmem_limit * 0.8), 8 * 1024 * 1024)

    t_blk = _pick_tile(N, min(token_block, N), align)
    nt = N // t_blk

    def step_bytes(bt):
        io = 2 * bt * N * Dp * csz + 2 * bt * N * Cp * osz        # double-buffered in/out
        w = 2 * ((3 * Dp * Cp + Cp * Cp + 2 * Cp * Hp) * csz
                 + (2 * Dp + 5 * Cp + Hp) * 4)                     # weights (conservative x2)
        scratch = 3 * bt * N * Cp * csz                            # q/k/v VMEM scratch
        ln = bt * N * Dp * (4 + csz)                               # x f32 + xn
        qkv_tmp = bt * N * Cp * 4                                  # one f32 projection live
        attn = t_blk * (2 * t_blk + 3 * Cp) * 4                    # s, p, acc/av
        mlp = t_blk * (Hp + 3 * Cp) * 4
        return io + w + scratch + ln + qkv_tmp + attn + mlp

    bt_cap = min(8, B, batch_block if batch_block else 8)
    if B >= 2:
        bt_cap = min(bt_cap, max(1, B // 2))      # >=2 grid steps -> both v7x TCs busy
    if N % align:
        bt_cap = 1                                 # avoid (Bt*N, *) reshapes crossing tiles
    cands = [d for d in range(bt_cap, 0, -1) if B % d == 0]
    Bt = next((d for d in cands if step_bytes(d) <= budget), 1)

    def pad2(a, rows, cols, dtype):
        a = jnp.asarray(a, dtype)
        return jnp.pad(a, ((0, rows - a.shape[0]), (0, cols - a.shape[1])))

    # TODO(synk): for production, hoist this channel padding (and the final slice /
    # reshape) to model setup so per-call HBM traffic stays at the true tensor size.
    xp = jnp.pad(x.astype(cdtype), ((0, 0), (0, 0), (0, Dp - dim)))

    # Split the fused qkv weight (no intra-vreg slicing in-kernel) and fold the
    # softmax scale into wq (grid-invariant weight -> zero recurring cost).
    wqkv = jnp.asarray(params["wqkv"], f32)
    wq = pad2(wqkv[:, 0 * in_dim:1 * in_dim] * scale, Dp, Cp, cdtype)
    wk = pad2(wqkv[:, 1 * in_dim:2 * in_dim], Dp, Cp, cdtype)
    wv = pad2(wqkv[:, 2 * in_dim:3 * in_dim], Dp, Cp, cdtype)

    g1 = pad2(params["g1"], 1, Dp, f32)
    b1 = pad2(params["b1"], 1, Dp, f32)
    wproj = pad2(params["wproj"], Cp, Cp, cdtype)
    bproj = pad2(params["bproj"], 1, Cp, f32)
    g2 = pad2(params["g2"], 1, Cp, f32)
    b2 = pad2(params["b2"], 1, Cp, f32)
    w1 = pad2(params["w1"], Cp, Hp, cdtype)
    bb1 = pad2(params["bb1"], 1, Hp, f32)
    w2 = pad2(params["w2"], Hp, Cp, cdtype)
    bb2 = pad2(params["bb2"], 1, Cp, f32)

    kernel = functools.partial(
        token_transformer_kernel,
        dim_true=dim, in_dim_true=in_dim,
        bf16_softmax=(cdtype == jnp.dtype(jnp.bfloat16)),
        approx_gelu=approx_gelu)

    operands = (xp, g1, b1, wq, wk, wv, wproj, bproj, g2, b2, w1, bb1, w2, bb2)

    def build(single_buffer_weights):
        pm = {"pipeline_mode": pl.Buffered(1)} if single_buffer_weights else {}

        def const2d(rows, cols):
            # Grid-invariant weight/bias block: constant index_map, whole array.
            return pl.BlockSpec((rows, cols), lambda b: (0, 0), **pm)

        return pl.pallas_call(
            kernel,
            out_shape=jax.ShapeDtypeStruct((B * nt, t_blk, Cp), odtype),
            grid_spec=pltpu.PrefetchScalarGridSpec(
                num_scalar_prefetch=0,
                grid=(B // Bt,),
                in_specs=[
                    pl.BlockSpec((Bt, N, Dp), lambda b: (b, 0, 0)),        # x
                    const2d(1, Dp), const2d(1, Dp),                        # norm1 gamma/beta
                    const2d(Dp, Cp), const2d(Dp, Cp), const2d(Dp, Cp),     # wq, wk, wv
                    const2d(Cp, Cp), const2d(1, Cp),                       # proj w / b
                    const2d(1, Cp), const2d(1, Cp),                        # norm2 gamma/beta
                    const2d(Cp, Hp), const2d(1, Hp),                       # fc1 w / b
                    const2d(Hp, Cp), const2d(1, Cp),                       # fc2 w / b
                ],
                out_specs=pl.BlockSpec((Bt * nt, t_blk, Cp), lambda b: (b, 0, 0)),
                scratch_shapes=[
                    pltpu.VMEM((Bt * nt, t_blk, Cp), cdtype),   # q
                    pltpu.VMEM((Bt * nt, t_blk, Cp), cdtype),   # k
                    pltpu.VMEM((Bt * nt, t_blk, Cp), cdtype),   # v
                ],
            ),
            compiler_params=pltpu.CompilerParams(
                dimension_semantics=("parallel",),
                vmem_limit_bytes=vmem_limit),
        )

    try:
        out = build(True)(*operands)
    except Exception:
        # pipeline_mode=pl.Buffered(1) unsupported on this jax/libtpu combination:
        # fall back to default double-buffered weight blocks.
        out = build(False)(*operands)

    # Padded channels are exactly zero; restore (B, N, :) layout and true in_dim.
    return out.reshape(B, N, Cp)[:, :, :in_dim]


def token_transformer_ref(x, params, *, in_dim, num_heads=1):
    """Pure-JAX f32 reference mirroring the PyTorch forward."""
    B, N, dim = x.shape
    scale = (dim // num_heads) ** (-0.5)

    def ln(t, g, b, eps=1e-5):
        mu = jnp.mean(t, axis=-1, keepdims=True)
        var = jnp.mean((t - mu) ** 2, axis=-1, keepdims=True)
        return (t - mu) * jax.lax.rsqrt(var + eps) * g + b

    xn = ln(x, params["g1"], params["b1"])
    qkv = xn @ params["wqkv"]                         # (B, N, 3*in_dim)
    q, k, v = jnp.split(qkv, 3, axis=-1)
    attn = jax.nn.softmax((q * scale) @ jnp.swapaxes(k, -2, -1), axis=-1)
    av = attn @ v
    a_out = v + (av @ params["wproj"] + params["bproj"])
    yn = ln(a_out, params["g2"], params["b2"])
    h = jax.nn.gelu(yn @ params["w1"] + params["bb1"], approximate=False)
    return a_out + (h @ params["w2"] + params["bb2"])


def make_params(key, dim, in_dim, mlp_ratio=1.0):
    hidden = int(in_dim * mlp_ratio)
    ks = jax.random.split(key, 6)
    s = 0.05
    return {
        "g1": jnp.ones((1, dim), jnp.float32),
        "b1": jnp.zeros((1, dim), jnp.float32),
        "wqkv": s * jax.random.normal(ks[0], (dim, 3 * in_dim), jnp.float32),
        "wproj": s * jax.random.normal(ks[1], (in_dim, in_dim), jnp.float32),
        "bproj": s * jax.random.normal(ks[2], (1, in_dim), jnp.float32),
        "g2": jnp.ones((1, in_dim), jnp.float32),
        "b2": jnp.zeros((1, in_dim), jnp.float32),
        "w1": s * jax.random.normal(ks[3], (in_dim, hidden), jnp.float32),
        "bb1": jnp.zeros((1, hidden), jnp.float32),
        "w2": s * jax.random.normal(ks[4], (hidden, in_dim), jnp.float32),
        "bb2": jnp.zeros((1, in_dim), jnp.float32),
    }


if __name__ == "__main__":
    # Small shapes consistent with the module: B=2, N=16 tokens, dim=32, in_dim=16.
    B, N, dim, in_dim = 2, 16, 32, 16
    num_heads = 1          # required by the reshape in Attention.forward
    mlp_ratio = 1.0

    key = jax.random.PRNGKey(0)
    kx, kp, kx2 = jax.random.split(key, 3)
    x = jax.random.normal(kx, (B, N, dim), jnp.float32)
    params = make_params(kp, dim, in_dim, mlp_ratio)

    ref = token_transformer_ref(x, params, in_dim=in_dim, num_heads=num_heads)

    # f32 operands: tight check against the PyTorch-equivalent reference.
    out = token_transformer_pallas(x, params, in_dim=in_dim, num_heads=num_heads,
                                   compute_dtype=jnp.float32)
    out = jax.block_until_ready(out)
    assert out.shape == (B, N, in_dim)
    assert jnp.allclose(out, ref, atol=1e-4, rtol=1e-4), \
        f"f32 max err {jnp.max(jnp.abs(out - ref))}"

    # f32, multi-tile config: exercises the pl.loop q-tiling + fori_loop kv path.
    N2 = 32
    x2 = jax.random.normal(kx2, (B, N2, dim), jnp.float32)
    ref2 = token_transformer_ref(x2, params, in_dim=in_dim, num_heads=num_heads)
    out2 = token_transformer_pallas(x2, params, in_dim=in_dim, num_heads=num_heads,
                                    compute_dtype=jnp.float32, token_block=16)
    out2 = jax.block_until_ready(out2)
    assert jnp.allclose(out2, ref2, atol=1e-4, rtol=1e-4), \
        f"tiled f32 max err {jnp.max(jnp.abs(out2 - ref2))}"

    # bf16 operands / output (f32 LN stats, softmax accum, residuals): smoke check.
    out_bf16 = token_transformer_pallas(x, params, in_dim=in_dim,
                                        num_heads=num_heads,
                                        compute_dtype=jnp.bfloat16)
    out_bf16 = jax.block_until_ready(out_bf16)
    assert jnp.allclose(out_bf16.astype(jnp.float32), ref, atol=5e-2, rtol=5e-2), \
        f"bf16 max err {jnp.max(jnp.abs(out_bf16.astype(jnp.float32) - ref))}"

    print("KERNEL_OK")
</pallas_src>

<mosaic_0001>
module attributes {stable_mosaic.version = 11 : i64} {
  func.func @token_transformer_kernel(%arg0: i32, %arg1: memref<1x16x128xf32, #tpu.memory_space<vmem>>, %arg2: memref<1x128xf32, #tpu.memory_space<vmem>>, %arg3: memref<1x128xf32, #tpu.memory_space<vmem>>, %arg4: memref<128x128xf32, #tpu.memory_space<vmem>>, %arg5: memref<128x128xf32, #tpu.memory_space<vmem>>, %arg6: memref<128x128xf32, #tpu.memory_space<vmem>>, %arg7: memref<128x128xf32, #tpu.memory_space<vmem>>, %arg8: memref<1x128xf32, #tpu.memory_space<vmem>>, %arg9: memref<1x128xf32, #tpu.memory_space<vmem>>, %arg10: memref<1x128xf32, #tpu.memory_space<vmem>>, %arg11: memref<128x128xf32, #tpu.memory_space<vmem>>, %arg12: memref<1x128xf32, #tpu.memory_space<vmem>>, %arg13: memref<128x128xf32, #tpu.memory_space<vmem>>, %arg14: memref<1x128xf32, #tpu.memory_space<vmem>>, %arg15: memref<1x16x128xf32, #tpu.memory_space<vmem>>, %arg16: memref<1x16x128xf32, #tpu.memory_space<vmem>>, %arg17: memref<1x16x128xf32, #tpu.memory_space<vmem>>, %arg18: memref<1x16x128xf32, #tpu.memory_space<vmem>>) attributes {dimension_semantics = [#tpu.dimension_semantics<parallel>], iteration_bounds = array<i64: 2>, scalar_prefetch = 0 : i64, scratch_operands = 3 : i64, tpu.core_type = #tpu.core_type<tc>, window_params = [{transform_indices = @transform_0, window_bounds = array<i64: 1, 16, 128>}, {pipeline_mode = #tpu.pipeline_mode<synchronous>, transform_indices = @transform_1, window_bounds = array<i64: 1, 128>}, {pipeline_mode = #tpu.pipeline_mode<synchronous>, transform_indices = @transform_2, window_bounds = array<i64: 1, 128>}, {pipeline_mode = #tpu.pipeline_mode<synchronous>, transform_indices = @transform_3, window_bounds = array<i64: 128, 128>}, {pipeline_mode = #tpu.pipeline_mode<synchronous>, transform_indices = @transform_4, window_bounds = array<i64: 128, 128>}, {pipeline_mode = #tpu.pipeline_mode<synchronous>, transform_indices = @transform_5, window_bounds = array<i64: 128, 128>}, {pipeline_mode = #tpu.pipeline_mode<synchronous>, transform_indices = @transform_6, window_bounds = array<i64: 128, 128>}, {pipeline_mode = #tpu.pipeline_mode<synchronous>, transform_indices = @transform_7, window_bounds = array<i64: 1, 128>}, {pipeline_mode = #tpu.pipeline_mode<synchronous>, transform_indices = @transform_8, window_bounds = array<i64: 1, 128>}, {pipeline_mode = #tpu.pipeline_mode<synchronous>, transform_indices = @transform_9, window_bounds = array<i64: 1, 128>}, {pipeline_mode = #tpu.pipeline_mode<synchronous>, transform_indices = @transform_10, window_bounds = array<i64: 128, 128>}, {pipeline_mode = #tpu.pipeline_mode<synchronous>, transform_indices = @transform_11, window_bounds = array<i64: 1, 128>}, {pipeline_mode = #tpu.pipeline_mode<synchronous>, transform_indices = @transform_12, window_bounds = array<i64: 128, 128>}, {pipeline_mode = #tpu.pipeline_mode<synchronous>, transform_indices = @transform_13, window_bounds = array<i64: 1, 128>}, {transform_indices = @transform_14, window_bounds = array<i64: 1, 16, 128>}]} {
    %c0 = arith.constant 0 : index
    %c0_0 = arith.constant 0 : index
    %c0_1 = arith.constant 0 : index
    %0 = vector.load %arg1[%c0, %c0_0, %c0_1] : memref<1x16x128xf32, #tpu.memory_space<vmem>>, vector<1x16x128xf32>
    %1 = vector.shape_cast %0 : vector<1x16x128xf32> to vector<16x128xf32>
    %c0_2 = arith.constant 0 : index
    %c0_3 = arith.constant 0 : index
    %2 = vector.load %arg2[%c0_2, %c0_3] : memref<1x128xf32, #tpu.memory_space<vmem>>, vector<1x128xf32>
    %c0_4 = arith.constant 0 : index
    %c0_5 = arith.constant 0 : index
    %3 = vector.load %arg3[%c0_4, %c0_5] : memref<1x128xf32, #tpu.memory_space<vmem>>, vector<1x128xf32>
    %4 = tpu.iota {dimensions = array<i32: 1>} : vector<16x128xi32>
    %c32_i32 = arith.constant 32 : i32
    %5 = vector.broadcast %c32_i32 : i32 to vector<16x128xi32>
    %6 = arith.cmpi slt, %4, %5 : vector<16x128xi32>
    %cst = arith.constant dense<0.000000e+00> : vector<16xf32>
    %7 = vector.multi_reduction <add>, %1, %cst [1] : vector<16x128xf32> to vector<16xf32>
    %8 = vector.shape_cast %7 : vector<16xf32> to vector<16x1xf32>
    %cst_6 = arith.constant 3.125000e-02 : f32
    %9 = vector.broadcast %cst_6 : f32 to vector<16x1xf32>
    %10 = arith.mulf %8, %9 : vector<16x1xf32>
    %11 = vector.broadcast %10 : vector<16x1xf32> to vector<16x128xf32>
    %12 = arith.subf %1, %11 : vector<16x128xf32>
    %cst_7 = arith.constant 0.000000e+00 : f32
    %13 = vector.broadcast %cst_7 : f32 to vector<16x128xf32>
    %14 = arith.select %6, %12, %13 : vector<16x128xi1>, vector<16x128xf32>
    %15 = arith.mulf %14, %14 : vector<16x128xf32>
    %cst_8 = arith.constant dense<0.000000e+00> : vector<16xf32>
    %16 = vector.multi_reduction <add>, %15, %cst_8 [1] : vector<16x128xf32> to vector<16xf32>
    %17 = vector.shape_cast %16 : vector<16xf32> to vector<16x1xf32>
    %cst_9 = arith.constant 3.125000e-02 : f32
    %18 = vector.broadcast %cst_9 : f32 to vector<16x1xf32>
    %19 = arith.mulf %17, %18 : vector<16x1xf32>
    %cst_10 = arith.constant 9.99999974E-6 : f32
    %20 = vector.broadcast %cst_10 : f32 to vector<16x1xf32>
    %21 = arith.addf %19, %20 : vector<16x1xf32>
    %22 = math.rsqrt %21 : vector<16x1xf32>
    %23 = vector.broadcast %22 : vector<16x1xf32> to vector<16x128xf32>
    %24 = arith.mulf %14, %23 : vector<16x128xf32>
    %25 = vector.broadcast %2 : vector<1x128xf32> to vector<16x128xf32>
    %26 = arith.mulf %24, %25 : vector<16x128xf32>
    %27 = vector.broadcast %3 : vector<1x128xf32> to vector<16x128xf32>
    %28 = arith.addf %26, %27 : vector<16x128xf32>
    %c0_11 = arith.constant 0 : index
    %c0_12 = arith.constant 0 : index
    %29 = vector.load %arg4[%c0_11, %c0_12] : memref<128x128xf32, #tpu.memory_space<vmem>>, vector<128x128xf32>
    %cst_13 = arith.constant dense<0.000000e+00> : vector<16x128xf32>
    %30 = tpu.matmul %28, %29, %cst_13 {dimension_numbers = #tpu.dot_dimension_numbers<[1], [0], [0], [1], [0, 0, 1, 1], [], []>} : vector<16x128xf32>, vector<128x128xf32>, vector<16x128xf32> -> vector<16x128xf32>
    %31 = vector.shape_cast %30 : vector<16x128xf32> to vector<1x16x128xf32>
    %c0_14 = arith.constant 0 : index
    %c0_15 = arith.constant 0 : index
    %c0_16 = arith.constant 0 : index
    %32 = vector.load %arg16[%c0_14, %c0_15, %c0_16] : memref<1x16x128xf32, #tpu.memory_space<vmem>>, vector<1x16x128xf32>
    tpu.vector_store %arg16[%c0_14, %c0_15, %c0_16], %31 {strides = array<i32>} : memref<1x16x128xf32, #tpu.memory_space<vmem>>, vector<1x16x128xf32>,
    %c0_17 = arith.constant 0 : index
    %c0_18 = arith.constant 0 : index
    %33 = vector.load %arg5[%c0_17, %c0_18] : memref<128x128xf32, #tpu.memory_space<vmem>>, vector<128x128xf32>
    %cst_19 = arith.constant dense<0.000000e+00> : vector<16x128xf32>
    %34 = tpu.matmul %28, %33, %cst_19 {dimension_numbers = #tpu.dot_dimension_numbers<[1], [0], [0], [1], [0, 0, 1, 1], [], []>} : vector<16x128xf32>, vector<128x128xf32>, vector<16x128xf32> -> vector<16x128xf32>
    %35 = vector.shape_cast %34 : vector<16x128xf32> to vector<1x16x128xf32>
    %c0_20 = arith.constant 0 : index
    %c0_21 = arith.constant 0 : index
    %c0_22 = arith.constant 0 : index
    %36 = vector.load %arg17[%c0_20, %c0_21, %c0_22] : memref<1x16x128xf32, #tpu.memory_space<vmem>>, vector<1x16x128xf32>
    tpu.vector_store %arg17[%c0_20, %c0_21, %c0_22], %35 {strides = array<i32>} : memref<1x16x128xf32, #tpu.memory_space<vmem>>, vector<1x16x128xf32>,
    %c0_23 = arith.constant 0 : index
    %c0_24 = arith.constant 0 : index
    %37 = vector.load %arg6[%c0_23, %c0_24] : memref<128x128xf32, #tpu.memory_space<vmem>>, vector<128x128xf32>
    %cst_25 = arith.constant dense<0.000000e+00> : vector<16x128xf32>
    %38 = tpu.matmul %28, %37, %cst_25 {dimension_numbers = #tpu.dot_dimension_numbers<[1], [0], [0], [1], [0, 0, 1, 1], [], []>} : vector<16x128xf32>, vector<128x128xf32>, vector<16x128xf32> -> vector<16x128xf32>
    %39 = vector.shape_cast %38 : vector<16x128xf32> to vector<1x16x128xf32>
    %c0_26 = arith.constant 0 : index
    %c0_27 = arith.constant 0 : index
    %c0_28 = arith.constant 0 : index
    %40 = vector.load %arg18[%c0_26, %c0_27, %c0_28] : memref<1x16x128xf32, #tpu.memory_space<vmem>>, vector<1x16x128xf32>
    tpu.vector_store %arg18[%c0_26, %c0_27, %c0_28], %39 {strides = array<i32>} : memref<1x16x128xf32, #tpu.memory_space<vmem>>, vector<1x16x128xf32>,
    %c0_i32 = arith.constant 0 : i32
    %c1_i32 = arith.constant 1 : i32
    %41 = arith.muli %c0_i32, %c1_i32 : i32
    %c0_i32_29 = arith.constant 0 : i32
    %42 = arith.addi %c0_i32_29, %41 : i32
    %c1_i32_30 = arith.constant 1 : i32
    %43 = arith.remsi %42, %c1_i32_30 : i32
    %44 = arith.subi %42, %43 : i32
    %45 = arith.index_cast %42 : i32 to index
    %c0_31 = arith.constant 0 : index
    %c0_32 = arith.constant 0 : index
    %46 = vector.load %arg16[%45, %c0_31, %c0_32] : memref<1x16x128xf32, #tpu.memory_space<vmem>>, vector<1x16x128xf32>
    %47 = vector.shape_cast %46 : vector<1x16x128xf32> to vector<16x128xf32>
    %cst_33 = arith.constant 0xFF800000 : f32
    %48 = vector.broadcast %cst_33 : f32 to vector<16x1xf32>
    %cst_34 = arith.constant 0.000000e+00 : f32
    %49 = vector.broadcast %cst_34 : f32 to vector<16x1xf32>
    %cst_35 = arith.constant 0.000000e+00 : f32
    %50 = vector.broadcast %cst_35 : f32 to vector<16x128xf32>
    %c0_i32_36 = arith.constant 0 : i32
    %51 = arith.addi %44, %c0_i32_36 : i32
    %52 = arith.index_cast %51 : i32 to index
    %c0_37 = arith.constant 0 : index
    %c0_38 = arith.constant 0 : index
    %53 = vector.load %arg17[%52, %c0_37, %c0_38] : memref<1x16x128xf32, #tpu.memory_space<vmem>>, vector<1x16x128xf32>
    %54 = vector.shape_cast %53 : vector<1x16x128xf32> to vector<16x128xf32>
    %55 = arith.addi %44, %c0_i32_36 : i32
    %56 = arith.index_cast %55 : i32 to index
    %c0_39 = arith.constant 0 : index
    %c0_40 = arith.constant 0 : index
    %57 = vector.load %arg18[%56, %c0_39, %c0_40] : memref<1x16x128xf32, #tpu.memory_space<vmem>>, vector<1x16x128xf32>
    %58 = vector.shape_cast %57 : vector<1x16x128xf32> to vector<16x128xf32>
    "tpu.trace_start"() <{level = 10 : i32, message = "qd,kd->qk"}> : () -> ()
    %cst_41 = arith.constant dense<0.000000e+00> : vector<16x16xf32>
    %59 = tpu.matmul %47, %54, %cst_41 {dimension_numbers = #tpu.dot_dimension_numbers<[1], [1], [0], [0], [0, 0, 1, 0], [], []>} : vector<16x128xf32>, vector<16x128xf32>, vector<16x16xf32> -> vector<16x16xf32>
    "tpu.trace_stop"() : () -> ()
    %cst_42 = arith.constant dense<0xFF800000> : vector<16xf32>
    %60 = vector.multi_reduction <maximumf>, %59, %cst_42 [1] : vector<16x16xf32> to vector<16xf32>
    %61 = vector.shape_cast %60 : vector<16xf32> to vector<16x1xf32>
    %62 = arith.maximumf %48, %61 : vector<16x1xf32>
    %63 = arith.subf %48, %62 : vector<16x1xf32>
    %64 = math.exp %63 : vector<16x1xf32>
    %65 = vector.broadcast %62 : vector<16x1xf32> to vector<16x16xf32>
    %66 = arith.subf %59, %65 : vector<16x16xf32>
    %67 = math.exp %66 : vector<16x16xf32>
    %68 = arith.mulf %64, %49 : vector<16x1xf32>
    %cst_43 = arith.constant dense<0.000000e+00> : vector<16xf32>
    %69 = vector.multi_reduction <add>, %67, %cst_43 [1] : vector<16x16xf32> to vector<16xf32>
    %70 = vector.shape_cast %69 : vector<16xf32> to vector<16x1xf32>
    %71 = arith.addf %68, %70 : vector<16x1xf32>
    %72 = vector.broadcast %64 : vector<16x1xf32> to vector<16x128xf32>
    %73 = arith.mulf %72, %50 : vector<16x128xf32>
    %cst_44 = arith.constant dense<0.000000e+00> : vector<16x128xf32>
    %74 = tpu.matmul %67, %58, %cst_44 {dimension_numbers = #tpu.dot_dimension_numbers<[1], [0], [0], [1], [0, 0, 1, 1], [], []>} : vector<16x16xf32>, vector<16x128xf32>, vector<16x128xf32> -> vector<16x128xf32>
    %75 = arith.addf %73, %74 : vector<16x128xf32>
    %c1_i32_45 = arith.constant 1 : i32
    %76 = tpu.reciprocal %71 : vector<16x1xf32> -> vector<16x1xf32>
    %77 = vector.broadcast %76 : vector<16x1xf32> to vector<16x128xf32>
    %78 = arith.mulf %75, %77 : vector<16x128xf32>
    %c0_46 = arith.constant 0 : index
    %c0_47 = arith.constant 0 : index
    %79 = vector.load %arg7[%c0_46, %c0_47] : memref<128x128xf32, #tpu.memory_space<vmem>>, vector<128x128xf32>
    %cst_48 = arith.constant dense<0.000000e+00> : vector<16x128xf32>
    %80 = tpu.matmul %78, %79, %cst_48 {dimension_numbers = #tpu.dot_dimension_numbers<[1], [0], [0], [1], [0, 0, 1, 1], [], []>} : vector<16x128xf32>, vector<128x128xf32>, vector<16x128xf32> -> vector<16x128xf32>
    %c0_49 = arith.constant 0 : index
    %c0_50 = arith.constant 0 : index
    %81 = vector.load %arg8[%c0_49, %c0_50] : memref<1x128xf32, #tpu.memory_space<vmem>>, vector<1x128xf32>
    %82 = vector.broadcast %81 : vector<1x128xf32> to vector<16x128xf32>
    %83 = arith.addf %80, %82 : vector<16x128xf32>
    %84 = arith.index_cast %42 : i32 to index
    %c0_51 = arith.constant 0 : index
    %c0_52 = arith.constant 0 : index
    %85 = vector.load %arg18[%84, %c0_51, %c0_52] : memref<1x16x128xf32, #tpu.memory_space<vmem>>, vector<1x16x128xf32>
    %86 = vector.shape_cast %85 : vector<1x16x128xf32> to vector<16x128xf32>
    %87 = arith.addf %86, %83 : vector<16x128xf32>
    %c0_53 = arith.constant 0 : index
    %c0_54 = arith.constant 0 : index
    %88 = vector.load %arg9[%c0_53, %c0_54] : memref<1x128xf32, #tpu.memory_space<vmem>>, vector<1x128xf32>
    %c0_55 = arith.constant 0 : index
    %c0_56 = arith.constant 0 : index
    %89 = vector.load %arg10[%c0_55, %c0_56] : memref<1x128xf32, #tpu.memory_space<vmem>>, vector<1x128xf32>
    %90 = tpu.iota {dimensions = array<i32: 1>} : vector<16x128xi32>
    %c16_i32 = arith.constant 16 : i32
    %91 = vector.broadcast %c16_i32 : i32 to vector<16x128xi32>
    %92 = arith.cmpi slt, %90, %91 : vector<16x128xi32>
    %cst_57 = arith.constant dense<0.000000e+00> : vector<16xf32>
    %93 = vector.multi_reduction <add>, %87, %cst_57 [1] : vector<16x128xf32> to vector<16xf32>
    %94 = vector.shape_cast %93 : vector<16xf32> to vector<16x1xf32>
    %cst_58 = arith.constant 6.250000e-02 : f32
    %95 = vector.broadcast %cst_58 : f32 to vector<16x1xf32>
    %96 = arith.mulf %94, %95 : vector<16x1xf32>
    %97 = vector.broadcast %96 : vector<16x1xf32> to vector<16x128xf32>
    %98 = arith.subf %87, %97 : vector<16x128xf32>
    %cst_59 = arith.constant 0.000000e+00 : f32
    %99 = vector.broadcast %cst_59 : f32 to vector<16x128xf32>
    %100 = arith.select %92, %98, %99 : vector<16x128xi1>, vector<16x128xf32>
    %101 = arith.mulf %100, %100 : vector<16x128xf32>
    %cst_60 = arith.constant dense<0.000000e+00> : vector<16xf32>
    %102 = vector.multi_reduction <add>, %101, %cst_60 [1] : vector<16x128xf32> to vector<16xf32>
    %103 = vector.shape_cast %102 : vector<16xf32> to vector<16x1xf32>
    %cst_61 = arith.constant 6.250000e-02 : f32
    %104 = vector.broadcast %cst_61 : f32 to vector<16x1xf32>
    %105 = arith.mulf %103, %104 : vector<16x1xf32>
    %cst_62 = arith.constant 9.99999974E-6 : f32
    %106 = vector.broadcast %cst_62 : f32 to vector<16x1xf32>
    %107 = arith.addf %105, %106 : vector<16x1xf32>
    %108 = math.rsqrt %107 : vector<16x1xf32>
    %109 = vector.broadcast %108 : vector<16x1xf32> to vector<16x128xf32>
    %110 = arith.mulf %100, %109 : vector<16x128xf32>
    %111 = vector.broadcast %88 : vector<1x128xf32> to vector<16x128xf32>
    %112 = arith.mulf %110, %111 : vector<16x128xf32>
    %113 = vector.broadcast %89 : vector<1x128xf32> to vector<16x128xf32>
    %114 = arith.addf %112, %113 : vector<16x128xf32>
    %c0_63 = arith.constant 0 : index
    %c0_64 = arith.constant 0 : index
    %115 = vector.load %arg11[%c0_63, %c0_64] : memref<128x128xf32, #tpu.memory_space<vmem>>, vector<128x128xf32>
    %cst_65 = arith.constant dense<0.000000e+00> : vector<16x128xf32>
    %116 = tpu.matmul %114, %115, %cst_65 {dimension_numbers = #tpu.dot_dimension_numbers<[1], [0], [0], [1], [0, 0, 1, 1], [], []>} : vector<16x128xf32>, vector<128x128xf32>, vector<16x128xf32> -> vector<16x128xf32>
    %c0_66 = arith.constant 0 : index
    %c0_67 = arith.constant 0 : index
    %117 = vector.load %arg12[%c0_66, %c0_67] : memref<1x128xf32, #tpu.memory_space<vmem>>, vector<1x128xf32>
    %118 = vector.broadcast %117 : vector<1x128xf32> to vector<16x128xf32>
    %119 = arith.addf %116, %118 : vector<16x128xf32>
    %cst_68 = arith.constant 5.000000e-01 : f32
    %120 = vector.broadcast %cst_68 : f32 to vector<16x128xf32>
    %121 = arith.mulf %120, %119 : vector<16x128xf32>
    %cst_69 = arith.constant 0.707106769 : f32
    %122 = vector.broadcast %cst_69 : f32 to vector<16x128xf32>
    %123 = arith.mulf %119, %122 : vector<16x128xf32>
    %124 = math.erf %123 : vector<16x128xf32>
    %cst_70 = arith.constant 1.000000e+00 : f32
    %125 = vector.broadcast %cst_70 : f32 to vector<16x128xf32>
    %126 = arith.addf %125, %124 : vector<16x128xf32>
    %127 = arith.mulf %121, %126 : vector<16x128xf32>
    %c0_71 = arith.constant 0 : index
    %c0_72 = arith.constant 0 : index
    %128 = vector.load %arg13[%c0_71, %c0_72] : memref<128x128xf32, #tpu.memory_space<vmem>>, vector<128x128xf32>
    %cst_73 = arith.constant dense<0.000000e+00> : vector<16x128xf32>
    %129 = tpu.matmul %127, %128, %cst_73 {dimension_numbers = #tpu.dot_dimension_numbers<[1], [0], [0], [1], [0, 0, 1, 1], [], []>} : vector<16x128xf32>, vector<128x128xf32>, vector<16x128xf32> -> vector<16x128xf32>
    %c0_74 = arith.constant 0 : index
    %c0_75 = arith.constant 0 : index
    %130 = vector.load %arg14[%c0_74, %c0_75] : memref<1x128xf32, #tpu.memory_space<vmem>>, vector<1x128xf32>
    %131 = vector.broadcast %130 : vector<1x128xf32> to vector<16x128xf32>
    %132 = arith.addf %129, %131 : vector<16x128xf32>
    %133 = arith.addf %87, %132 : vector<16x128xf32>
    %134 = arith.index_cast %42 : i32 to index
    %c0_76 = arith.constant 0 : index
    %c0_77 = arith.constant 0 : index
    %135 = vector.load %arg15[%134, %c0_76, %c0_77] : memref<1x16x128xf32, #tpu.memory_space<vmem>>, vector<1x16x128xf32>
    %136 = vector.shape_cast %135 : vector<1x16x128xf32> to vector<16x128xf32>
    %137 = vector.shape_cast %133 : vector<16x128xf32> to vector<1x16x128xf32>
    tpu.vector_store %arg15[%134, %c0_76, %c0_77], %137 {strides = array<i32>} : memref<1x16x128xf32, #tpu.memory_space<vmem>>, vector<1x16x128xf32>,
    %c1_i32_78 = arith.constant 1 : i32
    return
  }
  func.func @transform_0(%arg0: i32) -> (i32, i32, i32) {
    %c0_i32 = arith.constant 0 : i32
    %c0_i32_0 = arith.constant 0 : i32
    %c0_i32_1 = arith.constant 0 : i32
    return %arg0, %c0_i32, %c0_i32_0 : i32, i32, i32
  }
  func.func @transform_1(%arg0: i32) -> (i32, i32) {
    %c0_i32 = arith.constant 0 : i32
    %c0_i32_0 = arith.constant 0 : i32
    %c0_i32_1 = arith.constant 0 : i32
    return %c0_i32, %c0_i32_0 : i32, i32
  }
  func.func @transform_2(%arg0: i32) -> (i32, i32) {
    %c0_i32 = arith.constant 0 : i32
    %c0_i32_0 = arith.constant 0 : i32
    %c0_i32_1 = arith.constant 0 : i32
    return %c0_i32, %c0_i32_0 : i32, i32
  }
  func.func @transform_3(%arg0: i32) -> (i32, i32) {
    %c0_i32 = arith.constant 0 : i32
    %c0_i32_0 = arith.constant 0 : i32
    %c0_i32_1 = arith.constant 0 : i32
    return %c0_i32, %c0_i32_0 : i32, i32
  }
  func.func @transform_4(%arg0: i32) -> (i32, i32) {
    %c0_i32 = arith.constant 0 : i32
    %c0_i32_0 = arith.constant 0 : i32
    %c0_i32_1 = arith.constant 0 : i32
    return %c0_i32, %c0_i32_0 : i32, i32
  }
  func.func @transform_5(%arg0: i32) -> (i32, i32) {
    %c0_i32 = arith.constant 0 : i32
    %c0_i32_0 = arith.constant 0 : i32
    %c0_i32_1 = arith.constant 0 : i32
    return %c0_i32, %c0_i32_0 : i32, i32
  }
  func.func @transform_6(%arg0: i32) -> (i32, i32) {
    %c0_i32 = arith.constant 0 : i32
    %c0_i32_0 = arith.constant 0 : i32
    %c0_i32_1 = arith.constant 0 : i32
    return %c0_i32, %c0_i32_0 : i32, i32
  }
  func.func @transform_7(%arg0: i32) -> (i32, i32) {
    %c0_i32 = arith.constant 0 : i32
    %c0_i32_0 = arith.constant 0 : i32
    %c0_i32_1 = arith.constant 0 : i32
    return %c0_i32, %c0_i32_0 : i32, i32
  }
  func.func @transform_8(%arg0: i32) -> (i32, i32) {
    %c0_i32 = arith.constant 0 : i32
    %c0_i32_0 = arith.constant 0 : i32
    %c0_i32_1 = arith.constant 0 : i32
    return %c0_i32, %c0_i32_0 : i32, i32
  }
  func.func @transform_9(%arg0: i32) -> (i32, i32) {
    %c0_i32 = arith.constant 0 : i32
    %c0_i32_0 = arith.constant 0 : i32
    %c0_i32_1 = arith.constant 0 : i32
    return %c0_i32, %c0_i32_0 : i32, i32
  }
  func.func @transform_10(%arg0: i32) -> (i32, i32) {
    %c0_i32 = arith.constant 0 : i32
    %c0_i32_0 = arith.constant 0 : i32
    %c0_i32_1 = arith.constant 0 : i32
    return %c0_i32, %c0_i32_0 : i32, i32
  }
  func.func @transform_11(%arg0: i32) -> (i32, i32) {
    %c0_i32 = arith.constant 0 : i32
    %c0_i32_0 = arith.constant 0 : i32
    %c0_i32_1 = arith.constant 0 : i32
    return %c0_i32, %c0_i32_0 : i32, i32
  }
  func.func @transform_12(%arg0: i32) -> (i32, i32) {
    %c0_i32 = arith.constant 0 : i32
    %c0_i32_0 = arith.constant 0 : i32
    %c0_i32_1 = arith.constant 0 : i32
    return %c0_i32, %c0_i32_0 : i32, i32
  }
  func.func @transform_13(%arg0: i32) -> (i32, i32) {
    %c0_i32 = arith.constant 0 : i32
    %c0_i32_0 = arith.constant 0 : i32
    %c0_i32_1 = arith.constant 0 : i32
    return %c0_i32, %c0_i32_0 : i32, i32
  }
  func.func @transform_14(%arg0: i32) -> (i32, i32, i32) {
    %c0_i32 = arith.constant 0 : i32
    %c0_i32_0 = arith.constant 0 : i32
    %c0_i32_1 = arith.constant 0 : i32
    return %arg0, %c0_i32, %c0_i32_0 : i32, i32, i32
  }
}

module attributes {stable_mosaic.version = 11 : i64} {
  func.func @token_transformer_kernel(%arg0: i32, %arg1: memref<1x16x128xf32, #tpu.memory_space<vmem>>, %arg2: memref<1x128xf32, #tpu.memory_space<vmem>>, %arg3: memref<1x128xf32, #tpu.memory_space<vmem>>, %arg4: memref<128x128xf32, #tpu.memory_space<vmem>>, %arg5: memref<128x128xf32, #tpu.memory_space<vmem>>, %arg6: memref<128x128xf32, #tpu.memory_space<vmem>>, %arg7: memref<128x128xf32, #tpu.memory_space<vmem>>, %arg8: memref<1x128xf32, #tpu.memory_space<vmem>>, %arg9: memref<1x128xf32, #tpu.memory_space<vmem>>, %arg10: memref<1x128xf32, #tpu.memory_space<vmem>>, %arg11: memref<128x128xf32, #tpu.memory_space<vmem>>, %arg12: memref<1x128xf32, #tpu.memory_space<vmem>>, %arg13: memref<128x128xf32, #tpu.memory_space<vmem>>, %arg14: memref<1x128xf32, #tpu.memory_space<vmem>>, %arg15: memref<1x16x128xf32, #tpu.memory_space<vmem>>, %arg16: memref<1x16x128xf32, #tpu.memory_space<vmem>>, %arg17: memref<1x16x128xf32, #tpu.memory_space<vmem>>, %arg18: memref<1x16x128xf32, #tpu.memory_space<vmem>>) attributes {dimension_semantics = [#tpu.dimension_semantics<parallel>], iteration_bounds = array<i64: 2>, scalar_prefetch = 0 : i64, scratch_operands = 3 : i64, tpu.core_type = #tpu.core_type<tc>, window_params = [{transform_indices = @transform_0, window_bounds = array<i64: 1, 16, 128>}, {pipeline_mode = #tpu.pipeline_mode<synchronous>, transform_indices = @transform_1, window_bounds = array<i64: 1, 128>}, {pipeline_mode = #tpu.pipeline_mode<synchronous>, transform_indices = @transform_2, window_bounds = array<i64: 1, 128>}, {pipeline_mode = #tpu.pipeline_mode<synchronous>, transform_indices = @transform_3, window_bounds = array<i64: 128, 128>}, {pipeline_mode = #tpu.pipeline_mode<synchronous>, transform_indices = @transform_4, window_bounds = array<i64: 128, 128>}, {pipeline_mode = #tpu.pipeline_mode<synchronous>, transform_indices = @transform_5, window_bounds = array<i64: 128, 128>}, {pipeline_mode = #tpu.pipeline_mode<synchronous>, transform_indices = @transform_6, window_bounds = array<i64: 128, 128>}, {pipeline_mode = #tpu.pipeline_mode<synchronous>, transform_indices = @transform_7, window_bounds = array<i64: 1, 128>}, {pipeline_mode = #tpu.pipeline_mode<synchronous>, transform_indices = @transform_8, window_bounds = array<i64: 1, 128>}, {pipeline_mode = #tpu.pipeline_mode<synchronous>, transform_indices = @transform_9, window_bounds = array<i64: 1, 128>}, {pipeline_mode = #tpu.pipeline_mode<synchronous>, transform_indices = @transform_10, window_bounds = array<i64: 128, 128>}, {pipeline_mode = #tpu.pipeline_mode<synchronous>, transform_indices = @transform_11, window_bounds = array<i64: 1, 128>}, {pipeline_mode = #tpu.pipeline_mode<synchronous>, transform_indices = @transform_12, window_bounds = array<i64: 128, 128>}, {pipeline_mode = #tpu.pipeline_mode<synchronous>, transform_indices = @transform_13, window_bounds = array<i64: 1, 128>}, {transform_indices = @transform_14, window_bounds = array<i64: 1, 16, 128>}]} {
    %c0 = arith.constant 0 : index
    %c0_0 = arith.constant 0 : index
    %c0_1 = arith.constant 0 : index
    %0 = vector.load %arg1[%c0, %c0_0, %c0_1] : memref<1x16x128xf32, #tpu.memory_space<vmem>>, vector<1x16x128xf32>
    %1 = vector.shape_cast %0 : vector<1x16x128xf32> to vector<16x128xf32>
    %c0_2 = arith.constant 0 : index
    %c0_3 = arith.constant 0 : index
    %2 = vector.load %arg2[%c0_2, %c0_3] : memref<1x128xf32, #tpu.memory_space<vmem>>, vector<1x128xf32>
    %c0_4 = arith.constant 0 : index
    %c0_5 = arith.constant 0 : index
    %3 = vector.load %arg3[%c0_4, %c0_5] : memref<1x128xf32, #tpu.memory_space<vmem>>, vector<1x128xf32>
    %4 = tpu.iota {dimensions = array<i32: 1>} : vector<16x128xi32>
    %c32_i32 = arith.constant 32 : i32
    %5 = vector.broadcast %c32_i32 : i32 to vector<16x128xi32>
    %6 = arith.cmpi slt, %4, %5 : vector<16x128xi32>
    %cst = arith.constant dense<0.000000e+00> : vector<16xf32>
    %7 = vector.multi_reduction <add>, %1, %cst [1] : vector<16x128xf32> to vector<16xf32>
    %8 = vector.shape_cast %7 : vector<16xf32> to vector<16x1xf32>
    %cst_6 = arith.constant 3.125000e-02 : f32
    %9 = vector.broadcast %cst_6 : f32 to vector<16x1xf32>
    %10 = arith.mulf %8, %9 : vector<16x1xf32>
    %11 = vector.broadcast %10 : vector<16x1xf32> to vector<16x128xf32>
    %12 = arith.subf %1, %11 : vector<16x128xf32>
    %cst_7 = arith.constant 0.000000e+00 : f32
    %13 = vector.broadcast %cst_7 : f32 to vector<16x128xf32>
    %14 = arith.select %6, %12, %13 : vector<16x128xi1>, vector<16x128xf32>
    %15 = arith.mulf %14, %14 : vector<16x128xf32>
    %cst_8 = arith.constant dense<0.000000e+00> : vector<16xf32>
    %16 = vector.multi_reduction <add>, %15, %cst_8 [1] : vector<16x128xf32> to vector<16xf32>
    %17 = vector.shape_cast %16 : vector<16xf32> to vector<16x1xf32>
    %cst_9 = arith.constant 3.125000e-02 : f32
    %18 = vector.broadcast %cst_9 : f32 to vector<16x1xf32>
    %19 = arith.mulf %17, %18 : vector<16x1xf32>
    %cst_10 = arith.constant 9.99999974E-6 : f32
    %20 = vector.broadcast %cst_10 : f32 to vector<16x1xf32>
    %21 = arith.addf %19, %20 : vector<16x1xf32>
    %22 = math.rsqrt %21 : vector<16x1xf32>
    %23 = vector.broadcast %22 : vector<16x1xf32> to vector<16x128xf32>
    %24 = arith.mulf %14, %23 : vector<16x128xf32>
    %25 = vector.broadcast %2 : vector<1x128xf32> to vector<16x128xf32>
    %26 = arith.mulf %24, %25 : vector<16x128xf32>
    %27 = vector.broadcast %3 : vector<1x128xf32> to vector<16x128xf32>
    %28 = arith.addf %26, %27 : vector<16x128xf32>
    %c0_11 = arith.constant 0 : index
    %c0_12 = arith.constant 0 : index
    %29 = vector.load %arg4[%c0_11, %c0_12] : memref<128x128xf32, #tpu.memory_space<vmem>>, vector<128x128xf32>
    %cst_13 = arith.constant dense<0.000000e+00> : vector<16x128xf32>
    %30 = tpu.matmul %28, %29, %cst_13 {dimension_numbers = #tpu.dot_dimension_numbers<[1], [0], [0], [1], [0, 0, 1, 1], [], []>} : vector<16x128xf32>, vector<128x128xf32>, vector<16x128xf32> -> vector<16x128xf32>
    %31 = vector.shape_cast %30 : vector<16x128xf32> to vector<1x16x128xf32>
    %c0_14 = arith.constant 0 : index
    %c0_15 = arith.constant 0 : index
    %c0_16 = arith.constant 0 : index
    %32 = vector.load %arg16[%c0_14, %c0_15, %c0_16] : memref<1x16x128xf32, #tpu.memory_space<vmem>>, vector<1x16x128xf32>
    tpu.vector_store %arg16[%c0_14, %c0_15, %c0_16], %31 {strides = array<i32>} : memref<1x16x128xf32, #tpu.memory_space<vmem>>, vector<1x16x128xf32>,
    %c0_17 = arith.constant 0 : index
    %c0_18 = arith.constant 0 : index
    %33 = vector.load %arg5[%c0_17, %c0_18] : memref<128x128xf32, #tpu.memory_space<vmem>>, vector<128x128xf32>
    %cst_19 = arith.constant dense<0.000000e+00> : vector<16x128xf32>
    %34 = tpu.matmul %28, %33, %cst_19 {dimension_numbers = #tpu.dot_dimension_numbers<[1], [0], [0], [1], [0, 0, 1, 1], [], []>} : vector<16x128xf32>, vector<128x128xf32>, vector<16x128xf32> -> vector<16x128xf32>
    %35 = vector.shape_cast %34 : vector<16x128xf32> to vector<1x16x128xf32>
    %c0_20 = arith.constant 0 : index
    %c0_21 = arith.constant 0 : index
    %c0_22 = arith.constant 0 : index
    %36 = vector.load %arg17[%c0_20, %c0_21, %c0_22] : memref<1x16x128xf32, #tpu.memory_space<vmem>>, vector<1x16x128xf32>
    tpu.vector_store %arg17[%c0_20, %c0_21, %c0_22], %35 {strides = array<i32>} : memref<1x16x128xf32, #tpu.memory_space<vmem>>, vector<1x16x128xf32>,
    %c0_23 = arith.constant 0 : index
    %c0_24 = arith.constant 0 : index
    %37 = vector.load %arg6[%c0_23, %c0_24] : memref<128x128xf32, #tpu.memory_space<vmem>>, vector<128x128xf32>
    %cst_25 = arith.constant dense<0.000000e+00> : vector<16x128xf32>
    %38 = tpu.matmul %28, %37, %cst_25 {dimension_numbers = #tpu.dot_dimension_numbers<[1], [0], [0], [1], [0, 0, 1, 1], [], []>} : vector<16x128xf32>, vector<128x128xf32>, vector<16x128xf32> -> vector<16x128xf32>
    %39 = vector.shape_cast %38 : vector<16x128xf32> to vector<1x16x128xf32>
    %c0_26 = arith.constant 0 : index
    %c0_27 = arith.constant 0 : index
    %c0_28 = arith.constant 0 : index
    %40 = vector.load %arg18[%c0_26, %c0_27, %c0_28] : memref<1x16x128xf32, #tpu.memory_space<vmem>>, vector<1x16x128xf32>
    tpu.vector_store %arg18[%c0_26, %c0_27, %c0_28], %39 {strides = array<i32>} : memref<1x16x128xf32, #tpu.memory_space<vmem>>, vector<1x16x128xf32>,
    %c0_i32 = arith.constant 0 : i32
    %c1_i32 = arith.constant 1 : i32
    %41 = arith.muli %c0_i32, %c1_i32 : i32
    %c0_i32_29 = arith.constant 0 : i32
    %42 = arith.addi %c0_i32_29, %41 : i32
    %c1_i32_30 = arith.constant 1 : i32
    %43 = arith.remsi %42, %c1_i32_30 : i32
    %44 = arith.subi %42, %43 : i32
    %45 = arith.index_cast %42 : i32 to index
    %c0_31 = arith.constant 0 : index
    %c0_32 = arith.constant 0 : index
    %46 = vector.load %arg16[%45, %c0_31, %c0_32] : memref<1x16x128xf32, #tpu.memory_space<vmem>>, vector<1x16x128xf32>
    %47 = vector.shape_cast %46 : vector<1x16x128xf32> to vector<16x128xf32>
    %cst_33 = arith.constant 0xFF800000 : f32
    %48 = vector.broadcast %cst_33 : f32 to vector<16x1xf32>
    %cst_34 = arith.constant 0.000000e+00 : f32
    %49 = vector.broadcast %cst_34 : f32 to vector<16x1xf32>
    %cst_35 = arith.constant 0.000000e+00 : f32
    %50 = vector.broadcast %cst_35 : f32 to vector<16x128xf32>
    %c0_i32_36 = arith.constant 0 : i32
    %51 = arith.addi %44, %c0_i32_36 : i32
    %52 = arith.index_cast %51 : i32 to index
    %c0_37 = arith.constant 0 : index
    %c0_38 = arith.constant 0 : index
    %53 = vector.load %arg17[%52, %c0_37, %c0_38] : memref<1x16x128xf32, #tpu.memory_space<vmem>>, vector<1x16x128xf32>
    %54 = vector.shape_cast %53 : vector<1x16x128xf32> to vector<16x128xf32>
    %55 = arith.addi %44, %c0_i32_36 : i32
    %56 = arith.index_cast %55 : i32 to index
    %c0_39 = arith.constant 0 : index
    %c0_40 = arith.constant 0 : index
    %57 = vector.load %arg18[%56, %c0_39, %c0_40] : memref<1x16x128xf32, #tpu.memory_space<vmem>>, vector<1x16x128xf32>
    %58 = vector.shape_cast %57 : vector<1x16x128xf32> to vector<16x128xf32>
    "tpu.trace_start"() <{level = 10 : i32, message = "qd,kd->qk"}> : () -> ()
    %cst_41 = arith.constant dense<0.000000e+00> : vector<16x16xf32>
    %59 = tpu.matmul %47, %54, %cst_41 {dimension_numbers = #tpu.dot_dimension_numbers<[1], [1], [0], [0], [0, 0, 1, 0], [], []>} : vector<16x128xf32>, vector<16x128xf32>, vector<16x16xf32> -> vector<16x16xf32>
    "tpu.trace_stop"() : () -> ()
    %cst_42 = arith.constant dense<0xFF800000> : vector<16xf32>
    %60 = vector.multi_reduction <maximumf>, %59, %cst_42 [1] : vector<16x16xf32> to vector<16xf32>
    %61 = vector.shape_cast %60 : vector<16xf32> to vector<16x1xf32>
    %62 = arith.maximumf %48, %61 : vector<16x1xf32>
    %63 = arith.subf %48, %62 : vector<16x1xf32>
    %64 = math.exp %63 : vector<16x1xf32>
    %65 = vector.broadcast %62 : vector<16x1xf32> to vector<16x16xf32>
    %66 = arith.subf %59, %65 : vector<16x16xf32>
    %67 = math.exp %66 : vector<16x16xf32>
    %68 = arith.mulf %64, %49 : vector<16x1xf32>
    %cst_43 = arith.constant dense<0.000000e+00> : vector<16xf32>
    %69 = vector.multi_reduction <add>, %67, %cst_43 [1] : vector<16x16xf32> to vector<16xf32>
    %70 = vector.shape_cast %69 : vector<16xf32> to vector<16x1xf32>
    %71 = arith.addf %68, %70 : vector<16x1xf32>
    %72 = vector.broadcast %64 : vector<16x1xf32> to vector<16x128xf32>
    %73 = arith.mulf %72, %50 : vector<16x128xf32>
    %cst_44 = arith.constant dense<0.000000e+00> : vector<16x128xf32>
    %74 = tpu.matmul %67, %58, %cst_44 {dimension_numbers = #tpu.dot_dimension_numbers<[1], [0], [0], [1], [0, 0, 1, 1], [], []>} : vector<16x16xf32>, vector<16x128xf32>, vector<16x128xf32> -> vector<16x128xf32>
    %75 = arith.addf %73, %74 : vector<16x128xf32>
    %c1_i32_45 = arith.constant 1 : i32
    %76 = tpu.reciprocal %71 : vector<16x1xf32> -> vector<16x1xf32>
    %77 = vector.broadcast %76 : vector<16x1xf32> to vector<16x128xf32>
    %78 = arith.mulf %75, %77 : vector<16x128xf32>
    %c0_46 = arith.constant 0 : index
    %c0_47 = arith.constant 0 : index
    %79 = vector.load %arg7[%c0_46, %c0_47] : memref<128x128xf32, #tpu.memory_space<vmem>>, vector<128x128xf32>
    %cst_48 = arith.constant dense<0.000000e+00> : vector<16x128xf32>
    %80 = tpu.matmul %78, %79, %cst_48 {dimension_numbers = #tpu.dot_dimension_numbers<[1], [0], [0], [1], [0, 0, 1, 1], [], []>} : vector<16x128xf32>, vector<128x128xf32>, vector<16x128xf32> -> vector<16x128xf32>
    %c0_49 = arith.constant 0 : index
    %c0_50 = arith.constant 0 : index
    %81 = vector.load %arg8[%c0_49, %c0_50] : memref<1x128xf32, #tpu.memory_space<vmem>>, vector<1x128xf32>
    %82 = vector.broadcast %81 : vector<1x128xf32> to vector<16x128xf32>
    %83 = arith.addf %80, %82 : vector<16x128xf32>
    %84 = arith.index_cast %42 : i32 to index
    %c0_51 = arith.constant 0 : index
    %c0_52 = arith.constant 0 : index
    %85 = vector.load %arg18[%84, %c0_51, %c0_52] : memref<1x16x128xf32, #tpu.memory_space<vmem>>, vector<1x16x128xf32>
    %86 = vector.shape_cast %85 : vector<1x16x128xf32> to vector<16x128xf32>
    %87 = arith.addf %86, %83 : vector<16x128xf32>
    %c0_53 = arith.constant 0 : index
    %c0_54 = arith.constant 0 : index
    %88 = vector.load %arg9[%c0_53, %c0_54] : memref<1x128xf32, #tpu.memory_space<vmem>>, vector<1x128xf32>
    %c0_55 = arith.constant 0 : index
    %c0_56 = arith.constant 0 : index
    %89 = vector.load %arg10[%c0_55, %c0_56] : memref<1x128xf32, #tpu.memory_space<vmem>>, vector<1x128xf32>
    %90 = tpu.iota {dimensions = array<i32: 1>} : vector<16x128xi32>
    %c16_i32 = arith.constant 16 : i32
    %91 = vector.broadcast %c16_i32 : i32 to vector<16x128xi32>
    %92 = arith.cmpi slt, %90, %91 : vector<16x128xi32>
    %cst_57 = arith.constant dense<0.000000e+00> : vector<16xf32>
    %93 = vector.multi_reduction <add>, %87, %cst_57 [1] : vector<16x128xf32> to vector<16xf32>
    %94 = vector.shape_cast %93 : vector<16xf32> to vector<16x1xf32>
    %cst_58 = arith.constant 6.250000e-02 : f32
    %95 = vector.broadcast %cst_58 : f32 to vector<16x1xf32>
    %96 = arith.mulf %94, %95 : vector<16x1xf32>
    %97 = vector.broadcast %96 : vector<16x1xf32> to vector<16x128xf32>
    %98 = arith.subf %87, %97 : vector<16x128xf32>
    %cst_59 = arith.constant 0.000000e+00 : f32
    %99 = vector.broadcast %cst_59 : f32 to vector<16x128xf32>
    %100 = arith.select %92, %98, %99 : vector<16x128xi1>, vector<16x128xf32>
    %101 = arith.mulf %100, %100 : vector<16x128xf32>
    %cst_60 = arith.constant dense<0.000000e+00> : vector<16xf32>
    %102 = vector.multi_reduction <add>, %101, %cst_60 [1] : vector<16x128xf32> to vector<16xf32>
    %103 = vector.shape_cast %102 : vector<16xf32> to vector<16x1xf32>
    %cst_61 = arith.constant 6.250000e-02 : f32
    %104 = vector.broadcast %cst_61 : f32 to vector<16x1xf32>
    %105 = arith.mulf %103, %104 : vector<16x1xf32>
    %cst_62 = arith.constant 9.99999974E-6 : f32
    %106 = vector.broadcast %cst_62 : f32 to vector<16x1xf32>
    %107 = arith.addf %105, %106 : vector<16x1xf32>
    %108 = math.rsqrt %107 : vector<16x1xf32>
    %109 = vector.broadcast %108 : vector<16x1xf32> to vector<16x128xf32>
    %110 = arith.mulf %100, %109 : vector<16x128xf32>
    %111 = vector.broadcast %88 : vector<1x128xf32> to vector<16x128xf32>
    %112 = arith.mulf %110, %111 : vector<16x128xf32>
    %113 = vector.broadcast %89 : vector<1x128xf32> to vector<16x128xf32>
    %114 = arith.addf %112, %113 : vector<16x128xf32>
    %c0_63 = arith.constant 0 : index
    %c0_64 = arith.constant 0 : index
    %115 = vector.load %arg11[%c0_63, %c0_64] : memref<128x128xf32, #tpu.memory_space<vmem>>, vector<128x128xf32>
    %cst_65 = arith.constant dense<0.000000e+00> : vector<16x128xf32>
    %116 = tpu.matmul %114, %115, %cst_65 {dimension_numbers = #tpu.dot_dimension_numbers<[1], [0], [0], [1], [0, 0, 1, 1], [], []>} : vector<16x128xf32>, vector<128x128xf32>, vector<16x128xf32> -> vector<16x128xf32>
    %c0_66 = arith.constant 0 : index
    %c0_67 = arith.constant 0 : index
    %117 = vector.load %arg12[%c0_66, %c0_67] : memref<1x128xf32, #tpu.memory_space<vmem>>, vector<1x128xf32>
    %118 = vector.broadcast %117 : vector<1x128xf32> to vector<16x128xf32>
    %119 = arith.addf %116, %118 : vector<16x128xf32>
    %cst_68 = arith.constant 5.000000e-01 : f32
    %120 = vector.broadcast %cst_68 : f32 to vector<16x128xf32>
    %121 = arith.mulf %120, %119 : vector<16x128xf32>
    %cst_69 = arith.constant 0.707106769 : f32
    %122 = vector.broadcast %cst_69 : f32 to vector<16x128xf32>
    %123 = arith.mulf %119, %122 : vector<16x128xf32>
    %124 = math.erf %123 : vector<16x128xf32>
    %cst_70 = arith.constant 1.000000e+00 : f32
    %125 = vector.broadcast %cst_70 : f32 to vector<16x128xf32>
    %126 = arith.addf %125, %124 : vector<16x128xf32>
    %127 = arith.mulf %121, %126 : vector<16x128xf32>
    %c0_71 = arith.constant 0 : index
    %c0_72 = arith.constant 0 : index
    %128 = vector.load %arg13[%c0_71, %c0_72] : memref<128x128xf32, #tpu.memory_space<vmem>>, vector<128x128xf32>
    %cst_73 = arith.constant dense<0.000000e+00> : vector<16x128xf32>
    %129 = tpu.matmul %127, %128, %cst_73 {dimension_numbers = #tpu.dot_dimension_numbers<[1], [0], [0], [1], [0, 0, 1, 1], [], []>} : vector<16x128xf32>, vector<128x128xf32>, vector<16x128xf32> -> vector<16x128xf32>
    %c0_74 = arith.constant 0 : index
    %c0_75 = arith.constant 0 : index
    %130 = vector.load %arg14[%c0_74, %c0_75] : memref<1x128xf32, #tpu.memory_space<vmem>>, vector<1x128xf32>
    %131 = vector.broadcast %130 : vector<1x128xf32> to vector<16x128xf32>
    %132 = arith.addf %129, %131 : vector<16x128xf32>
    %133 = arith.addf %87, %132 : vector<16x128xf32>
    %134 = arith.index_cast %42 : i32 to index
    %c0_76 = arith.constant 0 : index
    %c0_77 = arith.constant 0 : index
    %135 = vector.load %arg15[%134, %c0_76, %c0_77] : memref<1x16x128xf32, #tpu.memory_space<vmem>>, vector<1x16x128xf32>
    %136 = vector.shape_cast %135 : vector<1x16x128xf32> to vector<16x128xf32>
    %137 = vector.shape_cast %133 : vector<16x128xf32> to vector<1x16x128xf32>
    tpu.vector_store %arg15[%134, %c0_76, %c0_77], %137 {strides = array<i32>} : memref<1x16x128xf32, #tpu.memory_space<vmem>>, vector<1x16x128xf32>,
    %c1_i32_78 = arith.constant 1 : i32
    return
  }
  func.func @transform_0(%arg0: i32) -> (i32, i32, i32) {
    %c0_i32 = arith.constant 0 : i32
    %c0_i32_0 = arith.constant 0 : i32
    %c0_i32_1 = arith.constant 0 : i32
    return %arg0, %c0_i32, %c0_i32_0 : i32, i32, i32
  }
  func.func @transform_1(%arg0: i32) -> (i32, i32) {
    %c0_i32 = arith.constant 0 : i32
    %c0_i32_0 = arith.constant 0 : i32
    %c0_i32_1 = arith.constant 0 : i32
    return %c0_i32, %c0_i32_0 : i32, i32
  }
  func.func @transform_2(%arg0: i32) -> (i32, i32) {
    %c0_i32 = arith.constant 0 : i32
    %c0_i32_0 = arith.constant 0 : i32
    %c0_i32_1 = arith.constant 0 : i32
    return %c0_i32, %c0_i32_0 : i32, i32
  }
  func.func @transform_3(%arg0: i32) -> (i32, i32) {
    %c0_i32 = arith.constant 0 : i32
    %c0_i32_0 = arith.constant 0 : i32
    %c0_i32_1 = arith.constant 0 : i32
    return %c0_i32, %c0_i32_0 : i32, i32
  }
  func.func @transform_4(%arg0: i32) -> (i32, i32) {
    %c0_i32 = arith.constant 0 : i32
    %c0_i32_0 = arith.constant 0 : i32
    %c0_i32_1 = arith.constant 0 : i32
    return %c0_i32, %c0_i32_0 : i32, i32
  }
  func.func @transform_5(%arg0: i32) -> (i32, i32) {
    %c0_i32 = arith.constant 0 : i32
    %c0_i32_0 = arith.constant 0 : i32
    %c0_i32_1 = arith.constant 0 : i32
    return %c0_i32, %c0_i32_0 : i32, i32
  }
  func.func @transform_6(%arg0: i32) -> (i32, i32) {
    %c0_i32 = arith.constant 0 : i32
    %c0_i32_0 = arith.constant 0 : i32
    %c0_i32_1 = arith.constant 0 : i32
    return %c0_i32, %c0_i32_0 : i32, i32
  }
  func.func @transform_7(%arg0: i32) -> (i32, i32) {
    %c0_i32 = arith.constant 0 : i32
    %c0_i32_0 = arith.constant 0 : i32
    %c0_i32_1 = arith.constant 0 : i32
    return %c0_i32, %c0_i32_0 : i32, i32
  }
  func.func @transform_8(%arg0: i32) -> (i32, i32) {
    %c0_i32 = arith.constant 0 : i32
    %c0_i32_0 = arith.constant 0 : i32
    %c0_i32_1 = arith.constant 0 : i32
    return %c0_i32, %c0_i32_0 : i32, i32
  }
  func.func @transform_9(%arg0: i32) -> (i32, i32) {
    %c0_i32 = arith.constant 0 : i32
    %c0_i32_0 = arith.constant 0 : i32
    %c0_i32_1 = arith.constant 0 : i32
    return %c0_i32, %c0_i32_0 : i32, i32
  }
  func.func @transform_10(%arg0: i32) -> (i32, i32) {
    %c0_i32 = arith.constant 0 : i32
    %c0_i32_0 = arith.constant 0 : i32
    %c0_i32_1 = arith.constant 0 : i32
    return %c0_i32, %c0_i32_0 : i32, i32
  }
  func.func @transform_11(%arg0: i32) -> (i32, i32) {
    %c0_i32 = arith.constant 0 : i32
    %c0_i32_0 = arith.constant 0 : i32
    %c0_i32_1 = arith.constant 0 : i32
    return %c0_i32, %c0_i32_0 : i32, i32
  }
  func.func @transform_12(%arg0: i32) -> (i32, i32) {
    %c0_i32 = arith.constant 0 : i32
    %c0_i32_0 = arith.constant 0 : i32
    %c0_i32_1 = arith.constant 0 : i32
    return %c0_i32, %c0_i32_0 : i32, i32
  }
  func.func @transform_13(%arg0: i32) -> (i32, i32) {
    %c0_i32 = arith.constant 0 : i32
    %c0_i32_0 = arith.constant 0 : i32
    %c0_i32_1 = arith.constant 0 : i32
    return %c0_i32, %c0_i32_0 : i32, i32
  }
  func.func @transform_14(%arg0: i32) -> (i32, i32, i32) {
    %c0_i32 = arith.constant 0 : i32
    %c0_i32_0 = arith.constant 0 : i32
    %c0_i32_1 = arith.constant 0 : i32
    return %arg0, %c0_i32, %c0_i32_0 : i32, i32, i32
  }
}

</mosaic_0001>

<llo_original>
// kernel: tpu_custom_call.1
$region0: #{tpu_custom_call.1}
  #allocation0 [shape = 'u32[]', space=smem, size = 0x4, offset = 0x4, fixed_abs, tag = 'smem constant byte address 0x4 - core index']
  #allocation1 [shape = 'u32[144,128]{1,0:T(1,128)}', space=vmem, size = 0x12000, scoped, tag = 'internal scratch']
  #allocation2 [shape = 'f32[1,16,128]{2,1,0:T(8,128)}', space=vmem, size = 0x2000, scoped, tag = 'scratch operand']
  #allocation3 [shape = 'f32[1,16,128]{2,1,0:T(8,128)}', space=vmem, size = 0x2000, scoped, tag = 'scratch operand']
  #allocation4 [shape = 'f32[1,16,128]{2,1,0:T(8,128)}', space=vmem, size = 0x2000, scoped, tag = 'scratch operand']
  %s0 = inlined_call_operand.hbm [shape: f32[2,16,128], index: 0, kind: input, shape index: {}]
  %s1 = inlined_call_operand.vmem [shape: f32[1,128], index: 1, kind: input, shape index: {}]
  %s2 = inlined_call_operand.vmem [shape: f32[1,128], index: 2, kind: input, shape index: {}]
  %s3 = inlined_call_operand.hbm [shape: f32[128,128], index: 3, kind: input, shape index: {}]
  %s4 = inlined_call_operand.hbm [shape: f32[128,128], index: 4, kind: input, shape index: {}]
  %s5 = inlined_call_operand.hbm [shape: f32[128,128], index: 5, kind: input, shape index: {}]
  %s6 = inlined_call_operand.hbm [shape: f32[128,128], index: 6, kind: input, shape index: {}]
  %s7 = inlined_call_operand.vmem [shape: f32[1,128], index: 7, kind: input, shape index: {}]
  %s8 = inlined_call_operand.vmem [shape: f32[1,128], index: 8, kind: input, shape index: {}]
  %s9 = inlined_call_operand.vmem [shape: f32[1,128], index: 9, kind: input, shape index: {}]
  %s10 = inlined_call_operand.hbm [shape: f32[128,128], index: 10, kind: input, shape index: {}]
  %s11 = inlined_call_operand.vmem [shape: f32[1,128], index: 11, kind: input, shape index: {}]
  %s12 = inlined_call_operand.hbm [shape: f32[128,128], index: 12, kind: input, shape index: {}]
  %s13 = inlined_call_operand.vmem [shape: f32[1,128], index: 13, kind: input, shape index: {}]
  %s14 = inlined_call_operand.hbm [shape: f32[2,16,128], index: 14, kind: output, shape index: {}]
  %s15 = sld [smem:[#allocation0]]
  $region117: #{tpu_custom_call.1} parent=0
    _
  %s17 = ssub.s32 1, %s15
  %s18 = scalar_select 0, %s17, %s15
  $region1: #{tpu_custom_call.1} parent=0
    #allocation5 [shape = 'u8[16384]{0}', space=vmem, size = 0x4000, scoped, tag = 'input window, operand 0']
    #allocation6 [shape = 's32[2]{0}', space=sflag, size = 0x8, scoped, tag = 'scoped memory for tpu_custom_call.1']
    #allocation7 [shape = 's32[2]{0}', space=sflag, size = 0x8, scoped, tag = 'scoped memory for tpu_custom_call.1']
    #allocation8 [shape = 'u8[65536]{0}', space=vmem, size = 0x10000, scoped, tag = 'input window, operand 3, single buffered']
    #allocation9 [shape = 's32[1]{0}', space=sflag, size = 0x4, scoped, tag = 'scoped memory for tpu_custom_call.1']
    #allocation10 [shape = 'u8[65536]{0}', space=vmem, size = 0x10000, scoped, tag = 'input window, operand 4, single buffered']
    #allocation11 [shape = 'u8[65536]{0}', space=vmem, size = 0x10000, scoped, tag = 'input window, operand 5, single buffered']
    #allocation12 [shape = 's32[1]{0}', space=sflag, size = 0x4, scoped, tag = 'scoped memory for tpu_custom_call.1']
    #allocation13 [shape = 'u8[65536]{0}', space=vmem, size = 0x10000, scoped, tag = 'input window, operand 6, single buffered']
    #allocation14 [shape = 'u8[65536]{0}', space=vmem, size = 0x10000, scoped, tag = 'input window, operand 10, single buffered']
    #allocation15 [shape = 's32[1]{0}', space=sflag, size = 0x4, scoped, tag = 'scoped memory for tpu_custom_call.1']
    #allocation16 [shape = 'u8[65536]{0}', space=vmem, size = 0x10000, scoped, tag = 'input window, operand 12, single buffered']
    #allocation17 [shape = 'u8[16384]{0}', space=vmem, size = 0x4000, scoped, tag = 'output window, operand 0']
    %19 = vsyncpa [#allocation6], 0
    %s20 = scalar_lea.sflag [#allocation6], 1
    %21 = vsyncpa %s20, 0
    %22 = vsyncpa [#allocation9], 0
    %23 = vsyncpa [#allocation12], 0
    %24 = vsyncpa [#allocation15], 0
    %25 = vsyncpa [#allocation7], 0
    %s26 = scalar_lea.sflag [#allocation7], 1
    %27 = vsyncpa %s26, 0
    loop: start=0, step=1, limit=4
    $region2: #{tpu_custom_call.1} parent=1 // loop_pre_header
      _
    $region3: #{tpu_custom_call.1} parent=1 // loop_header
      %s29 = sphi 0, %s33
      %p30 = scmp.ge.s32.totalorder %s29, 4
      %s39 = sphi 0, %s41
      %s42 = sphi 0, %s39
      %s43 = sphi 0, %s42
      %s59 = sphi 0, %s43
      %s63 = sphi 0, %s63
      %s65 = sphi 0, %s63
      %s66 = sphi 0, %s65
      %s80 = sphi 0, %s66
      %s84 = sphi 0, %s84
      %s86 = sphi 0, %s84
      %s87 = sphi 0, %s86
      %s101 = sphi 0, %s87
      %s105 = sphi 0, %s105
      %s107 = sphi 0, %s105
      %s108 = sphi 0, %s107
      %s122 = sphi 0, %s108
      %s126 = sphi 0, %s126
      %s128 = sphi 0, %s126
      %s129 = sphi 0, %s128
      %s143 = sphi 0, %s129
      %s147 = sphi 0, %s147
      %s149 = sphi 0, %s147
      %s150 = sphi 0, %s149
      %s164 = sphi 0, %s150
      %s168 = sphi 0, %s168
      %s170 = sphi 0, %s168
      %s171 = sphi 0, %s170
      %s185 = sphi 0, %s171
      %s189 = sphi 0, %s189
      %s191 = sphi 0, %s189
      %s192 = sphi 0, %s191
      %s206 = sphi 0, %s192
      %s210 = sphi 0, %s210
      %s212 = sphi 0, %s210
      %s213 = sphi 0, %s212
      %s227 = sphi 0, %s213
      %s231 = sphi 0, %s231
      %s233 = sphi 0, %s231
      %s234 = sphi 0, %s233
      %s248 = sphi 0, %s234
      %s252 = sphi 0, %s252
      %s254 = sphi 0, %s252
      %s255 = sphi 0, %s254
      %s269 = sphi 0, %s255
      %s273 = sphi 0, %s273
      %s275 = sphi 0, %s273
      %s276 = sphi 0, %s275
      %s290 = sphi 0, %s276
      %s294 = sphi 0, %s294
      %s296 = sphi 0, %s294
      %s297 = sphi 0, %s296
      %s311 = sphi 0, %s297
      %s315 = sphi 0, %s315
      %s317 = sphi 0, %s315
      %s318 = sphi 0, %s317
      %s332 = sphi 0, %s318
      %s338 = sphi 0, %s340
      %s341 = sphi 0, %s338
      %s342 = sphi 0, %s341
      %s358 = sphi 0, %s342
    $region4: #{tpu_custom_call.1} parent=1 // loop_header_branch
      %32 = sbr.rel (%p30) target = $region8
    $region5: #{tpu_custom_call.1} parent=1 // loop_body
      %s34 = ssub.s32 %s29, 1
      %s35 = ssub.s32 %s29, 2
      %s36 = sadd.s32 %s29, 1
      %s37 = ssub.s32 %s29, %s36
      %p38 = scmp.eq.s32.totalorder %s37, 0
      %s40 = sadd.s32 %s39, 1
      %s41 = scalar_select %p38, %s39, %s40
      %p44 = pneg %p38
      %p45 = scmp.eq.s32.totalorder %s29, 1
      %p46 = por %p44, %p45
      %p47 = scmp.ne.s32.totalorder %s39, %s42
      %p48 = scmp.eq.s32.totalorder %s29, 0
      %p49 = por %p47, %p48
      %p50 = scmp.ne.s32.totalorder %s39, %s42
      %p51 = scmp.eq.s32.totalorder %s34, 1
      %p52 = por %p50, %p51
      %p53 = scmp.ne.s32.totalorder %s42, %s43
      %p54 = scmp.eq.s32.totalorder %s34, 0
      %p55 = por %p53, %p54
      %p56 = scmp.ne.s32.totalorder %s42, %s43
      %p57 = scmp.eq.s32.totalorder %s35, 1
      %p58 = por %p56, %p57
      %p60 = scmp.ne.s32.totalorder %s43, %s59
      %p61 = scmp.eq.s32.totalorder %s35, 0
      %p62 = por %p60, %p61
      %s64 = sadd.s32 %s63, 1
      %p67 = scmp.eq.s32.totalorder %s29, 1
      %p68 = scmp.ne.s32.totalorder %s63, %s65
      %p69 = scmp.eq.s32.totalorder %s29, 0
      %p70 = por %p68, %p69
      %p71 = scmp.ne.s32.totalorder %s63, %s65
      %p72 = scmp.eq.s32.totalorder %s34, 1
      %p73 = por %p71, %p72
      %p74 = scmp.ne.s32.totalorder %s65, %s66
      %p75 = scmp.eq.s32.totalorder %s34, 0
      %p76 = por %p74, %p75
      %p77 = scmp.ne.s32.totalorder %s65, %s66
      %p78 = scmp.eq.s32.totalorder %s35, 1
      %p79 = por %p77, %p78
      %p81 = scmp.ne.s32.totalorder %s66, %s80
      %p82 = scmp.eq.s32.totalorder %s35, 0
      %p83 = por %p81, %p82
      %s85 = sadd.s32 %s84, 1
      %p88 = scmp.eq.s32.totalorder %s29, 1
      %p89 = scmp.ne.s32.totalorder %s84, %s86
      %p90 = scmp.eq.s32.totalorder %s29, 0
      %p91 = por %p89, %p90
      %p92 = scmp.ne.s32.totalorder %s84, %s86
      %p93 = scmp.eq.s32.totalorder %s34, 1
      %p94 = por %p92, %p93
      %p95 = scmp.ne.s32.totalorder %s86, %s87
      %p96 = scmp.eq.s32.totalorder %s34, 0
      %p97 = por %p95, %p96
      %p98 = scmp.ne.s32.totalorder %s86, %s87
      %p99 = scmp.eq.s32.totalorder %s35, 1
      %p100 = por %p98, %p99
      %p102 = scmp.ne.s32.totalorder %s87, %s101
      %p103 = scmp.eq.s32.totalorder %s35, 0
      %p104 = por %p102, %p103
      %s106 = sadd.s32 %s105, 1
      %p109 = scmp.eq.s32.totalorder %s29, 1
      %p110 = scmp.ne.s32.totalorder %s105, %s107
      %p111 = scmp.eq.s32.totalorder %s29, 0
      %p112 = por %p110, %p111
      %p113 = scmp.ne.s32.totalorder %s105, %s107
      %p114 = scmp.eq.s32.totalorder %s34, 1
      %p115 = por %p113, %p114
      %p116 = scmp.ne.s32.totalorder %s107, %s108
      %p117 = scmp.eq.s32.totalorder %s34, 0
      %p118 = por %p116, %p117
      %p119 = scmp.ne.s32.totalorder %s107, %s108
      %p120 = scmp.eq.s32.totalorder %s35, 1
      %p121 = por %p119, %p120
      %p123 = scmp.ne.s32.totalorder %s108, %s122
      %p124 = scmp.eq.s32.totalorder %s35, 0
      %p125 = por %p123, %p124
      %s127 = sadd.s32 %s126, 1
      %p130 = scmp.eq.s32.totalorder %s29, 1
      %p131 = scmp.ne.s32.totalorder %s126, %s128
      %p132 = scmp.eq.s32.totalorder %s29, 0
      %p133 = por %p131, %p132
      %p134 = scmp.ne.s32.totalorder %s126, %s128
      %p135 = scmp.eq.s32.totalorder %s34, 1
      %p136 = por %p134, %p135
      %p137 = scmp.ne.s32.totalorder %s128, %s129
      %p138 = scmp.eq.s32.totalorder %s34, 0
      %p139 = por %p137, %p138
      %p140 = scmp.ne.s32.totalorder %s128, %s129
      %p141 = scmp.eq.s32.totalorder %s35, 1
      %p142 = por %p140, %p141
      %p144 = scmp.ne.s32.totalorder %s129, %s143
      %p145 = scmp.eq.s32.totalorder %s35, 0
      %p146 = por %p144, %p145
      %s148 = sadd.s32 %s147, 1
      %p151 = scmp.eq.s32.totalorder %s29, 1
      %p152 = scmp.ne.s32.totalorder %s147, %s149
      %p153 = scmp.eq.s32.totalorder %s29, 0
      %p154 = por %p152, %p153
      %p155 = scmp.ne.s32.totalorder %s147, %s149
      %p156 = scmp.eq.s32.totalorder %s34, 1
      %p157 = por %p155, %p156
      %p158 = scmp.ne.s32.totalorder %s149, %s150
      %p159 = scmp.eq.s32.totalorder %s34, 0
      %p160 = por %p158, %p159
      %p161 = scmp.ne.s32.totalorder %s149, %s150
      %p162 = scmp.eq.s32.totalorder %s35, 1
      %p163 = por %p161, %p162
      %p165 = scmp.ne.s32.totalorder %s150, %s164
      %p166 = scmp.eq.s32.totalorder %s35, 0
      %p167 = por %p165, %p166
      %s169 = sadd.s32 %s168, 1
      %p172 = scmp.eq.s32.totalorder %s29, 1
      %p173 = scmp.ne.s32.totalorder %s168, %s170
      %p174 = scmp.eq.s32.totalorder %s29, 0
      %p175 = por %p173, %p174
      %p176 = scmp.ne.s32.totalorder %s168, %s170
      %p177 = scmp.eq.s32.totalorder %s34, 1
      %p178 = por %p176, %p177
      %p179 = scmp.ne.s32.totalorder %s170, %s171
      %p180 = scmp.eq.s32.totalorder %s34, 0
      %p181 = por %p179, %p180
      %p182 = scmp.ne.s32.totalorder %s170, %s171
      %p183 = scmp.eq.s32.totalorder %s35, 1
      %p184 = por %p182, %p183
      %p186 = scmp.ne.s32.totalorder %s171, %s185
      %p187 = scmp.eq.s32.totalorder %s35, 0
      %p188 = por %p186, %p187
      %s190 = sadd.s32 %s189, 1
      %p193 = scmp.eq.s32.totalorder %s29, 1
      %p194 = scmp.ne.s32.totalorder %s189, %s191
      %p195 = scmp.eq.s32.totalorder %s29, 0
      %p196 = por %p194, %p195
      %p197 = scmp.ne.s32.totalorder %s189, %s191
      %p198 = scmp.eq.s32.totalorder %s34, 1
      %p199 = por %p197, %p198
      %p200 = scmp.ne.s32.totalorder %s191, %s192
      %p201 = scmp.eq.s32.totalorder %s34, 0
      %p202 = por %p200, %p201
      %p203 = scmp.ne.s32.totalorder %s191, %s192
      %p204 = scmp.eq.s32.totalorder %s35, 1
      %p205 = por %p203, %p204
      %p207 = scmp.ne.s32.totalorder %s192, %s206
      %p208 = scmp.eq.s32.totalorder %s35, 0
      %p209 = por %p207, %p208
      %s211 = sadd.s32 %s210, 1
      %p214 = scmp.eq.s32.totalorder %s29, 1
      %p215 = scmp.ne.s32.totalorder %s210, %s212
      %p216 = scmp.eq.s32.totalorder %s29, 0
      %p217 = por %p215, %p216
      %p218 = scmp.ne.s32.totalorder %s210, %s212
      %p219 = scmp.eq.s32.totalorder %s34, 1
      %p220 = por %p218, %p219
      %p221 = scmp.ne.s32.totalorder %s212, %s213
      %p222 = scmp.eq.s32.totalorder %s34, 0
      %p223 = por %p221, %p222
      %p224 = scmp.ne.s32.totalorder %s212, %s213
      %p225 = scmp.eq.s32.totalorder %s35, 1
      %p226 = por %p224, %p225
      %p228 = scmp.ne.s32.totalorder %s213, %s227
      %p229 = scmp.eq.s32.totalorder %s35, 0
      %p230 = por %p228, %p229
      %s232 = sadd.s32 %s231, 1
      %p235 = scmp.eq.s32.totalorder %s29, 1
      %p236 = scmp.ne.s32.totalorder %s231, %s233
      %p237 = scmp.eq.s32.totalorder %s29, 0
      %p238 = por %p236, %p237
      %p239 = scmp.ne.s32.totalorder %s231, %s233
      %p240 = scmp.eq.s32.totalorder %s34, 1
      %p241 = por %p239, %p240
      %p242 = scmp.ne.s32.totalorder %s233, %s234
      %p243 = scmp.eq.s32.totalorder %s34, 0
      %p244 = por %p242, %p243
      %p245 = scmp.ne.s32.totalorder %s233, %s234
      %p246 = scmp.eq.s32.totalorder %s35, 1
      %p247 = por %p245, %p246
      %p249 = scmp.ne.s32.totalorder %s234, %s248
      %p250 = scmp.eq.s32.totalorder %s35, 0
      %p251 = por %p249, %p250
      %s253 = sadd.s32 %s252, 1
      %p256 = scmp.eq.s32.totalorder %s29, 1
      %p257 = scmp.ne.s32.totalorder %s252, %s254
      %p258 = scmp.eq.s32.totalorder %s29, 0
      %p259 = por %p257, %p258
      %p260 = scmp.ne.s32.totalorder %s252, %s254
      %p261 = scmp.eq.s32.totalorder %s34, 1
      %p262 = por %p260, %p261
      %p263 = scmp.ne.s32.totalorder %s254, %s255
      %p264 = scmp.eq.s32.totalorder %s34, 0
      %p265 = por %p263, %p264
      %p266 = scmp.ne.s32.totalorder %s254, %s255
      %p267 = scmp.eq.s32.totalorder %s35, 1
      %p268 = por %p266, %p267
      %p270 = scmp.ne.s32.totalorder %s255, %s269
      %p271 = scmp.eq.s32.totalorder %s35, 0
      %p272 = por %p270, %p271
      %s274 = sadd.s32 %s273, 1
      %p277 = scmp.eq.s32.totalorder %s29, 1
      %p278 = scmp.ne.s32.totalorder %s273, %s275
      %p279 = scmp.eq.s32.totalorder %s29, 0
      %p280 = por %p278, %p279
      %p281 = scmp.ne.s32.totalorder %s273, %s275
      %p282 = scmp.eq.s32.totalorder %s34, 1
      %p283 = por %p281, %p282
      %p284 = scmp.ne.s32.totalorder %s275, %s276
      %p285 = scmp.eq.s32.totalorder %s34, 0
      %p286 = por %p284, %p285
      %p287 = scmp.ne.s32.totalorder %s275, %s276
      %p288 = scmp.eq.s32.totalorder %s35, 1
      %p289 = por %p287, %p288
      %p291 = scmp.ne.s32.totalorder %s276, %s290
      %p292 = scmp.eq.s32.totalorder %s35, 0
      %p293 = por %p291, %p292
      %s295 = sadd.s32 %s294, 1
      %p298 = scmp.eq.s32.totalorder %s29, 1
      %p299 = scmp.ne.s32.totalorder %s294, %s296
      %p300 = scmp.eq.s32.totalorder %s29, 0
      %p301 = por %p299, %p300
      %p302 = scmp.ne.s32.totalorder %s294, %s296
      %p303 = scmp.eq.s32.totalorder %s34, 1
      %p304 = por %p302, %p303
      %p305 = scmp.ne.s32.totalorder %s296, %s297
      %p306 = scmp.eq.s32.totalorder %s34, 0
      %p307 = por %p305, %p306
      %p308 = scmp.ne.s32.totalorder %s296, %s297
      %p309 = scmp.eq.s32.totalorder %s35, 1
      %p310 = por %p308, %p309
      %p312 = scmp.ne.s32.totalorder %s297, %s311
      %p313 = scmp.eq.s32.totalorder %s35, 0
      %p314 = por %p312, %p313
      %s316 = sadd.s32 %s315, 1
      %p319 = scmp.eq.s32.totalorder %s29, 1
      %p320 = scmp.ne.s32.totalorder %s315, %s317
      %p321 = scmp.eq.s32.totalorder %s29, 0
      %p322 = por %p320, %p321
      %p323 = scmp.ne.s32.totalorder %s315, %s317
      %p324 = scmp.eq.s32.totalorder %s34, 1
      %p325 = por %p323, %p324
      %p326 = scmp.ne.s32.totalorder %s317, %s318
      %p327 = scmp.eq.s32.totalorder %s34, 0
      %p328 = por %p326, %p327
      %p329 = scmp.ne.s32.totalorder %s317, %s318
      %p330 = scmp.eq.s32.totalorder %s35, 1
      %p331 = por %p329, %p330
      %p333 = scmp.ne.s32.totalorder %s318, %s332
      %p334 = scmp.eq.s32.totalorder %s35, 0
      %p335 = por %p333, %p334
      %s336 = ssub.s32 %s29, %s36
      %p337 = scmp.eq.s32.totalorder %s336, 0
      %s339 = sadd.s32 %s338, 1
      %s340 = scalar_select %p337, %s338, %s339
      %p343 = pneg %p337
      %p344 = scmp.eq.s32.totalorder %s29, 1
      %p345 = por %p343, %p344
      %p346 = scmp.ne.s32.totalorder %s338, %s341
      %p347 = scmp.eq.s32.totalorder %s29, 0
      %p348 = por %p346, %p347
      %p349 = scmp.ne.s32.totalorder %s338, %s341
      %p350 = scmp.eq.s32.totalorder %s34, 1
      %p351 = por %p349, %p350
      %p352 = scmp.ne.s32.totalorder %s341, %s342
      %p353 = scmp.eq.s32.totalorder %s34, 0
      %p354 = por %p352, %p353
      %p355 = scmp.ne.s32.totalorder %s341, %s342
      %p356 = scmp.eq.s32.totalorder %s35, 1
      %p357 = por %p355, %p356
      %p359 = scmp.ne.s32.totalorder %s342, %s358
      %p360 = scmp.eq.s32.totalorder %s35, 0
      %p361 = por %p359, %p360
      %p362 = scmp.le.s32.totalorder 1, %s29
      %p363 = scmp.lt.s32.totalorder %s29, 3
      %p364 = pnand %p362, %p363
      %p365 = pneg %p364
      // Predicated region
      $region9: #{tpu_custom_call.1} parent=5 // pred_check
        _
      $region10: #{tpu_custom_call.1} parent=5 // pred_check_branch
        %367 = sbr.rel (%p364) target = $region12
      $region11: #{tpu_custom_call.1} parent=5 // pred_region
        %s368 = ssub.s32 %s29, 1
        // Predicated region
        $region13: #{tpu_custom_call.1} parent=11 // pred_check
          %p369 = pneg %p76
        $region14: #{tpu_custom_call.1} parent=11 // pred_check_branch
          %371 = sbr.rel (%p369) target = $region16
        $region15: #{tpu_custom_call.1} parent=11 // pred_region
          _
        $region16: #{tpu_custom_call.1} parent=11 // pred_fallthru
          _
        // Predicated region
        $region17: #{tpu_custom_call.1} parent=11 // pred_check
          %p372 = pneg %p97
        $region18: #{tpu_custom_call.1} parent=11 // pred_check_branch
          %374 = sbr.rel (%p372) target = $region20
        $region19: #{tpu_custom_call.1} parent=11 // pred_region
          _
        $region20: #{tpu_custom_call.1} parent=11 // pred_fallthru
          _
        // Predicated region
        $region21: #{tpu_custom_call.1} parent=11 // pred_check
          %p375 = pneg %p118
        $region22: #{tpu_custom_call.1} parent=11 // pred_check_branch
          %377 = sbr.rel (%p375) target = $region24
        $region23: #{tpu_custom_call.1} parent=11 // pred_region
          %s379 = ssub.s32 2048, 2048
          %380 = vsyncadd [#allocation9], %s379
          %s381 = sshll.u32 [#allocation8], 4
          %s382 = int_to_ptr.vmem [resolvable:$true] %s381
          %387 = dma.hbm_to_vmem [thread:$0]  %s3, 2048, %s382, [#allocation9], 128, 128, 8
        $region24: #{tpu_custom_call.1} parent=11 // pred_fallthru
          _
        // Predicated region
        $region25: #{tpu_custom_call.1} parent=11 // pred_check
          %p388 = pneg %p139
        $region26: #{tpu_custom_call.1} parent=11 // pred_check_branch
          %390 = sbr.rel (%p388) target = $region28
        $region27: #{tpu_custom_call.1} parent=11 // pred_region
          %s392 = ssub.s32 2048, 2048
          %393 = vsyncadd [#allocation9], %s392
          %s394 = sshll.u32 [#allocation10], 4
          %s395 = int_to_ptr.vmem [resolvable:$true] %s394
          %400 = dma.hbm_to_vmem [thread:$0]  %s4, 2048, %s395, [#allocation9], 128, 128, 8
        $region28: #{tpu_custom_call.1} parent=11 // pred_fallthru
          _
        // Predicated region
        $region29: #{tpu_custom_call.1} parent=11 // pred_check
          %p401 = pneg %p160
        $region30: #{tpu_custom_call.1} parent=11 // pred_check_branch
          %403 = sbr.rel (%p401) target = $region32
        $region31: #{tpu_custom_call.1} parent=11 // pred_region
          %s405 = ssub.s32 2048, 2048
          %406 = vsyncadd [#allocation12], %s405
          %s407 = sshll.u32 [#allocation11], 4
          %s408 = int_to_ptr.vmem [resolvable:$true] %s407
          %413 = dma.hbm_to_vmem [thread:$0]  %s5, 2048, %s408, [#allocation12], 128, 128, 8
        $region32: #{tpu_custom_call.1} parent=11 // pred_fallthru
          _
        // Predicated region
        $region33: #{tpu_custom_call.1} parent=11 // pred_check
          %p414 = pneg %p181
        $region34: #{tpu_custom_call.1} parent=11 // pred_check_branch
          %416 = sbr.rel (%p414) target = $region36
        $region35: #{tpu_custom_call.1} parent=11 // pred_region
          %s418 = ssub.s32 2048, 2048
          %419 = vsyncadd [#allocation12], %s418
          %s420 = sshll.u32 [#allocation13], 4
          %s421 = int_to_ptr.vmem [resolvable:$true] %s420
          %426 = dma.hbm_to_vmem [thread:$0]  %s6, 2048, %s421, [#allocation12], 128, 128, 8
        $region36: #{tpu_custom_call.1} parent=11 // pred_fallthru
          _
        // Predicated region
        $region37: #{tpu_custom_call.1} parent=11 // pred_check
          %p427 = pneg %p202
        $region38: #{tpu_custom_call.1} parent=11 // pred_check_branch
          %429 = sbr.rel (%p427) target = $region40
        $region39: #{tpu_custom_call.1} parent=11 // pred_region
          _
        $region40: #{tpu_custom_call.1} parent=11 // pred_fallthru
          _
        // Predicated region
        $region41: #{tpu_custom_call.1} parent=11 // pred_check
          %p430 = pneg %p223
        $region42: #{tpu_custom_call.1} parent=11 // pred_check_branch
          %432 = sbr.rel (%p430) target = $region44
        $region43: #{tpu_custom_call.1} parent=11 // pred_region
          _
        $region44: #{tpu_custom_call.1} parent=11 // pred_fallthru
          _
        // Predicated region
        $region45: #{tpu_custom_call.1} parent=11 // pred_check
          %p433 = pneg %p244
        $region46: #{tpu_custom_call.1} parent=11 // pred_check_branch
          %435 = sbr.rel (%p433) target = $region48
        $region47: #{tpu_custom_call.1} parent=11 // pred_region
          _
        $region48: #{tpu_custom_call.1} parent=11 // pred_fallthru
          _
        // Predicated region
        $region49: #{tpu_custom_call.1} parent=11 // pred_check
          %p436 = pneg %p265
        $region50: #{tpu_custom_call.1} parent=11 // pred_check_branch
          %438 = sbr.rel (%p436) target = $region52
        $region51: #{tpu_custom_call.1} parent=11 // pred_region
          %s440 = ssub.s32 2048, 2048
          %441 = vsyncadd [#allocation15], %s440
          %s442 = sshll.u32 [#allocation14], 4
          %s443 = int_to_ptr.vmem [resolvable:$true] %s442
          %448 = dma.hbm_to_vmem [thread:$0]  %s10, 2048, %s443, [#allocation15], 128, 128, 8
        $region52: #{tpu_custom_call.1} parent=11 // pred_fallthru
          _
        // Predicated region
        $region53: #{tpu_custom_call.1} parent=11 // pred_check
          %p449 = pneg %p286
        $region54: #{tpu_custom_call.1} parent=11 // pred_check_branch
          %451 = sbr.rel (%p449) target = $region56
        $region55: #{tpu_custom_call.1} parent=11 // pred_region
          _
        $region56: #{tpu_custom_call.1} parent=11 // pred_fallthru
          _
        // Predicated region
        $region57: #{tpu_custom_call.1} parent=11 // pred_check
          %p452 = pneg %p307
        $region58: #{tpu_custom_call.1} parent=11 // pred_check_branch
          %454 = sbr.rel (%p452) target = $region60
        $region59: #{tpu_custom_call.1} parent=11 // pred_region
          %s456 = ssub.s32 2048, 2048
          %457 = vsyncadd [#allocation15], %s456
          %s458 = sshll.u32 [#allocation16], 4
          %s459 = int_to_ptr.vmem [resolvable:$true] %s458
          %464 = dma.hbm_to_vmem [thread:$0]  %s12, 2048, %s459, [#allocation15], 128, 128, 8
        $region60: #{tpu_custom_call.1} parent=11 // pred_fallthru
          _
        // Predicated region
        $region61: #{tpu_custom_call.1} parent=11 // pred_check
          %p465 = pneg %p328
        $region62: #{tpu_custom_call.1} parent=11 // pred_check_branch
          %467 = sbr.rel (%p465) target = $region64
        $region63: #{tpu_custom_call.1} parent=11 // pred_region
          _
        $region64: #{tpu_custom_call.1} parent=11 // pred_fallthru
          _
      $region12: #{tpu_custom_call.1} parent=5 // pred_fallthru
        _
      %p468 = scmp.lt.s32.totalorder %s29, 2
      // Predicated region
      $region65: #{tpu_custom_call.1} parent=5 // pred_check
        %p469 = pneg %p468
      $region66: #{tpu_custom_call.1} parent=5 // pred_check_branch
        %471 = sbr.rel (%p469) target = $region68
      $region67: #{tpu_custom_call.1} parent=5 // pred_region
        // Predicated region
        $region69: #{tpu_custom_call.1} parent=67 // pred_check
          %p472 = pneg %p49
        $region70: #{tpu_custom_call.1} parent=67 // pred_check_branch
          %474 = sbr.rel (%p472) target = $region72
        $region71: #{tpu_custom_call.1} parent=67 // pred_region
          %s475 = sand.u32 %s39, 1
          %s476 = scalar_lea.sflag [#allocation6], %s475
          %s477 = sand.u32 %s39, 1
          %s478 = smul.addr %s477, 16
          %s479 = scalar_lea.vmem [#allocation5], %s478
          %s481 = ssub.s32 256, 256
          %482 = vsyncadd %s476, %s481
          %s483 = smul.addr %s29, 2
          %s484 = smul.addr %s483, 128
          %s485 = scalar_lea.hbm %s0, %s484
          %s486 = sshll.u32 %s479, 4
          %s487 = int_to_ptr.vmem [resolvable:$true] %s486
          %492 = dma.hbm_to_vmem [thread:$0]  %s485, 256, %s487, %s476, 128, 128, 8
        $region72: #{tpu_custom_call.1} parent=67 // pred_fallthru
          _
      $region68: #{tpu_custom_call.1} parent=5 // pred_fallthru
        _
      %p493 = scmp.le.s32.totalorder 1, %s29
      %p494 = scmp.lt.s32.totalorder %s29, 3
      %p495 = pnand %p493, %p494
      %p496 = pneg %p495
      // Predicated region
      $region73: #{tpu_custom_call.1} parent=5 // pred_check
        _
      $region74: #{tpu_custom_call.1} parent=5 // pred_check_branch
        %498 = sbr.rel (%p495) target = $region76
      $region75: #{tpu_custom_call.1} parent=5 // pred_region
        %s499 = ssub.s32 %s29, 1
        %s500 = sand.u32 %s42, 1
        %s501 = scalar_lea.sflag [#allocation6], %s500
        %s502 = sand.u32 %s42, 1
        %s503 = smul.addr %s502, 16
        %s504 = scalar_lea.vmem [#allocation5], %s503
        // Predicated region
        $region77: #{tpu_custom_call.1} parent=75 // pred_check
          %p505 = pneg %p55
        $region78: #{tpu_custom_call.1} parent=75 // pred_check_branch
          %507 = sbr.rel (%p505) target = $region80
        $region79: #{tpu_custom_call.1} parent=75 // pred_region
          %508 = dma.done %s501, 256
        $region80: #{tpu_custom_call.1} parent=75 // pred_fallthru
          _
        // Predicated region
        $region81: #{tpu_custom_call.1} parent=75 // pred_check
          %p509 = pneg %p118
        $region82: #{tpu_custom_call.1} parent=75 // pred_check_branch
          %511 = sbr.rel (%p509) target = $region84
        $region83: #{tpu_custom_call.1} parent=75 // pred_region
          %512 = dma.done [#allocation9], 2048
        $region84: #{tpu_custom_call.1} parent=75 // pred_fallthru
          _
        // Predicated region
        $region85: #{tpu_custom_call.1} parent=75 // pred_check
          %p513 = pneg %p139
        $region86: #{tpu_custom_call.1} parent=75 // pred_check_branch
          %515 = sbr.rel (%p513) target = $region88
        $region87: #{tpu_custom_call.1} parent=75 // pred_region
          %516 = dma.done [#allocation9], 2048
        $region88: #{tpu_custom_call.1} parent=75 // pred_fallthru
          _
        // Predicated region
        $region89: #{tpu_custom_call.1} parent=75 // pred_check
          %p517 = pneg %p160
        $region90: #{tpu_custom_call.1} parent=75 // pred_check_branch
          %519 = sbr.rel (%p517) target = $region92
        $region91: #{tpu_custom_call.1} parent=75 // pred_region
          %520 = dma.done [#allocation12], 2048
        $region92: #{tpu_custom_call.1} parent=75 // pred_fallthru
          _
        // Predicated region
        $region93: #{tpu_custom_call.1} parent=75 // pred_check
          %p521 = pneg %p181
        $region94: #{tpu_custom_call.1} parent=75 // pred_check_branch
          %523 = sbr.rel (%p521) target = $region96
        $region95: #{tpu_custom_call.1} parent=75 // pred_region
          %524 = dma.done [#allocation12], 2048
        $region96: #{tpu_custom_call.1} parent=75 // pred_fallthru
          _
        // Predicated region
        $region97: #{tpu_custom_call.1} parent=75 // pred_check
          %p525 = pneg %p265
        $region98: #{tpu_custom_call.1} parent=75 // pred_check_branch
          %527 = sbr.rel (%p525) target = $region100
        $region99: #{tpu_custom_call.1} parent=75 // pred_region
          %528 = dma.done [#allocation15], 2048
        $region100: #{tpu_custom_call.1} parent=75 // pred_fallthru
          _
        // Predicated region
        $region101: #{tpu_custom_call.1} parent=75 // pred_check
          %p529 = pneg %p307
        $region102: #{tpu_custom_call.1} parent=75 // pred_check_branch
          %531 = sbr.rel (%p529) target = $region104
        $region103: #{tpu_custom_call.1} parent=75 // pred_region
          %532 = dma.done [#allocation15], 2048
        $region104: #{tpu_custom_call.1} parent=75 // pred_fallthru
          _
        %s533 = sand.u32 %s42, 1
        %s534 = scalar_lea.sflag [#allocation6], %s533
        %s535 = sand.u32 %s42, 1
        %s536 = smul.addr %s535, 16
        %s537 = scalar_lea.vmem [#allocation5], %s536
        %p538 = pneg %p55
        %p539 = pneg %p52
        %p540 = pneg %p76
        %p541 = pneg %p73
        %p542 = pneg %p97
        %p543 = pneg %p94
        %p544 = pneg %p118
        %p545 = pneg %p115
        %p546 = pneg %p139
        %p547 = pneg %p136
        %p548 = pneg %p160
        %p549 = pneg %p157
        %p550 = pneg %p181
        %p551 = pneg %p178
        %p552 = pneg %p202
        %p553 = pneg %p199
        %p554 = pneg %p223
        %p555 = pneg %p220
        %p556 = pneg %p244
        %p557 = pneg %p241
        %p558 = pneg %p265
        %p559 = pneg %p262
        %p560 = pneg %p286
        %p561 = pneg %p283
        %p562 = pneg %p307
        %p563 = pneg %p304
        %p564 = pneg %p328
        %p565 = pneg %p325
        %p566 = pneg %p354
        %p567 = pneg %p351
        %s568 = sand.u32 %s341, 1
        %s569 = scalar_lea.sflag [#allocation7], %s568
        %s570 = sand.u32 %s341, 1
        %s571 = smul.addr %s570, 16
        %s572 = scalar_lea.vmem [#allocation17], %s571
        %v573 = vld [vmem:[%s504] sm:$0xff]
        %v574 = vld [vmem:[%s504 + $0x8] sm:$0xff]
        %v575 = vld [vmem:[%s1] sm:$0x1]
        %v576 = vld [vmem:[%s2] sm:$0x1]
        %v577 = vlaneseq
        %v578 = vand.u32 %v577, 127
        %vm579 = vcmp.lt.s32.totalorder %v578, 32
        %580 = vadd.xlane.f32.xlu0 %v573
        %v581 = vpop.xlane.xlu0 %580
        %582 = vadd.xlane.f32.xlu0 %v574
        %v583 = vpop.xlane.xlu0 %582
        %v584 = vmul.f32 %v581, 0.03125
        %v585 = vmul.f32 %v583, 0.03125
        %v586 = vsub.f32 %v573, %v584
        %v587 = vsub.f32 %v574, %v585
        %v588 = vsel %vm579, %v586, 0.0
        %v589 = vsel %vm579, %v587, 0.0
        %v590 = vmul.f32 %v588, %v588
        %v591 = vmul.f32 %v589, %v589
        %592 = vadd.xlane.f32.xlu0 %v590
        %v593 = vpop.xlane.xlu0 %592
        %594 = vadd.xlane.f32.xlu0 %v591
        %v595 = vpop.xlane.xlu0 %594
        %v596 = vmul.f32 %v593, 0.03125
        %v597 = vmul.f32 %v595, 0.03125
        %v598 = vadd.f32 %v596, 1e-05
        %v599 = vadd.f32 %v597, 1e-05
        %v600 = vrsqrt.pop %v598
        %v601 = vrsqrt.pop %v599
        %v602 = vmul.f32 %v588, %v600
        %v603 = vmul.f32 %v589, %v601
        %v605 = vlaneseq
        %v606 = vshrl.u32 %v605, 7
        %v607 = vsub.s32 0, %v606
        %v608 = vrot.slane %v575, %v607
        %v610 = vmul.f32 %v602, %v608
        %v611 = vmul.f32 %v603, %v608
        %v613 = vlaneseq
        %v614 = vshrl.u32 %v613, 7
        %v615 = vsub.s32 0, %v614
        %v616 = vrot.slane %v576, %v615
        %v618 = vadd.f32 %v610, %v616
        %v619 = vadd.f32 %v611, %v616
        %v620 = vld [vmem:[#allocation8] sm:$0xff]
        %v621 = vld [vmem:[#allocation8 + $0x8] sm:$0xff]
        %v622 = vld [vmem:[#allocation8 + $0x10] sm:$0xff]
        %v623 = vld [vmem:[#allocation8 + $0x18] sm:$0xff]
        %v624 = vld [vmem:[#allocation8 + $0x20] sm:$0xff]
        %v625 = vld [vmem:[#allocation8 + $0x28] sm:$0xff]
        %v626 = vld [vmem:[#allocation8 + $0x30] sm:$0xff]
        %v627 = vld [vmem:[#allocation8 + $0x38] sm:$0xff]
        %v628 = vld [vmem:[#allocation8 + $0x40] sm:$0xff]
        %v629 = vld [vmem:[#allocation8 + $0x48] sm:$0xff]
        %v630 = vld [vmem:[#allocation8 + $0x50] sm:$0xff]
        %v631 = vld [vmem:[#allocation8 + $0x58] sm:$0xff]
        %v632 = vld [vmem:[#allocation8 + $0x60] sm:$0xff]
        %v633 = vld [vmem:[#allocation8 + $0x68] sm:$0xff]
        %v634 = vld [vmem:[#allocation8 + $0x70] sm:$0xff]
        %v635 = vld [vmem:[#allocation8 + $0x78] sm:$0xff]
        %636 = vmatprep.subr.mxu0 0.0
        %637 = vmatpush1.msra.mxu0 %v620
        %638 = vmatprep.subr.mxu0 0.0
        %639 = vmatpush1.msra.mxu0 %v621
        %640 = vmatprep.subr.mxu0 0.0
        %641 = vmatpush1.msra.mxu0 %v622
        %642 = vmatprep.subr.mxu0 0.0
        %643 = vmatpush1.msra.mxu0 %v623
        %644 = vmatprep.subr.mxu0 0.0
        %645 = vmatpush1.msra.mxu0 %v624
        %646 = vmatprep.subr.mxu0 0.0
        %647 = vmatpush1.msra.mxu0 %v625
        %648 = vmatprep.subr.mxu0 0.0
        %649 = vmatpush1.msra.mxu0 %v626
        %650 = vmatprep.subr.mxu0 0.0
        %651 = vmatpush1.msra.mxu0 %v627
        %652 = vmatprep.subr.mxu0 0.0
        %653 = vmatpush1.msra.mxu0 %v628
        %654 = vmatprep.subr.mxu0 0.0
        %655 = vmatpush1.msra.mxu0 %v629
        %656 = vmatprep.subr.mxu0 0.0
        %657 = vmatpush1.msra.mxu0 %v630
        %658 = vmatprep.subr.mxu0 0.0
        %659 = vmatpush1.msra.mxu0 %v631
        %660 = vmatprep.subr.mxu0 0.0
        %661 = vmatpush1.msra.mxu0 %v632
        %662 = vmatprep.subr.mxu0 0.0
        %663 = vmatpush1.msra.mxu0 %v633
        %664 = vmatprep.subr.mxu0 0.0
        %665 = vmatpush1.msra.mxu0 %v634
        %666 = vmatprep.subr.mxu0 0.0
        %667 = vmatpush1.msra.mxu0 %v635
        %668 = vmatprep.subr.mxu0 0.0
        %669 = vmatpush1.msra.mxu0 0.0
        %670 = vmatprep.subr.mxu0 0.0
        %671 = vmatpush1.msra.mxu0 0.0
        %672 = vmatprep.subr.mxu0 0.0
        %673 = vmatpush1.msra.mxu0 0.0
        %674 = vmatprep.subr.mxu0 0.0
        %675 = vmatpush1.msra.mxu0 0.0
        %676 = vmatprep.subr.mxu0 0.0
        %677 = vmatpush1.msra.mxu0 0.0
        %678 = vmatprep.subr.mxu0 0.0
        %679 = vmatpush1.msra.mxu0 0.0
        %680 = vmatprep.subr.mxu0 0.0
        %681 = vmatpush1.msra.mxu0 0.0
        %682 = vmatprep.subr.mxu0 0.0
        %683 = vmatpush1.msra.mxu0 0.0
        %684 = vmatprep.subr.mxu0 0.0
        %685 = vmatpush1.msra.mxu0 0.0
        %686 = vmatprep.subr.mxu0 0.0
        %687 = vmatpush1.msra.mxu0 0.0
        %688 = vmatprep.subr.mxu0 0.0
        %689 = vmatpush1.msra.mxu0 0.0
        %690 = vmatprep.subr.mxu0 0.0
        %691 = vmatpush1.msra.mxu0 0.0
        %692 = vmatprep.subr.mxu0 0.0
        %693 = vmatpush1.msra.mxu0 0.0
        %694 = vmatprep.subr.mxu0 0.0
        %695 = vmatpush1.msra.mxu0 0.0
        %696 = vmatprep.subr.mxu0 0.0
        %697 = vmatpush1.msra.mxu0 0.0
        %698 = vmatprep.subr.mxu0 0.0
        %699 = vmatpush1.msra.mxu0 0.0
        %700 = vmatprep.mubr.f32.mxu0 0.0
        %701 = vmatmul.mubr.f32.gmra.mrb[0].mxu0 %v618
        %v702 = vpop.f32.mrb[0].mxu0
        %v703 = vadd.f32 0.0, %v702
        %v704 = vpop.f32.mrb[0].mxu0
        %705 = vmatprep.mubr.f32.mxu0 0.0
        %706 = vmatmul.mubr.f32.gmra.mrb[0].mxu0 %v619
        %v707 = vpop.f32.mrb[0].mxu0
        %v708 = vadd.f32 0.0, %v707
        %v709 = vpop.f32.mrb[0].mxu0
        %710 = vdwg.mxu0
        %711 = vst [vmem:[#allocation2] sm:$0xff] %v703
        %712 = vst [vmem:[#allocation2 + $0x8] sm:$0xff] %v708
        %v713 = vld [vmem:[#allocation10] sm:$0xff]
        %v714 = vld [vmem:[#allocation10 + $0x8] sm:$0xff]
        %v715 = vld [vmem:[#allocation10 + $0x10] sm:$0xff]
        %v716 = vld [vmem:[#allocation10 + $0x18] sm:$0xff]
        %v717 = vld [vmem:[#allocation10 + $0x20] sm:$0xff]
        %v718 = vld [vmem:[#allocation10 + $0x28] sm:$0xff]
        %v719 = vld [vmem:[#allocation10 + $0x30] sm:$0xff]
        %v720 = vld [vmem:[#allocation10 + $0x38] sm:$0xff]
        %v721 = vld [vmem:[#allocation10 + $0x40] sm:$0xff]
        %v722 = vld [vmem:[#allocation10 + $0x48] sm:$0xff]
        %v723 = vld [vmem:[#allocation10 + $0x50] sm:$0xff]
        %v724 = vld [vmem:[#allocation10 + $0x58] sm:$0xff]
        %v725 = vld [vmem:[#allocation10 + $0x60] sm:$0xff]
        %v726 = vld [vmem:[#allocation10 + $0x68] sm:$0xff]
        %v727 = vld [vmem:[#allocation10 + $0x70] sm:$0xff]
        %v728 = vld [vmem:[#allocation10 + $0x78] sm:$0xff]
        %729 = vmatprep.subr.mxu0 0.0
        %730 = vmatpush1.msra.mxu0 %v713
        %731 = vmatprep.subr.mxu0 0.0
        %732 = vmatpush1.msra.mxu0 %v714
        %733 = vmatprep.subr.mxu0 0.0
        %734 = vmatpush1.msra.mxu0 %v715
        %735 = vmatprep.subr.mxu0 0.0
        %736 = vmatpush1.msra.mxu0 %v716
        %737 = vmatprep.subr.mxu0 0.0
        %738 = vmatpush1.msra.mxu0 %v717
        %739 = vmatprep.subr.mxu0 0.0
        %740 = vmatpush1.msra.mxu0 %v718
        %741 = vmatprep.subr.mxu0 0.0
        %742 = vmatpush1.msra.mxu0 %v719
        %743 = vmatprep.subr.mxu0 0.0
        %744 = vmatpush1.msra.mxu0 %v720
        %745 = vmatprep.subr.mxu0 0.0
        %746 = vmatpush1.msra.mxu0 %v721
        %747 = vmatprep.subr.mxu0 0.0
        %748 = vmatpush1.msra.mxu0 %v722
        %749 = vmatprep.subr.mxu0 0.0
        %750 = vmatpush1.msra.mxu0 %v723
        %751 = vmatprep.subr.mxu0 0.0
        %752 = vmatpush1.msra.mxu0 %v724
        %753 = vmatprep.subr.mxu0 0.0
        %754 = vmatpush1.msra.mxu0 %v725
        %755 = vmatprep.subr.mxu0 0.0
        %756 = vmatpush1.msra.mxu0 %v726
        %757 = vmatprep.subr.mxu0 0.0
        %758 = vmatpush1.msra.mxu0 %v727
        %759 = vmatprep.subr.mxu0 0.0
        %760 = vmatpush1.msra.mxu0 %v728
        %761 = vmatprep.subr.mxu0 0.0
        %762 = vmatpush1.msra.mxu0 0.0
        %763 = vmatprep.subr.mxu0 0.0
        %764 = vmatpush1.msra.mxu0 0.0
        %765 = vmatprep.subr.mxu0 0.0
        %766 = vmatpush1.msra.mxu0 0.0
        %767 = vmatprep.subr.mxu0 0.0
        %768 = vmatpush1.msra.mxu0 0.0
        %769 = vmatprep.subr.mxu0 0.0
        %770 = vmatpush1.msra.mxu0 0.0
        %771 = vmatprep.subr.mxu0 0.0
        %772 = vmatpush1.msra.mxu0 0.0
        %773 = vmatprep.subr.mxu0 0.0
        %774 = vmatpush1.msra.mxu0 0.0
        %775 = vmatprep.subr.mxu0 0.0
        %776 = vmatpush1.msra.mxu0 0.0
        %777 = vmatprep.subr.mxu0 0.0
        %778 = vmatpush1.msra.mxu0 0.0
        %779 = vmatprep.subr.mxu0 0.0
        %780 = vmatpush1.msra.mxu0 0.0
        %781 = vmatprep.subr.mxu0 0.0
        %782 = vmatpush1.msra.mxu0 0.0
        %783 = vmatprep.subr.mxu0 0.0
        %784 = vmatpush1.msra.mxu0 0.0
        %785 = vmatprep.subr.mxu0 0.0
        %786 = vmatpush1.msra.mxu0 0.0
        %787 = vmatprep.subr.mxu0 0.0
        %788 = vmatpush1.msra.mxu0 0.0
        %789 = vmatprep.subr.mxu0 0.0
        %790 = vmatpush1.msra.mxu0 0.0
        %791 = vmatprep.subr.mxu0 0.0
        %792 = vmatpush1.msra.mxu0 0.0
        %793 = vmatprep.mubr.f32.mxu0 0.0
        %794 = vmatmul.mubr.f32.gmra.mrb[0].mxu0 %v618
        %v795 = vpop.f32.mrb[0].mxu0
        %v796 = vadd.f32 0.0, %v795
        %v797 = vpop.f32.mrb[0].mxu0
        %798 = vmatprep.mubr.f32.mxu0 0.0
        %799 = vmatmul.mubr.f32.gmra.mrb[0].mxu0 %v619
        %v800 = vpop.f32.mrb[0].mxu0
        %v801 = vadd.f32 0.0, %v800
        %v802 = vpop.f32.mrb[0].mxu0
        %803 = vdwg.mxu0
        %804 = vst [vmem:[#allocation3] sm:$0xff] %v796
        %805 = vst [vmem:[#allocation3 + $0x8] sm:$0xff] %v801
        %v806 = vld [vmem:[#allocation11] sm:$0xff]
        %v807 = vld [vmem:[#allocation11 + $0x8] sm:$0xff]
        %v808 = vld [vmem:[#allocation11 + $0x10] sm:$0xff]
        %v809 = vld [vmem:[#allocation11 + $0x18] sm:$0xff]
        %v810 = vld [vmem:[#allocation11 + $0x20] sm:$0xff]
        %v811 = vld [vmem:[#allocation11 + $0x28] sm:$0xff]
        %v812 = vld [vmem:[#allocation11 + $0x30] sm:$0xff]
        %v813 = vld [vmem:[#allocation11 + $0x38] sm:$0xff]
        %v814 = vld [vmem:[#allocation11 + $0x40] sm:$0xff]
        %v815 = vld [vmem:[#allocation11 + $0x48] sm:$0xff]
        %v816 = vld [vmem:[#allocation11 + $0x50] sm:$0xff]
        %v817 = vld [vmem:[#allocation11 + $0x58] sm:$0xff]
        %v818 = vld [vmem:[#allocation11 + $0x60] sm:$0xff]
        %v819 = vld [vmem:[#allocation11 + $0x68] sm:$0xff]
        %v820 = vld [vmem:[#allocation11 + $0x70] sm:$0xff]
        %v821 = vld [vmem:[#allocation11 + $0x78] sm:$0xff]
        %822 = vmatprep.subr.mxu0 0.0
        %823 = vmatpush1.msra.mxu0 %v806
        %824 = vmatprep.subr.mxu0 0.0
        %825 = vmatpush1.msra.mxu0 %v807
        %826 = vmatprep.subr.mxu0 0.0
        %827 = vmatpush1.msra.mxu0 %v808
        %828 = vmatprep.subr.mxu0 0.0
        %829 = vmatpush1.msra.mxu0 %v809
        %830 = vmatprep.subr.mxu0 0.0
        %831 = vmatpush1.msra.mxu0 %v810
        %832 = vmatprep.subr.mxu0 0.0
        %833 = vmatpush1.msra.mxu0 %v811
        %834 = vmatprep.subr.mxu0 0.0
        %835 = vmatpush1.msra.mxu0 %v812
        %836 = vmatprep.subr.mxu0 0.0
        %837 = vmatpush1.msra.mxu0 %v813
        %838 = vmatprep.subr.mxu0 0.0
        %839 = vmatpush1.msra.mxu0 %v814
        %840 = vmatprep.subr.mxu0 0.0
        %841 = vmatpush1.msra.mxu0 %v815
        %842 = vmatprep.subr.mxu0 0.0
        %843 = vmatpush1.msra.mxu0 %v816
        %844 = vmatprep.subr.mxu0 0.0
        %845 = vmatpush1.msra.mxu0 %v817
        %846 = vmatprep.subr.mxu0 0.0
        %847 = vmatpush1.msra.mxu0 %v818
        %848 = vmatprep.subr.mxu0 0.0
        %849 = vmatpush1.msra.mxu0 %v819
        %850 = vmatprep.subr.mxu0 0.0
        %851 = vmatpush1.msra.mxu0 %v820
        %852 = vmatprep.subr.mxu0 0.0
        %853 = vmatpush1.msra.mxu0 %v821
        %854 = vmatprep.subr.mxu0 0.0
        %855 = vmatpush1.msra.mxu0 0.0
        %856 = vmatprep.subr.mxu0 0.0
        %857 = vmatpush1.msra.mxu0 0.0
        %858 = vmatprep.subr.mxu0 0.0
        %859 = vmatpush1.msra.mxu0 0.0
        %860 = vmatprep.subr.mxu0 0.0
        %861 = vmatpush1.msra.mxu0 0.0
        %862 = vmatprep.subr.mxu0 0.0
        %863 = vmatpush1.msra.mxu0 0.0
        %864 = vmatprep.subr.mxu0 0.0
        %865 = vmatpush1.msra.mxu0 0.0
        %866 = vmatprep.subr.mxu0 0.0
        %867 = vmatpush1.msra.mxu0 0.0
        %868 = vmatprep.subr.mxu0 0.0
        %869 = vmatpush1.msra.mxu0 0.0
        %870 = vmatprep.subr.mxu0 0.0
        %871 = vmatpush1.msra.mxu0 0.0
        %872 = vmatprep.subr.mxu0 0.0
        %873 = vmatpush1.msra.mxu0 0.0
        %874 = vmatprep.subr.mxu0 0.0
        %875 = vmatpush1.msra.mxu0 0.0
        %876 = vmatprep.subr.mxu0 0.0
        %877 = vmatpush1.msra.mxu0 0.0
        %878 = vmatprep.subr.mxu0 0.0
        %879 = vmatpush1.msra.mxu0 0.0
        %880 = vmatprep.subr.mxu0 0.0
        %881 = vmatpush1.msra.mxu0 0.0
        %882 = vmatprep.subr.mxu0 0.0
        %883 = vmatpush1.msra.mxu0 0.0
        %884 = vmatprep.subr.mxu0 0.0
        %885 = vmatpush1.msra.mxu0 0.0
        %886 = vmatprep.mubr.f32.mxu0 0.0
        %887 = vmatmul.mubr.f32.gmra.mrb[0].mxu0 %v618
        %v888 = vpop.f32.mrb[0].mxu0
        %v889 = vadd.f32 0.0, %v888
        %v890 = vpop.f32.mrb[0].mxu0
        %891 = vmatprep.mubr.f32.mxu0 0.0
        %892 = vmatmul.mubr.f32.gmra.mrb[0].mxu0 %v619
        %v893 = vpop.f32.mrb[0].mxu0
        %v894 = vadd.f32 0.0, %v893
        %v895 = vpop.f32.mrb[0].mxu0
        %896 = vdwg.mxu0
        %897 = vst [vmem:[#allocation4] sm:$0xff] %v889
        %898 = vst [vmem:[#allocation4 + $0x8] sm:$0xff] %v894
        %v899 = vld [vmem:[#allocation2] sm:$0xff]
        %v900 = vld [vmem:[#allocation2 + $0x8] sm:$0xff]
        %v901 = vld [vmem:[#allocation3] sm:$0xff]
        %v902 = vld [vmem:[#allocation3 + $0x8] sm:$0xff]
        %v903 = vld [vmem:[#allocation4] sm:$0xff]
        %v904 = vld [vmem:[#allocation4 + $0x8] sm:$0xff]
        %905 = vmatprep.subr.mxu0 0.0
        %906 = vmatpush1.xpose.msra.mxu0 %v901
        %907 = vmatprep.subr.mxu0 0.0
        %908 = vmatpush1.xpose.msra.mxu0 %v902
        %909 = vmatprep.subr.mxu0 0.0
        %910 = vmatpush1.xpose.msra.mxu0 0.0
        %911 = vmatprep.subr.mxu0 0.0
        %912 = vmatpush1.xpose.msra.mxu0 0.0
        %913 = vmatprep.subr.mxu0 0.0
        %914 = vmatpush1.xpose.msra.mxu0 0.0
        %915 = vmatprep.subr.mxu0 0.0
        %916 = vmatpush1.xpose.msra.mxu0 0.0
        %917 = vmatprep.subr.mxu0 0.0
        %918 = vmatpush1.xpose.msra.mxu0 0.0
        %919 = vmatprep.subr.mxu0 0.0
        %920 = vmatpush1.xpose.msra.mxu0 0.0
        %921 = vmatprep.subr.mxu0 0.0
        %922 = vmatpush1.xpose.msra.mxu0 0.0
        %923 = vmatprep.subr.mxu0 0.0
        %924 = vmatpush1.xpose.msra.mxu0 0.0
        %925 = vmatprep.subr.mxu0 0.0
        %926 = vmatpush1.xpose.msra.mxu0 0.0
        %927 = vmatprep.subr.mxu0 0.0
        %928 = vmatpush1.xpose.msra.mxu0 0.0
        %929 = vmatprep.subr.mxu0 0.0
        %930 = vmatpush1.xpose.msra.mxu0 0.0
        %931 = vmatprep.subr.mxu0 0.0
        %932 = vmatpush1.xpose.msra.mxu0 0.0
        %933 = vmatprep.subr.mxu0 0.0
        %934 = vmatpush1.xpose.msra.mxu0 0.0
        %935 = vmatprep.subr.mxu0 0.0
        %936 = vmatpush1.xpose.msra.mxu0 0.0
        %937 = vmatprep.subr.mxu0 0.0
        %938 = vmatpush1.xpose.msra.mxu0 0.0
        %939 = vmatprep.subr.mxu0 0.0
        %940 = vmatpush1.xpose.msra.mxu0 0.0
        %941 = vmatprep.subr.mxu0 0.0
        %942 = vmatpush1.xpose.msra.mxu0 0.0
        %943 = vmatprep.subr.mxu0 0.0
        %944 = vmatpush1.xpose.msra.mxu0 0.0
        %945 = vmatprep.subr.mxu0 0.0
        %946 = vmatpush1.xpose.msra.mxu0 0.0
        %947 = vmatprep.subr.mxu0 0.0
        %948 = vmatpush1.xpose.msra.mxu0 0.0
        %949 = vmatprep.subr.mxu0 0.0
        %950 = vmatpush1.xpose.msra.mxu0 0.0
        %951 = vmatprep.subr.mxu0 0.0
        %952 = vmatpush1.xpose.msra.mxu0 0.0
        %953 = vmatprep.subr.mxu0 0.0
        %954 = vmatpush1.xpose.msra.mxu0 0.0
        %955 = vmatprep.subr.mxu0 0.0
        %956 = vmatpush1.xpose.msra.mxu0 0.0
        %957 = vmatprep.subr.mxu0 0.0
        %958 = vmatpush1.xpose.msra.mxu0 0.0
        %959 = vmatprep.subr.mxu0 0.0
        %960 = vmatpush1.xpose.msra.mxu0 0.0
        %961 = vmatprep.subr.mxu0 0.0
        %962 = vmatpush1.xpose.msra.mxu0 0.0
        %963 = vmatprep.subr.mxu0 0.0
        %964 = vmatpush1.xpose.msra.mxu0 0.0
        %965 = vmatprep.subr.mxu0 0.0
        %966 = vmatpush1.xpose.msra.mxu0 0.0
        %967 = vmatprep.subr.mxu0 0.0
        %968 = vmatpush1.xpose.msra.mxu0 0.0
        %969 = vmatprep.mubr.f32.mxu0 0.0
        %970 = vmatmul.mubr.f32.gmra.mrb[0].mxu0 %v899
        %v971 = vpop.f32.mrb[0].mxu0
        %v972 = vadd.f32 0.0, %v971
        %v973 = vpop.f32.mrb[0].mxu0
        %974 = vmatprep.mubr.f32.mxu0 0.0
        %975 = vmatmul.mubr.f32.gmra.mrb[0].mxu0 %v900
        %v976 = vpop.f32.mrb[0].mxu0
        %v977 = vadd.f32 0.0, %v976
        %v978 = vpop.f32.mrb[0].mxu0
        %979 = vdwg.mxu0
        %vm980 = vcmask 130048
        %v981 = vsel %vm980, %v972, -inf
        %982 = vmax.xlane.f32.xlu0 %v981
        %v983 = vpop.xlane.xlu0 %982
        %v984 = vsel %vm980, %v977, -inf
        %985 = vmax.xlane.f32.xlu0 %v984
        %v986 = vpop.xlane.xlu0 %985
        %v987 = vsub.f32 -inf, %v983
        %v988 = vsub.f32 -inf, %v986
        %v989 = vmul.f32 %v987, 1.442695
        %v990 = vpow.pop %v989
        %v991 = vmul.f32 %v988, 1.442695
        %v992 = vpow.pop %v991
        %v993 = vsub.f32 %v972, %v983
        %v994 = vsub.f32 %v977, %v986
        %v995 = vmul.f32 %v993, 1.442695
        %v996 = vpow.pop %v995
        %v997 = vmul.f32 %v994, 1.442695
        %v998 = vpow.pop %v997
        %v999 = vmul.f32 %v990, 0.0
        %v1000 = vmul.f32 %v992, 0.0
        %v1001 = vsel %vm980, %v996, 0.0
        %1002 = vadd.xlane.f32.xlu0 %v1001
        %v1003 = vpop.xlane.xlu0 %1002
        %v1004 = vsel %vm980, %v998, 0.0
        %1005 = vadd.xlane.f32.xlu0 %v1004
        %v1006 = vpop.xlane.xlu0 %1005
        %v1007 = vadd.f32 %v999, %v1003
        %v1008 = vadd.f32 %v1000, %v1006
        %v1010 = vsel %vm980, %v996, 0
        %v1013 = vsel %vm980, %v998, 0
        %1015 = vmatprep.subr.mxu0 0.0
        %1016 = vmatpush1.msra.mxu0 %v903
        %1017 = vmatprep.subr.mxu0 0.0
        %1018 = vmatpush1.msra.mxu0 %v904
        %1019 = vmatprep.subr.mxu0 0.0
        %1020 = vmatpush1.msra.mxu0 0.0
        %1021 = vmatprep.subr.mxu0 0.0
        %1022 = vmatpush1.msra.mxu0 0.0
        %1023 = vmatprep.subr.mxu0 0.0
        %1024 = vmatpush1.msra.mxu0 0.0
        %1025 = vmatprep.subr.mxu0 0.0
        %1026 = vmatpush1.msra.mxu0 0.0
        %1027 = vmatprep.subr.mxu0 0.0
        %1028 = vmatpush1.msra.mxu0 0.0
        %1029 = vmatprep.subr.mxu0 0.0
        %1030 = vmatpush1.msra.mxu0 0.0
        %1031 = vmatprep.subr.mxu0 0.0
        %1032 = vmatpush1.msra.mxu0 0.0
        %1033 = vmatprep.subr.mxu0 0.0
        %1034 = vmatpush1.msra.mxu0 0.0
        %1035 = vmatprep.subr.mxu0 0.0
        %1036 = vmatpush1.msra.mxu0 0.0
        %1037 = vmatprep.subr.mxu0 0.0
        %1038 = vmatpush1.msra.mxu0 0.0
        %1039 = vmatprep.subr.mxu0 0.0
        %1040 = vmatpush1.msra.mxu0 0.0
        %1041 = vmatprep.subr.mxu0 0.0
        %1042 = vmatpush1.msra.mxu0 0.0
        %1043 = vmatprep.subr.mxu0 0.0
        %1044 = vmatpush1.msra.mxu0 0.0
        %1045 = vmatprep.subr.mxu0 0.0
        %1046 = vmatpush1.msra.mxu0 0.0
        %1047 = vmatprep.subr.mxu0 0.0
        %1048 = vmatpush1.msra.mxu0 0.0
        %1049 = vmatprep.subr.mxu0 0.0
        %1050 = vmatpush1.msra.mxu0 0.0
        %1051 = vmatprep.subr.mxu0 0.0
        %1052 = vmatpush1.msra.mxu0 0.0
        %1053 = vmatprep.subr.mxu0 0.0
        %1054 = vmatpush1.msra.mxu0 0.0
        %1055 = vmatprep.subr.mxu0 0.0
        %1056 = vmatpush1.msra.mxu0 0.0
        %1057 = vmatprep.subr.mxu0 0.0
        %1058 = vmatpush1.msra.mxu0 0.0
        %1059 = vmatprep.subr.mxu0 0.0
        %1060 = vmatpush1.msra.mxu0 0.0
        %1061 = vmatprep.subr.mxu0 0.0
        %1062 = vmatpush1.msra.mxu0 0.0
        %1063 = vmatprep.subr.mxu0 0.0
        %1064 = vmatpush1.msra.mxu0 0.0
        %1065 = vmatprep.subr.mxu0 0.0
        %1066 = vmatpush1.msra.mxu0 0.0
        %1067 = vmatprep.subr.mxu0 0.0
        %1068 = vmatpush1.msra.mxu0 0.0
        %1069 = vmatprep.subr.mxu0 0.0
        %1070 = vmatpush1.msra.mxu0 0.0
        %1071 = vmatprep.subr.mxu0 0.0
        %1072 = vmatpush1.msra.mxu0 0.0
        %1073 = vmatprep.subr.mxu0 0.0
        %1074 = vmatpush1.msra.mxu0 0.0
        %1075 = vmatprep.subr.mxu0 0.0
        %1076 = vmatpush1.msra.mxu0 0.0
        %1077 = vmatprep.subr.mxu0 0.0
        %1078 = vmatpush1.msra.mxu0 0.0
        %1079 = vmatprep.mubr.f32.mxu0 0.0
        %1080 = vmatmul.mubr.f32.gmra.mrb[0].mxu0 %v1010
        %v1081 = vpop.f32.mrb[0].mxu0
        %v1082 = vadd.f32 0.0, %v1081
        %v1083 = vpop.f32.mrb[0].mxu0
        %1084 = vmatprep.mubr.f32.mxu0 0.0
        %1085 = vmatmul.mubr.f32.gmra.mrb[0].mxu0 %v1013
        %v1086 = vpop.f32.mrb[0].mxu0
        %v1087 = vadd.f32 0.0, %v1086
        %v1088 = vpop.f32.mrb[0].mxu0
        %1089 = vdwg.mxu0
        %v1090 = vadd.f32 %v999, %v1082
        %v1091 = vadd.f32 %v1000, %v1087
        %v1092 = vrcp.pop %v1007
        %v1093 = vrcp.pop %v1008
        %v1094 = vmul.f32 %v1090, %v1092
        %v1095 = vmul.f32 %v1091, %v1093
        %v1096 = vld [vmem:[#allocation13] sm:$0xff]
        %v1097 = vld [vmem:[#allocation13 + $0x8] sm:$0xff]
        %v1098 = vld [vmem:[#allocation13 + $0x10] sm:$0xff]
        %v1099 = vld [vmem:[#allocation13 + $0x18] sm:$0xff]
        %v1100 = vld [vmem:[#allocation13 + $0x20] sm:$0xff]
        %v1101 = vld [vmem:[#allocation13 + $0x28] sm:$0xff]
        %v1102 = vld [vmem:[#allocation13 + $0x30] sm:$0xff]
        %v1103 = vld [vmem:[#allocation13 + $0x38] sm:$0xff]
        %v1104 = vld [vmem:[#allocation13 + $0x40] sm:$0xff]
        %v1105 = vld [vmem:[#allocation13 + $0x48] sm:$0xff]
        %v1106 = vld [vmem:[#allocation13 + $0x50] sm:$0xff]
        %v1107 = vld [vmem:[#allocation13 + $0x58] sm:$0xff]
        %v1108 = vld [vmem:[#allocation13 + $0x60] sm:$0xff]
        %v1109 = vld [vmem:[#allocation13 + $0x68] sm:$0xff]
        %v1110 = vld [vmem:[#allocation13 + $0x70] sm:$0xff]
        %v1111 = vld [vmem:[#allocation13 + $0x78] sm:$0xff]
        %v1112 = vld [vmem:[%s7] sm:$0x1]
        %v1114 = vlaneseq
        %v1115 = vshrl.u32 %v1114, 7
        %v1116 = vsub.s32 0, %v1115
        %v1117 = vrot.slane %v1112, %v1116
        %1119 = vmatprep.subr.mxu0 0.0
        %1120 = vmatpush1.msra.mxu0 %v1096
        %1121 = vmatprep.subr.mxu0 0.0
        %1122 = vmatpush1.msra.mxu0 %v1097
        %1123 = vmatprep.subr.mxu0 0.0
        %1124 = vmatpush1.msra.mxu0 %v1098
        %1125 = vmatprep.subr.mxu0 0.0
        %1126 = vmatpush1.msra.mxu0 %v1099
        %1127 = vmatprep.subr.mxu0 0.0
        %1128 = vmatpush1.msra.mxu0 %v1100
        %1129 = vmatprep.subr.mxu0 0.0
        %1130 = vmatpush1.msra.mxu0 %v1101
        %1131 = vmatprep.subr.mxu0 0.0
        %1132 = vmatpush1.msra.mxu0 %v1102
        %1133 = vmatprep.subr.mxu0 0.0
        %1134 = vmatpush1.msra.mxu0 %v1103
        %1135 = vmatprep.subr.mxu0 0.0
        %1136 = vmatpush1.msra.mxu0 %v1104
        %1137 = vmatprep.subr.mxu0 0.0
        %1138 = vmatpush1.msra.mxu0 %v1105
        %1139 = vmatprep.subr.mxu0 0.0
        %1140 = vmatpush1.msra.mxu0 %v1106
        %1141 = vmatprep.subr.mxu0 0.0
        %1142 = vmatpush1.msra.mxu0 %v1107
        %1143 = vmatprep.subr.mxu0 0.0
        %1144 = vmatpush1.msra.mxu0 %v1108
        %1145 = vmatprep.subr.mxu0 0.0
        %1146 = vmatpush1.msra.mxu0 %v1109
        %1147 = vmatprep.subr.mxu0 0.0
        %1148 = vmatpush1.msra.mxu0 %v1110
        %1149 = vmatprep.subr.mxu0 0.0
        %1150 = vmatpush1.msra.mxu0 %v1111
        %1151 = vmatprep.subr.mxu0 0.0
        %1152 = vmatpush1.msra.mxu0 0.0
        %1153 = vmatprep.subr.mxu0 0.0
        %1154 = vmatpush1.msra.mxu0 0.0
        %1155 = vmatprep.subr.mxu0 0.0
        %1156 = vmatpush1.msra.mxu0 0.0
        %1157 = vmatprep.subr.mxu0 0.0
        %1158 = vmatpush1.msra.mxu0 0.0
        %1159 = vmatprep.subr.mxu0 0.0
        %1160 = vmatpush1.msra.mxu0 0.0
        %1161 = vmatprep.subr.mxu0 0.0
        %1162 = vmatpush1.msra.mxu0 0.0
        %1163 = vmatprep.subr.mxu0 0.0
        %1164 = vmatpush1.msra.mxu0 0.0
        %1165 = vmatprep.subr.mxu0 0.0
        %1166 = vmatpush1.msra.mxu0 0.0
        %1167 = vmatprep.subr.mxu0 0.0
        %1168 = vmatpush1.msra.mxu0 0.0
        %1169 = vmatprep.subr.mxu0 0.0
        %1170 = vmatpush1.msra.mxu0 0.0
        %1171 = vmatprep.subr.mxu0 0.0
        %1172 = vmatpush1.msra.mxu0 0.0
        %1173 = vmatprep.subr.mxu0 0.0
        %1174 = vmatpush1.msra.mxu0 0.0
        %1175 = vmatprep.subr.mxu0 0.0
        %1176 = vmatpush1.msra.mxu0 0.0
        %1177 = vmatprep.subr.mxu0 0.0
        %1178 = vmatpush1.msra.mxu0 0.0
        %1179 = vmatprep.subr.mxu0 0.0
        %1180 = vmatpush1.msra.mxu0 0.0
        %1181 = vmatprep.subr.mxu0 0.0
        %1182 = vmatpush1.msra.mxu0 0.0
        %1183 = vmatprep.mubr.f32.mxu0 0.0
        %1184 = vmatmul.mubr.f32.gmra.mrb[0].mxu0 %v1094
        %v1185 = vpop.f32.mrb[0].mxu0
        %v1186 = vadd.f32 %v1117, %v1185
        %v1187 = vpop.f32.mrb[0].mxu0
        %1188 = vmatprep.mubr.f32.mxu0 0.0
        %1189 = vmatmul.mubr.f32.gmra.mrb[0].mxu0 %v1095
        %v1190 = vpop.f32.mrb[0].mxu0
        %v1191 = vadd.f32 %v1117, %v1190
        %v1192 = vpop.f32.mrb[0].mxu0
        %1193 = vdwg.mxu0
        %v1194 = vld [vmem:[#allocation4] sm:$0xff]
        %v1195 = vld [vmem:[#allocation4 + $0x8] sm:$0xff]
        %v1196 = vadd.f32 %v1194, %v1186
        %v1197 = vadd.f32 %v1195, %v1191
        %v1198 = vld [vmem:[%s8] sm:$0x1]
        %v1199 = vld [vmem:[%s9] sm:$0x1]
        %vm1200 = vcmp.lt.s32.totalorder %v578, 16
        %1201 = vadd.xlane.f32.xlu0 %v1196
        %v1202 = vpop.xlane.xlu0 %1201
        %1203 = vadd.xlane.f32.xlu0 %v1197
        %v1204 = vpop.xlane.xlu0 %1203
        %v1205 = vmul.f32 %v1202, 0.0625
        %v1206 = vmul.f32 %v1204, 0.0625
        %v1207 = vsub.f32 %v1196, %v1205
        %v1208 = vsub.f32 %v1197, %v1206
        %v1209 = vsel %vm1200, %v1207, 0.0
        %v1210 = vsel %vm1200, %v1208, 0.0
        %v1211 = vmul.f32 %v1209, %v1209
        %v1212 = vmul.f32 %v1210, %v1210
        %1213 = vadd.xlane.f32.xlu0 %v1211
        %v1214 = vpop.xlane.xlu0 %1213
        %1215 = vadd.xlane.f32.xlu0 %v1212
        %v1216 = vpop.xlane.xlu0 %1215
        %v1217 = vmul.f32 %v1214, 0.0625
        %v1218 = vmul.f32 %v1216, 0.0625
        %v1219 = vadd.f32 %v1217, 1e-05
        %v1220 = vadd.f32 %v1218, 1e-05
        %v1221 = vrsqrt.pop %v1219
        %v1222 = vrsqrt.pop %v1220
        %v1223 = vmul.f32 %v1209, %v1221
        %v1224 = vmul.f32 %v1210, %v1222
        %v1226 = vlaneseq
        %v1227 = vshrl.u32 %v1226, 7
        %v1228 = vsub.s32 0, %v1227
        %v1229 = vrot.slane %v1198, %v1228
        %v1231 = vmul.f32 %v1223, %v1229
        %v1232 = vmul.f32 %v1224, %v1229
        %v1234 = vlaneseq
        %v1235 = vshrl.u32 %v1234, 7
        %v1236 = vsub.s32 0, %v1235
        %v1237 = vrot.slane %v1199, %v1236
        %v1239 = vadd.f32 %v1231, %v1237
        %v1240 = vadd.f32 %v1232, %v1237
        %v1241 = vld [vmem:[#allocation14] sm:$0xff]
        %v1242 = vld [vmem:[#allocation14 + $0x8] sm:$0xff]
        %v1243 = vld [vmem:[#allocation14 + $0x10] sm:$0xff]
        %v1244 = vld [vmem:[#allocation14 + $0x18] sm:$0xff]
        %v1245 = vld [vmem:[#allocation14 + $0x20] sm:$0xff]
        %v1246 = vld [vmem:[#allocation14 + $0x28] sm:$0xff]
        %v1247 = vld [vmem:[#allocation14 + $0x30] sm:$0xff]
        %v1248 = vld [vmem:[#allocation14 + $0x38] sm:$0xff]
        %v1249 = vld [vmem:[#allocation14 + $0x40] sm:$0xff]
        %v1250 = vld [vmem:[#allocation14 + $0x48] sm:$0xff]
        %v1251 = vld [vmem:[#allocation14 + $0x50] sm:$0xff]
        %v1252 = vld [vmem:[#allocation14 + $0x58] sm:$0xff]
        %v1253 = vld [vmem:[#allocation14 + $0x60] sm:$0xff]
        %v1254 = vld [vmem:[#allocation14 + $0x68] sm:$0xff]
        %v1255 = vld [vmem:[#allocation14 + $0x70] sm:$0xff]
        %v1256 = vld [vmem:[#allocation14 + $0x78] sm:$0xff]
        %v1257 = vld [vmem:[%s11] sm:$0x1]
        %v1259 = vlaneseq
        %v1260 = vshrl.u32 %v1259, 7
        %v1261 = vsub.s32 0, %v1260
        %v1262 = vrot.slane %v1257, %v1261
        %1264 = vmatprep.subr.mxu0 0.0
        %1265 = vmatpush1.msra.mxu0 %v1241
        %1266 = vmatprep.subr.mxu0 0.0
        %1267 = vmatpush1.msra.mxu0 %v1242
        %1268 = vmatprep.subr.mxu0 0.0
        %1269 = vmatpush1.msra.mxu0 %v1243
        %1270 = vmatprep.subr.mxu0 0.0
        %1271 = vmatpush1.msra.mxu0 %v1244
        %1272 = vmatprep.subr.mxu0 0.0
        %1273 = vmatpush1.msra.mxu0 %v1245
        %1274 = vmatprep.subr.mxu0 0.0
        %1275 = vmatpush1.msra.mxu0 %v1246
        %1276 = vmatprep.subr.mxu0 0.0
        %1277 = vmatpush1.msra.mxu0 %v1247
        %1278 = vmatprep.subr.mxu0 0.0
        %1279 = vmatpush1.msra.mxu0 %v1248
        %1280 = vmatprep.subr.mxu0 0.0
        %1281 = vmatpush1.msra.mxu0 %v1249
        %1282 = vmatprep.subr.mxu0 0.0
        %1283 = vmatpush1.msra.mxu0 %v1250
        %1284 = vmatprep.subr.mxu0 0.0
        %1285 = vmatpush1.msra.mxu0 %v1251
        %1286 = vmatprep.subr.mxu0 0.0
        %1287 = vmatpush1.msra.mxu0 %v1252
        %1288 = vmatprep.subr.mxu0 0.0
        %1289 = vmatpush1.msra.mxu0 %v1253
        %1290 = vmatprep.subr.mxu0 0.0
        %1291 = vmatpush1.msra.mxu0 %v1254
        %1292 = vmatprep.subr.mxu0 0.0
        %1293 = vmatpush1.msra.mxu0 %v1255
        %1294 = vmatprep.subr.mxu0 0.0
        %1295 = vmatpush1.msra.mxu0 %v1256
        %1296 = vmatprep.subr.mxu0 0.0
        %1297 = vmatpush1.msra.mxu0 0.0
        %1298 = vmatprep.subr.mxu0 0.0
        %1299 = vmatpush1.msra.mxu0 0.0
        %1300 = vmatprep.subr.mxu0 0.0
        %1301 = vmatpush1.msra.mxu0 0.0
        %1302 = vmatprep.subr.mxu0 0.0
        %1303 = vmatpush1.msra.mxu0 0.0
        %1304 = vmatprep.subr.mxu0 0.0
        %1305 = vmatpush1.msra.mxu0 0.0
        %1306 = vmatprep.subr.mxu0 0.0
        %1307 = vmatpush1.msra.mxu0 0.0
        %1308 = vmatprep.subr.mxu0 0.0
        %1309 = vmatpush1.msra.mxu0 0.0
        %1310 = vmatprep.subr.mxu0 0.0
        %1311 = vmatpush1.msra.mxu0 0.0
        %1312 = vmatprep.subr.mxu0 0.0
        %1313 = vmatpush1.msra.mxu0 0.0
        %1314 = vmatprep.subr.mxu0 0.0
        %1315 = vmatpush1.msra.mxu0 0.0
        %1316 = vmatprep.subr.mxu0 0.0
        %1317 = vmatpush1.msra.mxu0 0.0
        %1318 = vmatprep.subr.mxu0 0.0
        %1319 = vmatpush1.msra.mxu0 0.0
        %1320 = vmatprep.subr.mxu0 0.0
        %1321 = vmatpush1.msra.mxu0 0.0
        %1322 = vmatprep.subr.mxu0 0.0
        %1323 = vmatpush1.msra.mxu0 0.0
        %1324 = vmatprep.subr.mxu0 0.0
        %1325 = vmatpush1.msra.mxu0 0.0
        %1326 = vmatprep.subr.mxu0 0.0
        %1327 = vmatpush1.msra.mxu0 0.0
        %1328 = vmatprep.mubr.f32.mxu0 0.0
        %1329 = vmatmul.mubr.f32.gmra.mrb[0].mxu0 %v1239
        %v1330 = vpop.f32.mrb[0].mxu0
        %v1331 = vadd.f32 %v1262, %v1330
        %v1332 = vpop.f32.mrb[0].mxu0
        %1333 = vmatprep.mubr.f32.mxu0 0.0
        %1334 = vmatmul.mubr.f32.gmra.mrb[0].mxu0 %v1240
        %v1335 = vpop.f32.mrb[0].mxu0
        %v1336 = vadd.f32 %v1262, %v1335
        %v1337 = vpop.f32.mrb[0].mxu0
        %1338 = vdwg.mxu0
        %v1339 = vmul.f32 %v1331, 0.5
        %v1340 = vmul.f32 %v1336, 0.5
        %v1341 = vmul.f32 %v1331, 0.70710677
        %v1342 = vmul.f32 %v1336, 0.70710677
        %v1343 = verf.f32.pop %v1341
        %v1344 = verf.f32.pop %v1342
        %v1345 = vadd.f32 %v1343, 1.0
        %v1346 = vadd.f32 %v1344, 1.0
        %v1347 = vmul.f32 %v1339, %v1345
        %v1348 = vmul.f32 %v1340, %v1346
        %v1349 = vld [vmem:[#allocation16] sm:$0xff]
        %v1350 = vld [vmem:[#allocation16 + $0x8] sm:$0xff]
        %v1351 = vld [vmem:[#allocation16 + $0x10] sm:$0xff]
        %v1352 = vld [vmem:[#allocation16 + $0x18] sm:$0xff]
        %v1353 = vld [vmem:[#allocation16 + $0x20] sm:$0xff]
        %v1354 = vld [vmem:[#allocation16 + $0x28] sm:$0xff]
        %v1355 = vld [vmem:[#allocation16 + $0x30] sm:$0xff]
        %v1356 = vld [vmem:[#allocation16 + $0x38] sm:$0xff]
        %v1357 = vld [vmem:[#allocation16 + $0x40] sm:$0xff]
        %v1358 = vld [vmem:[#allocation16 + $0x48] sm:$0xff]
        %v1359 = vld [vmem:[#allocation16 + $0x50] sm:$0xff]
        %v1360 = vld [vmem:[#allocation16 + $0x58] sm:$0xff]
        %v1361 = vld [vmem:[#allocation16 + $0x60] sm:$0xff]
        %v1362 = vld [vmem:[#allocation16 + $0x68] sm:$0xff]
        %v1363 = vld [vmem:[#allocation16 + $0x70] sm:$0xff]
        %v1364 = vld [vmem:[#allocation16 + $0x78] sm:$0xff]
        %v1365 = vld [vmem:[%s13] sm:$0x1]
        %v1367 = vlaneseq
        %v1368 = vshrl.u32 %v1367, 7
        %v1369 = vsub.s32 0, %v1368
        %v1370 = vrot.slane %v1365, %v1369
        %1372 = vmatprep.subr.mxu0 0.0
        %1373 = vmatpush1.msra.mxu0 %v1349
        %1374 = vmatprep.subr.mxu0 0.0
        %1375 = vmatpush1.msra.mxu0 %v1350
        %1376 = vmatprep.subr.mxu0 0.0
        %1377 = vmatpush1.msra.mxu0 %v1351
        %1378 = vmatprep.subr.mxu0 0.0
        %1379 = vmatpush1.msra.mxu0 %v1352
        %1380 = vmatprep.subr.mxu0 0.0
        %1381 = vmatpush1.msra.mxu0 %v1353
        %1382 = vmatprep.subr.mxu0 0.0
        %1383 = vmatpush1.msra.mxu0 %v1354
        %1384 = vmatprep.subr.mxu0 0.0
        %1385 = vmatpush1.msra.mxu0 %v1355
        %1386 = vmatprep.subr.mxu0 0.0
        %1387 = vmatpush1.msra.mxu0 %v1356
        %1388 = vmatprep.subr.mxu0 0.0
        %1389 = vmatpush1.msra.mxu0 %v1357
        %1390 = vmatprep.subr.mxu0 0.0
        %1391 = vmatpush1.msra.mxu0 %v1358
        %1392 = vmatprep.subr.mxu0 0.0
        %1393 = vmatpush1.msra.mxu0 %v1359
        %1394 = vmatprep.subr.mxu0 0.0
        %1395 = vmatpush1.msra.mxu0 %v1360
        %1396 = vmatprep.subr.mxu0 0.0
        %1397 = vmatpush1.msra.mxu0 %v1361
        %1398 = vmatprep.subr.mxu0 0.0
        %1399 = vmatpush1.msra.mxu0 %v1362
        %1400 = vmatprep.subr.mxu0 0.0
        %1401 = vmatpush1.msra.mxu0 %v1363
        %1402 = vmatprep.subr.mxu0 0.0
        %1403 = vmatpush1.msra.mxu0 %v1364
        %1404 = vmatprep.subr.mxu0 0.0
        %1405 = vmatpush1.msra.mxu0 0.0
        %1406 = vmatprep.subr.mxu0 0.0
        %1407 = vmatpush1.msra.mxu0 0.0
        %1408 = vmatprep.subr.mxu0 0.0
        %1409 = vmatpush1.msra.mxu0 0.0
        %1410 = vmatprep.subr.mxu0 0.0
        %1411 = vmatpush1.msra.mxu0 0.0
        %1412 = vmatprep.subr.mxu0 0.0
        %1413 = vmatpush1.msra.mxu0 0.0
        %1414 = vmatprep.subr.mxu0 0.0
        %1415 = vmatpush1.msra.mxu0 0.0
        %1416 = vmatprep.subr.mxu0 0.0
        %1417 = vmatpush1.msra.mxu0 0.0
        %1418 = vmatprep.subr.mxu0 0.0
        %1419 = vmatpush1.msra.mxu0 0.0
        %1420 = vmatprep.subr.mxu0 0.0
        %1421 = vmatpush1.msra.mxu0 0.0
        %1422 = vmatprep.subr.mxu0 0.0
        %1423 = vmatpush1.msra.mxu0 0.0
        %1424 = vmatprep.subr.mxu0 0.0
        %1425 = vmatpush1.msra.mxu0 0.0
        %1426 = vmatprep.subr.mxu0 0.0
        %1427 = vmatpush1.msra.mxu0 0.0
        %1428 = vmatprep.subr.mxu0 0.0
        %1429 = vmatpush1.msra.mxu0 0.0
        %1430 = vmatprep.subr.mxu0 0.0
        %1431 = vmatpush1.msra.mxu0 0.0
        %1432 = vmatprep.subr.mxu0 0.0
        %1433 = vmatpush1.msra.mxu0 0.0
        %1434 = vmatprep.subr.mxu0 0.0
        %1435 = vmatpush1.msra.mxu0 0.0
        %1436 = vmatprep.mubr.f32.mxu0 0.0
        %1437 = vmatmul.mubr.f32.gmra.mrb[0].mxu0 %v1347
        %v1438 = vpop.f32.mrb[0].mxu0
        %v1439 = vadd.f32 %v1370, %v1438
        %v1440 = vpop.f32.mrb[0].mxu0
        %1441 = vmatprep.mubr.f32.mxu0 0.0
        %1442 = vmatmul.mubr.f32.gmra.mrb[0].mxu0 %v1348
        %v1443 = vpop.f32.mrb[0].mxu0
        %v1444 = vadd.f32 %v1370, %v1443
        %v1445 = vpop.f32.mrb[0].mxu0
        %1446 = vdwg.mxu0
        %v1447 = vadd.f32 %v1196, %v1439
        %v1448 = vadd.f32 %v1197, %v1444
        %1449 = vst [vmem:[%s572] sm:$0xff] %v1447
        %1450 = vst [vmem:[%s572 + $0x8] sm:$0xff] %v1448
        %s1451 = sand.u32 %s341, 1
        %s1452 = scalar_lea.sflag [#allocation7], %s1451
        %s1453 = sand.u32 %s341, 1
        %s1454 = smul.addr %s1453, 16
        %s1455 = scalar_lea.vmem [#allocation17], %s1454
        // Predicated region
        $region105: #{tpu_custom_call.1} parent=75 // pred_check
          %p1456 = pneg %p351
        $region106: #{tpu_custom_call.1} parent=75 // pred_check_branch
          %1458 = sbr.rel (%p1456) target = $region108
        $region107: #{tpu_custom_call.1} parent=75 // pred_region
          %s1460 = ssub.s32 256, 256
          %1461 = vsyncadd %s1452, %s1460
          %s1462 = smul.addr %s34, 2
          %s1463 = smul.addr %s1462, 128
          %s1464 = scalar_lea.hbm %s14, %s1463
          %s1465 = sshll.u32 %s1455, 4
          %s1466 = int_to_ptr.vmem [resolvable:$true] %s1465
          %1471 = dma.vmem_to_hbm [thread:$0]  %s1466, 256, %s1464, %s1452, 128, 128, 8
        $region108: #{tpu_custom_call.1} parent=75 // pred_fallthru
          _
      $region76: #{tpu_custom_call.1} parent=5 // pred_fallthru
        _
      %p1472 = scmp.le.s32.totalorder 2, %s29
      // Predicated region
      $region109: #{tpu_custom_call.1} parent=5 // pred_check
        %p1473 = pneg %p1472
      $region110: #{tpu_custom_call.1} parent=5 // pred_check_branch
        %1475 = sbr.rel (%p1473) target = $region112
      $region111: #{tpu_custom_call.1} parent=5 // pred_region
        %s1476 = ssub.s32 %s29, 2
        // Predicated region
        $region113: #{tpu_custom_call.1} parent=111 // pred_check
          %p1477 = pneg %p357
        $region114: #{tpu_custom_call.1} parent=111 // pred_check_branch
          %1479 = sbr.rel (%p1477) target = $region116
        $region115: #{tpu_custom_call.1} parent=111 // pred_region
          %s1480 = sand.u32 %s342, 1
          %s1481 = scalar_lea.sflag [#allocation7], %s1480
          %s1482 = sand.u32 %s342, 1
          %s1483 = smul.addr %s1482, 16
          %s1484 = scalar_lea.vmem [#allocation17], %s1483
          %1485 = dma.done %s1481, 256
        $region116: #{tpu_custom_call.1} parent=111 // pred_fallthru
          _
      $region112: #{tpu_custom_call.1} parent=5 // pred_fallthru
        _
    $region6: #{tpu_custom_call.1} parent=1 // loop_footer
      %s33 = sadd.s32 1, %s29
    $region7: #{tpu_custom_call.1} parent=1 // loop_footer_branch
      %28 = sbr.rel target = $region3
    $region8: #{tpu_custom_call.1} parent=1 // loop_exit
      _
    %1486 = vsyncpa [#allocation6], 1
    %s1487 = scalar_lea.sflag [#allocation6], 1
    %1488 = vsyncpa %s1487, 1
    %1489 = vsyncpa [#allocation9], 1
    %1490 = vsyncpa [#allocation12], 1
    %1491 = vsyncpa [#allocation15], 1
    %1492 = vsyncpa [#allocation7], 1
    %s1493 = scalar_lea.sflag [#allocation7], 1
    %1494 = vsyncpa %s1493, 1

// kernel: tpu_custom_call.1
$region0: #{tpu_custom_call.1}
  #allocation0 [shape = 'u32[]', space=smem, size = 0x4, offset = 0x4, fixed_abs, tag = 'smem constant byte address 0x4 - core index']
  #allocation1 [shape = 'u32[144,128]{1,0:T(1,128)}', space=vmem, size = 0x12000, scoped, tag = 'internal scratch']
  #allocation2 [shape = 'f32[1,16,128]{2,1,0:T(8,128)}', space=vmem, size = 0x2000, scoped, tag = 'scratch operand']
  #allocation3 [shape = 'f32[1,16,128]{2,1,0:T(8,128)}', space=vmem, size = 0x2000, scoped, tag = 'scratch operand']
  #allocation4 [shape = 'f32[1,16,128]{2,1,0:T(8,128)}', space=vmem, size = 0x2000, scoped, tag = 'scratch operand']
  %s0 = inlined_call_operand.hbm [shape: f32[2,16,128], index: 0, kind: input, shape index: {}]
  %s1 = inlined_call_operand.vmem [shape: f32[1,128], index: 1, kind: input, shape index: {}]
  %s2 = inlined_call_operand.vmem [shape: f32[1,128], index: 2, kind: input, shape index: {}]
  %s3 = inlined_call_operand.hbm [shape: f32[128,128], index: 3, kind: input, shape index: {}]
  %s4 = inlined_call_operand.hbm [shape: f32[128,128], index: 4, kind: input, shape index: {}]
  %s5 = inlined_call_operand.hbm [shape: f32[128,128], index: 5, kind: input, shape index: {}]
  %s6 = inlined_call_operand.hbm [shape: f32[128,128], index: 6, kind: input, shape index: {}]
  %s7 = inlined_call_operand.vmem [shape: f32[1,128], index: 7, kind: input, shape index: {}]
  %s8 = inlined_call_operand.vmem [shape: f32[1,128], index: 8, kind: input, shape index: {}]
  %s9 = inlined_call_operand.vmem [shape: f32[1,128], index: 9, kind: input, shape index: {}]
  %s10 = inlined_call_operand.hbm [shape: f32[128,128], index: 10, kind: input, shape index: {}]
  %s11 = inlined_call_operand.vmem [shape: f32[1,128], index: 11, kind: input, shape index: {}]
  %s12 = inlined_call_operand.hbm [shape: f32[128,128], index: 12, kind: input, shape index: {}]
  %s13 = inlined_call_operand.vmem [shape: f32[1,128], index: 13, kind: input, shape index: {}]
  %s14 = inlined_call_operand.hbm [shape: f32[2,16,128], index: 14, kind: output, shape index: {}]
  %s15 = sld [smem:[#allocation0]]
  $region117: #{tpu_custom_call.1} parent=0
    _
  %s17 = ssub.s32 1, %s15
  %s18 = scalar_select 0, %s17, %s15
  $region1: #{tpu_custom_call.1} parent=0
    #allocation5 [shape = 'u8[16384]{0}', space=vmem, size = 0x4000, scoped, tag = 'input window, operand 0']
    #allocation6 [shape = 's32[2]{0}', space=sflag, size = 0x8, scoped, tag = 'scoped memory for tpu_custom_call.1']
    #allocation7 [shape = 's32[2]{0}', space=sflag, size = 0x8, scoped, tag = 'scoped memory for tpu_custom_call.1']
    #allocation8 [shape = 'u8[65536]{0}', space=vmem, size = 0x10000, scoped, tag = 'input window, operand 3, single buffered']
    #allocation9 [shape = 's32[1]{0}', space=sflag, size = 0x4, scoped, tag = 'scoped memory for tpu_custom_call.1']
    #allocation10 [shape = 'u8[65536]{0}', space=vmem, size = 0x10000, scoped, tag = 'input window, operand 4, single buffered']
    #allocation11 [shape = 'u8[65536]{0}', space=vmem, size = 0x10000, scoped, tag = 'input window, operand 5, single buffered']
    #allocation12 [shape = 's32[1]{0}', space=sflag, size = 0x4, scoped, tag = 'scoped memory for tpu_custom_call.1']
    #allocation13 [shape = 'u8[65536]{0}', space=vmem, size = 0x10000, scoped, tag = 'input window, operand 6, single buffered']
    #allocation14 [shape = 'u8[65536]{0}', space=vmem, size = 0x10000, scoped, tag = 'input window, operand 10, single buffered']
    #allocation15 [shape = 's32[1]{0}', space=sflag, size = 0x4, scoped, tag = 'scoped memory for tpu_custom_call.1']
    #allocation16 [shape = 'u8[65536]{0}', space=vmem, size = 0x10000, scoped, tag = 'input window, operand 12, single buffered']
    #allocation17 [shape = 'u8[16384]{0}', space=vmem, size = 0x4000, scoped, tag = 'output window, operand 0']
    %19 = vsyncpa [#allocation6], 0
    %s20 = scalar_lea.sflag [#allocation6], 1
    %21 = vsyncpa %s20, 0
    %22 = vsyncpa [#allocation9], 0
    %23 = vsyncpa [#allocation12], 0
    %24 = vsyncpa [#allocation15], 0
    %25 = vsyncpa [#allocation7], 0
    %s26 = scalar_lea.sflag [#allocation7], 1
    %27 = vsyncpa %s26, 0
    loop: start=0, step=1, limit=4
    $region2: #{tpu_custom_call.1} parent=1 // loop_pre_header
      _
    $region3: #{tpu_custom_call.1} parent=1 // loop_header
      %s29 = sphi 0, %s33
      %p30 = scmp.ge.s32.totalorder %s29, 4
      %s39 = sphi 0, %s41
      %s42 = sphi 0, %s39
      %s43 = sphi 0, %s42
      %s59 = sphi 0, %s43
      %s63 = sphi 0, %s63
      %s65 = sphi 0, %s63
      %s66 = sphi 0, %s65
      %s80 = sphi 0, %s66
      %s84 = sphi 0, %s84
      %s86 = sphi 0, %s84
      %s87 = sphi 0, %s86
      %s101 = sphi 0, %s87
      %s105 = sphi 0, %s105
      %s107 = sphi 0, %s105
      %s108 = sphi 0, %s107
      %s122 = sphi 0, %s108
      %s126 = sphi 0, %s126
      %s128 = sphi 0, %s126
      %s129 = sphi 0, %s128
      %s143 = sphi 0, %s129
      %s147 = sphi 0, %s147
      %s149 = sphi 0, %s147
      %s150 = sphi 0, %s149
      %s164 = sphi 0, %s150
      %s168 = sphi 0, %s168
      %s170 = sphi 0, %s168
      %s171 = sphi 0, %s170
      %s185 = sphi 0, %s171
      %s189 = sphi 0, %s189
      %s191 = sphi 0, %s189
      %s192 = sphi 0, %s191
      %s206 = sphi 0, %s192
      %s210 = sphi 0, %s210
      %s212 = sphi 0, %s210
      %s213 = sphi 0, %s212
      %s227 = sphi 0, %s213
      %s231 = sphi 0, %s231
      %s233 = sphi 0, %s231
      %s234 = sphi 0, %s233
      %s248 = sphi 0, %s234
      %s252 = sphi 0, %s252
      %s254 = sphi 0, %s252
      %s255 = sphi 0, %s254
      %s269 = sphi 0, %s255
      %s273 = sphi 0, %s273
      %s275 = sphi 0, %s273
      %s276 = sphi 0, %s275
      %s290 = sphi 0, %s276
      %s294 = sphi 0, %s294
      %s296 = sphi 0, %s294
      %s297 = sphi 0, %s296
      %s311 = sphi 0, %s297
      %s315 = sphi 0, %s315
      %s317 = sphi 0, %s315
      %s318 = sphi 0, %s317
      %s332 = sphi 0, %s318
      %s338 = sphi 0, %s340
      %s341 = sphi 0, %s338
      %s342 = sphi 0, %s341
      %s358 = sphi 0, %s342
    $region4: #{tpu_custom_call.1} parent=1 // loop_header_branch
      %32 = sbr.rel (%p30) target = $region8
    $region5: #{tpu_custom_call.1} parent=1 // loop_body
      %s34 = ssub.s32 %s29, 1
      %s35 = ssub.s32 %s29, 2
      %s36 = sadd.s32 %s29, 1
      %s37 = ssub.s32 %s29, %s36
      %p38 = scmp.eq.s32.totalorder %s37, 0
      %s40 = sadd.s32 %s39, 1
      %s41 = scalar_select %p38, %s39, %s40
      %p44 = pneg %p38
      %p45 = scmp.eq.s32.totalorder %s29, 1
      %p46 = por %p44, %p45
      %p47 = scmp.ne.s32.totalorder %s39, %s42
      %p48 = scmp.eq.s32.totalorder %s29, 0
      %p49 = por %p47, %p48
      %p50 = scmp.ne.s32.totalorder %s39, %s42
      %p51 = scmp.eq.s32.totalorder %s34, 1
      %p52 = por %p50, %p51
      %p53 = scmp.ne.s32.totalorder %s42, %s43
      %p54 = scmp.eq.s32.totalorder %s34, 0
      %p55 = por %p53, %p54
      %p56 = scmp.ne.s32.totalorder %s42, %s43
      %p57 = scmp.eq.s32.totalorder %s35, 1
      %p58 = por %p56, %p57
      %p60 = scmp.ne.s32.totalorder %s43, %s59
      %p61 = scmp.eq.s32.totalorder %s35, 0
      %p62 = por %p60, %p61
      %s64 = sadd.s32 %s63, 1
      %p67 = scmp.eq.s32.totalorder %s29, 1
      %p68 = scmp.ne.s32.totalorder %s63, %s65
      %p69 = scmp.eq.s32.totalorder %s29, 0
      %p70 = por %p68, %p69
      %p71 = scmp.ne.s32.totalorder %s63, %s65
      %p72 = scmp.eq.s32.totalorder %s34, 1
      %p73 = por %p71, %p72
      %p74 = scmp.ne.s32.totalorder %s65, %s66
      %p75 = scmp.eq.s32.totalorder %s34, 0
      %p76 = por %p74, %p75
      %p77 = scmp.ne.s32.totalorder %s65, %s66
      %p78 = scmp.eq.s32.totalorder %s35, 1
      %p79 = por %p77, %p78
      %p81 = scmp.ne.s32.totalorder %s66, %s80
      %p82 = scmp.eq.s32.totalorder %s35, 0
      %p83 = por %p81, %p82
      %s85 = sadd.s32 %s84, 1
      %p88 = scmp.eq.s32.totalorder %s29, 1
      %p89 = scmp.ne.s32.totalorder %s84, %s86
      %p90 = scmp.eq.s32.totalorder %s29, 0
      %p91 = por %p89, %p90
      %p92 = scmp.ne.s32.totalorder %s84, %s86
      %p93 = scmp.eq.s32.totalorder %s34, 1
      %p94 = por %p92, %p93
      %p95 = scmp.ne.s32.totalorder %s86, %s87
      %p96 = scmp.eq.s32.totalorder %s34, 0
      %p97 = por %p95, %p96
      %p98 = scmp.ne.s32.totalorder %s86, %s87
      %p99 = scmp.eq.s32.totalorder %s35, 1
      %p100 = por %p98, %p99
      %p102 = scmp.ne.s32.totalorder %s87, %s101
      %p103 = scmp.eq.s32.totalorder %s35, 0
      %p104 = por %p102, %p103
      %s106 = sadd.s32 %s105, 1
      %p109 = scmp.eq.s32.totalorder %s29, 1
      %p110 = scmp.ne.s32.totalorder %s105, %s107
      %p111 = scmp.eq.s32.totalorder %s29, 0
      %p112 = por %p110, %p111
      %p113 = scmp.ne.s32.totalorder %s105, %s107
      %p114 = scmp.eq.s32.totalorder %s34, 1
      %p115 = por %p113, %p114
      %p116 = scmp.ne.s32.totalorder %s107, %s108
      %p117 = scmp.eq.s32.totalorder %s34, 0
      %p118 = por %p116, %p117
      %p119 = scmp.ne.s32.totalorder %s107, %s108
      %p120 = scmp.eq.s32.totalorder %s35, 1
      %p121 = por %p119, %p120
      %p123 = scmp.ne.s32.totalorder %s108, %s122
      %p124 = scmp.eq.s32.totalorder %s35, 0
      %p125 = por %p123, %p124
      %s127 = sadd.s32 %s126, 1
      %p130 = scmp.eq.s32.totalorder %s29, 1
      %p131 = scmp.ne.s32.totalorder %s126, %s128
      %p132 = scmp.eq.s32.totalorder %s29, 0
      %p133 = por %p131, %p132
      %p134 = scmp.ne.s32.totalorder %s126, %s128
      %p135 = scmp.eq.s32.totalorder %s34, 1
      %p136 = por %p134, %p135
      %p137 = scmp.ne.s32.totalorder %s128, %s129
      %p138 = scmp.eq.s32.totalorder %s34, 0
      %p139 = por %p137, %p138
      %p140 = scmp.ne.s32.totalorder %s128, %s129
      %p141 = scmp.eq.s32.totalorder %s35, 1
      %p142 = por %p140, %p141
      %p144 = scmp.ne.s32.totalorder %s129, %s143
      %p145 = scmp.eq.s32.totalorder %s35, 0
      %p146 = por %p144, %p145
      %s148 = sadd.s32 %s147, 1
      %p151 = scmp.eq.s32.totalorder %s29, 1
      %p152 = scmp.ne.s32.totalorder %s147, %s149
      %p153 = scmp.eq.s32.totalorder %s29, 0
      %p154 = por %p152, %p153
      %p155 = scmp.ne.s32.totalorder %s147, %s149
      %p156 = scmp.eq.s32.totalorder %s34, 1
      %p157 = por %p155, %p156
      %p158 = scmp.ne.s32.totalorder %s149, %s150
      %p159 = scmp.eq.s32.totalorder %s34, 0
      %p160 = por %p158, %p159
      %p161 = scmp.ne.s32.totalorder %s149, %s150
      %p162 = scmp.eq.s32.totalorder %s35, 1
      %p163 = por %p161, %p162
      %p165 = scmp.ne.s32.totalorder %s150, %s164
      %p166 = scmp.eq.s32.totalorder %s35, 0
      %p167 = por %p165, %p166
      %s169 = sadd.s32 %s168, 1
      %p172 = scmp.eq.s32.totalorder %s29, 1
      %p173 = scmp.ne.s32.totalorder %s168, %s170
      %p174 = scmp.eq.s32.totalorder %s29, 0
      %p175 = por %p173, %p174
      %p176 = scmp.ne.s32.totalorder %s168, %s170
      %p177 = scmp.eq.s32.totalorder %s34, 1
      %p178 = por %p176, %p177
      %p179 = scmp.ne.s32.totalorder %s170, %s171
      %p180 = scmp.eq.s32.totalorder %s34, 0
      %p181 = por %p179, %p180
      %p182 = scmp.ne.s32.totalorder %s170, %s171
      %p183 = scmp.eq.s32.totalorder %s35, 1
      %p184 = por %p182, %p183
      %p186 = scmp.ne.s32.totalorder %s171, %s185
      %p187 = scmp.eq.s32.totalorder %s35, 0
      %p188 = por %p186, %p187
      %s190 = sadd.s32 %s189, 1
      %p193 = scmp.eq.s32.totalorder %s29, 1
      %p194 = scmp.ne.s32.totalorder %s189, %s191
      %p195 = scmp.eq.s32.totalorder %s29, 0
      %p196 = por %p194, %p195
      %p197 = scmp.ne.s32.totalorder %s189, %s191
      %p198 = scmp.eq.s32.totalorder %s34, 1
      %p199 = por %p197, %p198
      %p200 = scmp.ne.s32.totalorder %s191, %s192
      %p201 = scmp.eq.s32.totalorder %s34, 0
      %p202 = por %p200, %p201
      %p203 = scmp.ne.s32.totalorder %s191, %s192
      %p204 = scmp.eq.s32.totalorder %s35, 1
      %p205 = por %p203, %p204
      %p207 = scmp.ne.s32.totalorder %s192, %s206
      %p208 = scmp.eq.s32.totalorder %s35, 0
      %p209 = por %p207, %p208
      %s211 = sadd.s32 %s210, 1
      %p214 = scmp.eq.s32.totalorder %s29, 1
      %p215 = scmp.ne.s32.totalorder %s210, %s212
      %p216 = scmp.eq.s32.totalorder %s29, 0
      %p217 = por %p215, %p216
      %p218 = scmp.ne.s32.totalorder %s210, %s212
      %p219 = scmp.eq.s32.totalorder %s34, 1
      %p220 = por %p218, %p219
      %p221 = scmp.ne.s32.totalorder %s212, %s213
      %p222 = scmp.eq.s32.totalorder %s34, 0
      %p223 = por %p221, %p222
      %p224 = scmp.ne.s32.totalorder %s212, %s213
      %p225 = scmp.eq.s32.totalorder %s35, 1
      %p226 = por %p224, %p225
      %p228 = scmp.ne.s32.totalorder %s213, %s227
      %p229 = scmp.eq.s32.totalorder %s35, 0
      %p230 = por %p228, %p229
      %s232 = sadd.s32 %s231, 1
      %p235 = scmp.eq.s32.totalorder %s29, 1
      %p236 = scmp.ne.s32.totalorder %s231, %s233
      %p237 = scmp.eq.s32.totalorder %s29, 0
      %p238 = por %p236, %p237
      %p239 = scmp.ne.s32.totalorder %s231, %s233
      %p240 = scmp.eq.s32.totalorder %s34, 1
      %p241 = por %p239, %p240
      %p242 = scmp.ne.s32.totalorder %s233, %s234
      %p243 = scmp.eq.s32.totalorder %s34, 0
      %p244 = por %p242, %p243
      %p245 = scmp.ne.s32.totalorder %s233, %s234
      %p246 = scmp.eq.s32.totalorder %s35, 1
      %p247 = por %p245, %p246
      %p249 = scmp.ne.s32.totalorder %s234, %s248
      %p250 = scmp.eq.s32.totalorder %s35, 0
      %p251 = por %p249, %p250
      %s253 = sadd.s32 %s252, 1
      %p256 = scmp.eq.s32.totalorder %s29, 1
      %p257 = scmp.ne.s32.totalorder %s252, %s254
      %p258 = scmp.eq.s32.totalorder %s29, 0
      %p259 = por %p257, %p258
      %p260 = scmp.ne.s32.totalorder %s252, %s254
      %p261 = scmp.eq.s32.totalorder %s34, 1
      %p262 = por %p260, %p261
      %p263 = scmp.ne.s32.totalorder %s254, %s255
      %p264 = scmp.eq.s32.totalorder %s34, 0
      %p265 = por %p263, %p264
      %p266 = scmp.ne.s32.totalorder %s254, %s255
      %p267 = scmp.eq.s32.totalorder %s35, 1
      %p268 = por %p266, %p267
      %p270 = scmp.ne.s32.totalorder %s255, %s269
      %p271 = scmp.eq.s32.totalorder %s35, 0
      %p272 = por %p270, %p271
      %s274 = sadd.s32 %s273, 1
      %p277 = scmp.eq.s32.totalorder %s29, 1
      %p278 = scmp.ne.s32.totalorder %s273, %s275
      %p279 = scmp.eq.s32.totalorder %s29, 0
      %p280 = por %p278, %p279
      %p281 = scmp.ne.s32.totalorder %s273, %s275
      %p282 = scmp.eq.s32.totalorder %s34, 1
      %p283 = por %p281, %p282
      %p284 = scmp.ne.s32.totalorder %s275, %s276
      %p285 = scmp.eq.s32.totalorder %s34, 0
      %p286 = por %p284, %p285
      %p287 = scmp.ne.s32.totalorder %s275, %s276
      %p288 = scmp.eq.s32.totalorder %s35, 1
      %p289 = por %p287, %p288
      %p291 = scmp.ne.s32.totalorder %s276, %s290
      %p292 = scmp.eq.s32.totalorder %s35, 0
      %p293 = por %p291, %p292
      %s295 = sadd.s32 %s294, 1
      %p298 = scmp.eq.s32.totalorder %s29, 1
      %p299 = scmp.ne.s32.totalorder %s294, %s296
      %p300 = scmp.eq.s32.totalorder %s29, 0
      %p301 = por %p299, %p300
      %p302 = scmp.ne.s32.totalorder %s294, %s296
      %p303 = scmp.eq.s32.totalorder %s34, 1
      %p304 = por %p302, %p303
      %p305 = scmp.ne.s32.totalorder %s296, %s297
      %p306 = scmp.eq.s32.totalorder %s34, 0
      %p307 = por %p305, %p306
      %p308 = scmp.ne.s32.totalorder %s296, %s297
      %p309 = scmp.eq.s32.totalorder %s35, 1
      %p310 = por %p308, %p309
      %p312 = scmp.ne.s32.totalorder %s297, %s311
      %p313 = scmp.eq.s32.totalorder %s35, 0
      %p314 = por %p312, %p313
      %s316 = sadd.s32 %s315, 1
      %p319 = scmp.eq.s32.totalorder %s29, 1
      %p320 = scmp.ne.s32.totalorder %s315, %s317
      %p321 = scmp.eq.s32.totalorder %s29, 0
      %p322 = por %p320, %p321
      %p323 = scmp.ne.s32.totalorder %s315, %s317
      %p324 = scmp.eq.s32.totalorder %s34, 1
      %p325 = por %p323, %p324
      %p326 = scmp.ne.s32.totalorder %s317, %s318
      %p327 = scmp.eq.s32.totalorder %s34, 0
      %p328 = por %p326, %p327
      %p329 = scmp.ne.s32.totalorder %s317, %s318
      %p330 = scmp.eq.s32.totalorder %s35, 1
      %p331 = por %p329, %p330
      %p333 = scmp.ne.s32.totalorder %s318, %s332
      %p334 = scmp.eq.s32.totalorder %s35, 0
      %p335 = por %p333, %p334
      %s336 = ssub.s32 %s29, %s36
      %p337 = scmp.eq.s32.totalorder %s336, 0
      %s339 = sadd.s32 %s338, 1
      %s340 = scalar_select %p337, %s338, %s339
      %p343 = pneg %p337
      %p344 = scmp.eq.s32.totalorder %s29, 1
      %p345 = por %p343, %p344
      %p346 = scmp.ne.s32.totalorder %s338, %s341
      %p347 = scmp.eq.s32.totalorder %s29, 0
      %p348 = por %p346, %p347
      %p349 = scmp.ne.s32.totalorder %s338, %s341
      %p350 = scmp.eq.s32.totalorder %s34, 1
      %p351 = por %p349, %p350
      %p352 = scmp.ne.s32.totalorder %s341, %s342
      %p353 = scmp.eq.s32.totalorder %s34, 0
      %p354 = por %p352, %p353
      %p355 = scmp.ne.s32.totalorder %s341, %s342
      %p356 = scmp.eq.s32.totalorder %s35, 1
      %p357 = por %p355, %p356
      %p359 = scmp.ne.s32.totalorder %s342, %s358
      %p360 = scmp.eq.s32.totalorder %s35, 0
      %p361 = por %p359, %p360
      %p362 = scmp.le.s32.totalorder 1, %s29
      %p363 = scmp.lt.s32.totalorder %s29, 3
      %p364 = pnand %p362, %p363
      %p365 = pneg %p364
      // Predicated region
      $region9: #{tpu_custom_call.1} parent=5 // pred_check
        _
      $region10: #{tpu_custom_call.1} parent=5 // pred_check_branch
        %367 = sbr.rel (%p364) target = $region12
      $region11: #{tpu_custom_call.1} parent=5 // pred_region
        %s368 = ssub.s32 %s29, 1
        // Predicated region
        $region13: #{tpu_custom_call.1} parent=11 // pred_check
          %p369 = pneg %p76
        $region14: #{tpu_custom_call.1} parent=11 // pred_check_branch
          %371 = sbr.rel (%p369) target = $region16
        $region15: #{tpu_custom_call.1} parent=11 // pred_region
          _
        $region16: #{tpu_custom_call.1} parent=11 // pred_fallthru
          _
        // Predicated region
        $region17: #{tpu_custom_call.1} parent=11 // pred_check
          %p372 = pneg %p97
        $region18: #{tpu_custom_call.1} parent=11 // pred_check_branch
          %374 = sbr.rel (%p372) target = $region20
        $region19: #{tpu_custom_call.1} parent=11 // pred_region
          _
        $region20: #{tpu_custom_call.1} parent=11 // pred_fallthru
          _
        // Predicated region
        $region21: #{tpu_custom_call.1} parent=11 // pred_check
          %p375 = pneg %p118
        $region22: #{tpu_custom_call.1} parent=11 // pred_check_branch
          %377 = sbr.rel (%p375) target = $region24
        $region23: #{tpu_custom_call.1} parent=11 // pred_region
          %s379 = ssub.s32 2048, 2048
          %380 = vsyncadd [#allocation9], %s379
          %s381 = sshll.u32 [#allocation8], 4
          %s382 = int_to_ptr.vmem [resolvable:$true] %s381
          %387 = dma.hbm_to_vmem [thread:$0]  %s3, 2048, %s382, [#allocation9], 128, 128, 8
        $region24: #{tpu_custom_call.1} parent=11 // pred_fallthru
          _
        // Predicated region
        $region25: #{tpu_custom_call.1} parent=11 // pred_check
          %p388 = pneg %p139
        $region26: #{tpu_custom_call.1} parent=11 // pred_check_branch
          %390 = sbr.rel (%p388) target = $region28
        $region27: #{tpu_custom_call.1} parent=11 // pred_region
          %s392 = ssub.s32 2048, 2048
          %393 = vsyncadd [#allocation9], %s392
          %s394 = sshll.u32 [#allocation10], 4
          %s395 = int_to_ptr.vmem [resolvable:$true] %s394
          %400 = dma.hbm_to_vmem [thread:$0]  %s4, 2048, %s395, [#allocation9], 128, 128, 8
        $region28: #{tpu_custom_call.1} parent=11 // pred_fallthru
          _
        // Predicated region
        $region29: #{tpu_custom_call.1} parent=11 // pred_check
          %p401 = pneg %p160
        $region30: #{tpu_custom_call.1} parent=11 // pred_check_branch
          %403 = sbr.rel (%p401) target = $region32
        $region31: #{tpu_custom_call.1} parent=11 // pred_region
          %s405 = ssub.s32 2048, 2048
          %406 = vsyncadd [#allocation12], %s405
          %s407 = sshll.u32 [#allocation11], 4
          %s408 = int_to_ptr.vmem [resolvable:$true] %s407
          %413 = dma.hbm_to_vmem [thread:$0]  %s5, 2048, %s408, [#allocation12], 128, 128, 8
        $region32: #{tpu_custom_call.1} parent=11 // pred_fallthru
          _
        // Predicated region
        $region33: #{tpu_custom_call.1} parent=11 // pred_check
          %p414 = pneg %p181
        $region34: #{tpu_custom_call.1} parent=11 // pred_check_branch
          %416 = sbr.rel (%p414) target = $region36
        $region35: #{tpu_custom_call.1} parent=11 // pred_region
          %s418 = ssub.s32 2048, 2048
          %419 = vsyncadd [#allocation12], %s418
          %s420 = sshll.u32 [#allocation13], 4
          %s421 = int_to_ptr.vmem [resolvable:$true] %s420
          %426 = dma.hbm_to_vmem [thread:$0]  %s6, 2048, %s421, [#allocation12], 128, 128, 8
        $region36: #{tpu_custom_call.1} parent=11 // pred_fallthru
          _
        // Predicated region
        $region37: #{tpu_custom_call.1} parent=11 // pred_check
          %p427 = pneg %p202
        $region38: #{tpu_custom_call.1} parent=11 // pred_check_branch
          %429 = sbr.rel (%p427) target = $region40
        $region39: #{tpu_custom_call.1} parent=11 // pred_region
          _
        $region40: #{tpu_custom_call.1} parent=11 // pred_fallthru
          _
        // Predicated region
        $region41: #{tpu_custom_call.1} parent=11 // pred_check
          %p430 = pneg %p223
        $region42: #{tpu_custom_call.1} parent=11 // pred_check_branch
          %432 = sbr.rel (%p430) target = $region44
        $region43: #{tpu_custom_call.1} parent=11 // pred_region
          _
        $region44: #{tpu_custom_call.1} parent=11 // pred_fallthru
          _
        // Predicated region
        $region45: #{tpu_custom_call.1} parent=11 // pred_check
          %p433 = pneg %p244
        $region46: #{tpu_custom_call.1} parent=11 // pred_check_branch
          %435 = sbr.rel (%p433) target = $region48
        $region47: #{tpu_custom_call.1} parent=11 // pred_region
          _
        $region48: #{tpu_custom_call.1} parent=11 // pred_fallthru
          _
        // Predicated region
        $region49: #{tpu_custom_call.1} parent=11 // pred_check
          %p436 = pneg %p265
        $region50: #{tpu_custom_call.1} parent=11 // pred_check_branch
          %438 = sbr.rel (%p436) target = $region52
        $region51: #{tpu_custom_call.1} parent=11 // pred_region
          %s440 = ssub.s32 2048, 2048
          %441 = vsyncadd [#allocation15], %s440
          %s442 = sshll.u32 [#allocation14], 4
          %s443 = int_to_ptr.vmem [resolvable:$true] %s442
          %448 = dma.hbm_to_vmem [thread:$0]  %s10, 2048, %s443, [#allocation15], 128, 128, 8
        $region52: #{tpu_custom_call.1} parent=11 // pred_fallthru
          _
        // Predicated region
        $region53: #{tpu_custom_call.1} parent=11 // pred_check
          %p449 = pneg %p286
        $region54: #{tpu_custom_call.1} parent=11 // pred_check_branch
          %451 = sbr.rel (%p449) target = $region56
        $region55: #{tpu_custom_call.1} parent=11 // pred_region
          _
        $region56: #{tpu_custom_call.1} parent=11 // pred_fallthru
          _
        // Predicated region
        $region57: #{tpu_custom_call.1} parent=11 // pred_check
          %p452 = pneg %p307
        $region58: #{tpu_custom_call.1} parent=11 // pred_check_branch
          %454 = sbr.rel (%p452) target = $region60
        $region59: #{tpu_custom_call.1} parent=11 // pred_region
          %s456 = ssub.s32 2048, 2048
          %457 = vsyncadd [#allocation15], %s456
          %s458 = sshll.u32 [#allocation16], 4
          %s459 = int_to_ptr.vmem [resolvable:$true] %s458
          %464 = dma.hbm_to_vmem [thread:$0]  %s12, 2048, %s459, [#allocation15], 128, 128, 8
        $region60: #{tpu_custom_call.1} parent=11 // pred_fallthru
          _
        // Predicated region
        $region61: #{tpu_custom_call.1} parent=11 // pred_check
          %p465 = pneg %p328
        $region62: #{tpu_custom_call.1} parent=11 // pred_check_branch
          %467 = sbr.rel (%p465) target = $region64
        $region63: #{tpu_custom_call.1} parent=11 // pred_region
          _
        $region64: #{tpu_custom_call.1} parent=11 // pred_fallthru
          _
      $region12: #{tpu_custom_call.1} parent=5 // pred_fallthru
        _
      %p468 = scmp.lt.s32.totalorder %s29, 2
      // Predicated region
      $region65: #{tpu_custom_call.1} parent=5 // pred_check
        %p469 = pneg %p468
      $region66: #{tpu_custom_call.1} parent=5 // pred_check_branch
        %471 = sbr.rel (%p469) target = $region68
      $region67: #{tpu_custom_call.1} parent=5 // pred_region
        // Predicated region
        $region69: #{tpu_custom_call.1} parent=67 // pred_check
          %p472 = pneg %p49
        $region70: #{tpu_custom_call.1} parent=67 // pred_check_branch
          %474 = sbr.rel (%p472) target = $region72
        $region71: #{tpu_custom_call.1} parent=67 // pred_region
          %s475 = sand.u32 %s39, 1
          %s476 = scalar_lea.sflag [#allocation6], %s475
          %s477 = sand.u32 %s39, 1
          %s478 = smul.addr %s477, 16
          %s479 = scalar_lea.vmem [#allocation5], %s478
          %s481 = ssub.s32 256, 256
          %482 = vsyncadd %s476, %s481
          %s483 = smul.addr %s29, 2
          %s484 = smul.addr %s483, 128
          %s485 = scalar_lea.hbm %s0, %s484
          %s486 = sshll.u32 %s479, 4
          %s487 = int_to_ptr.vmem [resolvable:$true] %s486
          %492 = dma.hbm_to_vmem [thread:$0]  %s485, 256, %s487, %s476, 128, 128, 8
        $region72: #{tpu_custom_call.1} parent=67 // pred_fallthru
          _
      $region68: #{tpu_custom_call.1} parent=5 // pred_fallthru
        _
      %p493 = scmp.le.s32.totalorder 1, %s29
      %p494 = scmp.lt.s32.totalorder %s29, 3
      %p495 = pnand %p493, %p494
      %p496 = pneg %p495
      // Predicated region
      $region73: #{tpu_custom_call.1} parent=5 // pred_check
        _
      $region74: #{tpu_custom_call.1} parent=5 // pred_check_branch
        %498 = sbr.rel (%p495) target = $region76
      $region75: #{tpu_custom_call.1} parent=5 // pred_region
        %s499 = ssub.s32 %s29, 1
        %s500 = sand.u32 %s42, 1
        %s501 = scalar_lea.sflag [#allocation6], %s500
        %s502 = sand.u32 %s42, 1
        %s503 = smul.addr %s502, 16
        %s504 = scalar_lea.vmem [#allocation5], %s503
        // Predicated region
        $region77: #{tpu_custom_call.1} parent=75 // pred_check
          %p505 = pneg %p55
        $region78: #{tpu_custom_call.1} parent=75 // pred_check_branch
          %507 = sbr.rel (%p505) target = $region80
        $region79: #{tpu_custom_call.1} parent=75 // pred_region
          %508 = dma.done %s501, 256
        $region80: #{tpu_custom_call.1} parent=75 // pred_fallthru
          _
        // Predicated region
        $region81: #{tpu_custom_call.1} parent=75 // pred_check
          %p509 = pneg %p118
        $region82: #{tpu_custom_call.1} parent=75 // pred_check_branch
          %511 = sbr.rel (%p509) target = $region84
        $region83: #{tpu_custom_call.1} parent=75 // pred_region
          %512 = dma.done [#allocation9], 2048
        $region84: #{tpu_custom_call.1} parent=75 // pred_fallthru
          _
        // Predicated region
        $region85: #{tpu_custom_call.1} parent=75 // pred_check
          %p513 = pneg %p139
        $region86: #{tpu_custom_call.1} parent=75 // pred_check_branch
          %515 = sbr.rel (%p513) target = $region88
        $region87: #{tpu_custom_call.1} parent=75 // pred_region
          %516 = dma.done [#allocation9], 2048
        $region88: #{tpu_custom_call.1} parent=75 // pred_fallthru
          _
        // Predicated region
        $region89: #{tpu_custom_call.1} parent=75 // pred_check
          %p517 = pneg %p160
        $region90: #{tpu_custom_call.1} parent=75 // pred_check_branch
          %519 = sbr.rel (%p517) target = $region92
        $region91: #{tpu_custom_call.1} parent=75 // pred_region
          %520 = dma.done [#allocation12], 2048
        $region92: #{tpu_custom_call.1} parent=75 // pred_fallthru
          _
        // Predicated region
        $region93: #{tpu_custom_call.1} parent=75 // pred_check
          %p521 = pneg %p181
        $region94: #{tpu_custom_call.1} parent=75 // pred_check_branch
          %523 = sbr.rel (%p521) target = $region96
        $region95: #{tpu_custom_call.1} parent=75 // pred_region
          %524 = dma.done [#allocation12], 2048
        $region96: #{tpu_custom_call.1} parent=75 // pred_fallthru
          _
        // Predicated region
        $region97: #{tpu_custom_call.1} parent=75 // pred_check
          %p525 = pneg %p265
        $region98: #{tpu_custom_call.1} parent=75 // pred_check_branch
          %527 = sbr.rel (%p525) target = $region100
        $region99: #{tpu_custom_call.1} parent=75 // pred_region
          %528 = dma.done [#allocation15], 2048
        $region100: #{tpu_custom_call.1} parent=75 // pred_fallthru
          _
        // Predicated region
        $region101: #{tpu_custom_call.1} parent=75 // pred_check
          %p529 = pneg %p307
        $region102: #{tpu_custom_call.1} parent=75 // pred_check_branch
          %531 = sbr.rel (%p529) target = $region104
        $region103: #{tpu_custom_call.1} parent=75 // pred_region
          %532 = dma.done [#allocation15], 2048
        $region104: #{tpu_custom_call.1} parent=75 // pred_fallthru
          _
        %s533 = sand.u32 %s42, 1
        %s534 = scalar_lea.sflag [#allocation6], %s533
        %s535 = sand.u32 %s42, 1
        %s536 = smul.addr %s535, 16
        %s537 = scalar_lea.vmem [#allocation5], %s536
        %p538 = pneg %p55
        %p539 = pneg %p52
        %p540 = pneg %p76
        %p541 = pneg %p73
        %p542 = pneg %p97
        %p543 = pneg %p94
        %p544 = pneg %p118
        %p545 = pneg %p115
        %p546 = pneg %p139
        %p547 = pneg %p136
        %p548 = pneg %p160
        %p549 = pneg %p157
        %p550 = pneg %p181
        %p551 = pneg %p178
        %p552 = pneg %p202
        %p553 = pneg %p199
        %p554 = pneg %p223
        %p555 = pneg %p220
        %p556 = pneg %p244
        %p557 = pneg %p241
        %p558 = pneg %p265
        %p559 = pneg %p262
        %p560 = pneg %p286
        %p561 = pneg %p283
        %p562 = pneg %p307
        %p563 = pneg %p304
        %p564 = pneg %p328
        %p565 = pneg %p325
        %p566 = pneg %p354
        %p567 = pneg %p351
        %s568 = sand.u32 %s341, 1
        %s569 = scalar_lea.sflag [#allocation7], %s568
        %s570 = sand.u32 %s341, 1
        %s571 = smul.addr %s570, 16
        %s572 = scalar_lea.vmem [#allocation17], %s571
        %v573 = vld [vmem:[%s504] sm:$0xff]
        %v574 = vld [vmem:[%s504 + $0x8] sm:$0xff]
        %v575 = vld [vmem:[%s1] sm:$0x1]
        %v576 = vld [vmem:[%s2] sm:$0x1]
        %v577 = vlaneseq
        %v578 = vand.u32 %v577, 127
        %vm579 = vcmp.lt.s32.totalorder %v578, 32
        %580 = vadd.xlane.f32.xlu0 %v573
        %v581 = vpop.xlane.xlu0 %580
        %582 = vadd.xlane.f32.xlu0 %v574
        %v583 = vpop.xlane.xlu0 %582
        %v584 = vmul.f32 %v581, 0.03125
        %v585 = vmul.f32 %v583, 0.03125
        %v586 = vsub.f32 %v573, %v584
        %v587 = vsub.f32 %v574, %v585
        %v588 = vsel %vm579, %v586, 0.0
        %v589 = vsel %vm579, %v587, 0.0
        %v590 = vmul.f32 %v588, %v588
        %v591 = vmul.f32 %v589, %v589
        %592 = vadd.xlane.f32.xlu0 %v590
        %v593 = vpop.xlane.xlu0 %592
        %594 = vadd.xlane.f32.xlu0 %v591
        %v595 = vpop.xlane.xlu0 %594
        %v596 = vmul.f32 %v593, 0.03125
        %v597 = vmul.f32 %v595, 0.03125
        %v598 = vadd.f32 %v596, 1e-05
        %v599 = vadd.f32 %v597, 1e-05
        %v600 = vrsqrt.pop %v598
        %v601 = vrsqrt.pop %v599
        %v602 = vmul.f32 %v588, %v600
        %v603 = vmul.f32 %v589, %v601
        %v605 = vlaneseq
        %v606 = vshrl.u32 %v605, 7
        %v607 = vsub.s32 0, %v606
        %v608 = vrot.slane %v575, %v607
        %v610 = vmul.f32 %v602, %v608
        %v611 = vmul.f32 %v603, %v608
        %v613 = vlaneseq
        %v614 = vshrl.u32 %v613, 7
        %v615 = vsub.s32 0, %v614
        %v616 = vrot.slane %v576, %v615
        %v618 = vadd.f32 %v610, %v616
        %v619 = vadd.f32 %v611, %v616
        %v620 = vld [vmem:[#allocation8] sm:$0xff]
        %v621 = vld [vmem:[#allocation8 + $0x8] sm:$0xff]
        %v622 = vld [vmem:[#allocation8 + $0x10] sm:$0xff]
        %v623 = vld [vmem:[#allocation8 + $0x18] sm:$0xff]
        %v624 = vld [vmem:[#allocation8 + $0x20] sm:$0xff]
        %v625 = vld [vmem:[#allocation8 + $0x28] sm:$0xff]
        %v626 = vld [vmem:[#allocation8 + $0x30] sm:$0xff]
        %v627 = vld [vmem:[#allocation8 + $0x38] sm:$0xff]
        %v628 = vld [vmem:[#allocation8 + $0x40] sm:$0xff]
        %v629 = vld [vmem:[#allocation8 + $0x48] sm:$0xff]
        %v630 = vld [vmem:[#allocation8 + $0x50] sm:$0xff]
        %v631 = vld [vmem:[#allocation8 + $0x58] sm:$0xff]
        %v632 = vld [vmem:[#allocation8 + $0x60] sm:$0xff]
        %v633 = vld [vmem:[#allocation8 + $0x68] sm:$0xff]
        %v634 = vld [vmem:[#allocation8 + $0x70] sm:$0xff]
        %v635 = vld [vmem:[#allocation8 + $0x78] sm:$0xff]
        %636 = vmatprep.subr.mxu0 0.0
        %637 = vmatpush1.msra.mxu0 %v620
        %638 = vmatprep.subr.mxu0 0.0
        %639 = vmatpush1.msra.mxu0 %v621
        %640 = vmatprep.subr.mxu0 0.0
        %641 = vmatpush1.msra.mxu0 %v622
        %642 = vmatprep.subr.mxu0 0.0
        %643 = vmatpush1.msra.mxu0 %v623
        %644 = vmatprep.subr.mxu0 0.0
        %645 = vmatpush1.msra.mxu0 %v624
        %646 = vmatprep.subr.mxu0 0.0
        %647 = vmatpush1.msra.mxu0 %v625
        %648 = vmatprep.subr.mxu0 0.0
        %649 = vmatpush1.msra.mxu0 %v626
        %650 = vmatprep.subr.mxu0 0.0
        %651 = vmatpush1.msra.mxu0 %v627
        %652 = vmatprep.subr.mxu0 0.0
        %653 = vmatpush1.msra.mxu0 %v628
        %654 = vmatprep.subr.mxu0 0.0
        %655 = vmatpush1.msra.mxu0 %v629
        %656 = vmatprep.subr.mxu0 0.0
        %657 = vmatpush1.msra.mxu0 %v630
        %658 = vmatprep.subr.mxu0 0.0
        %659 = vmatpush1.msra.mxu0 %v631
        %660 = vmatprep.subr.mxu0 0.0
        %661 = vmatpush1.msra.mxu0 %v632
        %662 = vmatprep.subr.mxu0 0.0
        %663 = vmatpush1.msra.mxu0 %v633
        %664 = vmatprep.subr.mxu0 0.0
        %665 = vmatpush1.msra.mxu0 %v634
        %666 = vmatprep.subr.mxu0 0.0
        %667 = vmatpush1.msra.mxu0 %v635
        %668 = vmatprep.subr.mxu0 0.0
        %669 = vmatpush1.msra.mxu0 0.0
        %670 = vmatprep.subr.mxu0 0.0
        %671 = vmatpush1.msra.mxu0 0.0
        %672 = vmatprep.subr.mxu0 0.0
        %673 = vmatpush1.msra.mxu0 0.0
        %674 = vmatprep.subr.mxu0 0.0
        %675 = vmatpush1.msra.mxu0 0.0
        %676 = vmatprep.subr.mxu0 0.0
        %677 = vmatpush1.msra.mxu0 0.0
        %678 = vmatprep.subr.mxu0 0.0
        %679 = vmatpush1.msra.mxu0 0.0
        %680 = vmatprep.subr.mxu0 0.0
        %681 = vmatpush1.msra.mxu0 0.0
        %682 = vmatprep.subr.mxu0 0.0
        %683 = vmatpush1.msra.mxu0 0.0
        %684 = vmatprep.subr.mxu0 0.0
        %685 = vmatpush1.msra.mxu0 0.0
        %686 = vmatprep.subr.mxu0 0.0
        %687 = vmatpush1.msra.mxu0 0.0
        %688 = vmatprep.subr.mxu0 0.0
        %689 = vmatpush1.msra.mxu0 0.0
        %690 = vmatprep.subr.mxu0 0.0
        %691 = vmatpush1.msra.mxu0 0.0
        %692 = vmatprep.subr.mxu0 0.0
        %693 = vmatpush1.msra.mxu0 0.0
        %694 = vmatprep.subr.mxu0 0.0
        %695 = vmatpush1.msra.mxu0 0.0
        %696 = vmatprep.subr.mxu0 0.0
        %697 = vmatpush1.msra.mxu0 0.0
        %698 = vmatprep.subr.mxu0 0.0
        %699 = vmatpush1.msra.mxu0 0.0
        %700 = vmatprep.mubr.f32.mxu0 0.0
        %701 = vmatmul.mubr.f32.gmra.mrb[0].mxu0 %v618
        %v702 = vpop.f32.mrb[0].mxu0
        %v703 = vadd.f32 0.0, %v702
        %v704 = vpop.f32.mrb[0].mxu0
        %705 = vmatprep.mubr.f32.mxu0 0.0
        %706 = vmatmul.mubr.f32.gmra.mrb[0].mxu0 %v619
        %v707 = vpop.f32.mrb[0].mxu0
        %v708 = vadd.f32 0.0, %v707
        %v709 = vpop.f32.mrb[0].mxu0
        %710 = vdwg.mxu0
        %711 = vst [vmem:[#allocation2] sm:$0xff] %v703
        %712 = vst [vmem:[#allocation2 + $0x8] sm:$0xff] %v708
        %v713 = vld [vmem:[#allocation10] sm:$0xff]
        %v714 = vld [vmem:[#allocation10 + $0x8] sm:$0xff]
        %v715 = vld [vmem:[#allocation10 + $0x10] sm:$0xff]
        %v716 = vld [vmem:[#allocation10 + $0x18] sm:$0xff]
        %v717 = vld [vmem:[#allocation10 + $0x20] sm:$0xff]
        %v718 = vld [vmem:[#allocation10 + $0x28] sm:$0xff]
        %v719 = vld [vmem:[#allocation10 + $0x30] sm:$0xff]
        %v720 = vld [vmem:[#allocation10 + $0x38] sm:$0xff]
        %v721 = vld [vmem:[#allocation10 + $0x40] sm:$0xff]
        %v722 = vld [vmem:[#allocation10 + $0x48] sm:$0xff]
        %v723 = vld [vmem:[#allocation10 + $0x50] sm:$0xff]
        %v724 = vld [vmem:[#allocation10 + $0x58] sm:$0xff]
        %v725 = vld [vmem:[#allocation10 + $0x60] sm:$0xff]
        %v726 = vld [vmem:[#allocation10 + $0x68] sm:$0xff]
        %v727 = vld [vmem:[#allocation10 + $0x70] sm:$0xff]
        %v728 = vld [vmem:[#allocation10 + $0x78] sm:$0xff]
        %729 = vmatprep.subr.mxu0 0.0
        %730 = vmatpush1.msra.mxu0 %v713
        %731 = vmatprep.subr.mxu0 0.0
        %732 = vmatpush1.msra.mxu0 %v714
        %733 = vmatprep.subr.mxu0 0.0
        %734 = vmatpush1.msra.mxu0 %v715
        %735 = vmatprep.subr.mxu0 0.0
        %736 = vmatpush1.msra.mxu0 %v716
        %737 = vmatprep.subr.mxu0 0.0
        %738 = vmatpush1.msra.mxu0 %v717
        %739 = vmatprep.subr.mxu0 0.0
        %740 = vmatpush1.msra.mxu0 %v718
        %741 = vmatprep.subr.mxu0 0.0
        %742 = vmatpush1.msra.mxu0 %v719
        %743 = vmatprep.subr.mxu0 0.0
        %744 = vmatpush1.msra.mxu0 %v720
        %745 = vmatprep.subr.mxu0 0.0
        %746 = vmatpush1.msra.mxu0 %v721
        %747 = vmatprep.subr.mxu0 0.0
        %748 = vmatpush1.msra.mxu0 %v722
        %749 = vmatprep.subr.mxu0 0.0
        %750 = vmatpush1.msra.mxu0 %v723
        %751 = vmatprep.subr.mxu0 0.0
        %752 = vmatpush1.msra.mxu0 %v724
        %753 = vmatprep.subr.mxu0 0.0
        %754 = vmatpush1.msra.mxu0 %v725
        %755 = vmatprep.subr.mxu0 0.0
        %756 = vmatpush1.msra.mxu0 %v726
        %757 = vmatprep.subr.mxu0 0.0
        %758 = vmatpush1.msra.mxu0 %v727
        %759 = vmatprep.subr.mxu0 0.0
        %760 = vmatpush1.msra.mxu0 %v728
        %761 = vmatprep.subr.mxu0 0.0
        %762 = vmatpush1.msra.mxu0 0.0
        %763 = vmatprep.subr.mxu0 0.0
        %764 = vmatpush1.msra.mxu0 0.0
        %765 = vmatprep.subr.mxu0 0.0
        %766 = vmatpush1.msra.mxu0 0.0
        %767 = vmatprep.subr.mxu0 0.0
        %768 = vmatpush1.msra.mxu0 0.0
        %769 = vmatprep.subr.mxu0 0.0
        %770 = vmatpush1.msra.mxu0 0.0
        %771 = vmatprep.subr.mxu0 0.0
        %772 = vmatpush1.msra.mxu0 0.0
        %773 = vmatprep.subr.mxu0 0.0
        %774 = vmatpush1.msra.mxu0 0.0
        %775 = vmatprep.subr.mxu0 0.0
        %776 = vmatpush1.msra.mxu0 0.0
        %777 = vmatprep.subr.mxu0 0.0
        %778 = vmatpush1.msra.mxu0 0.0
        %779 = vmatprep.subr.mxu0 0.0
        %780 = vmatpush1.msra.mxu0 0.0
        %781 = vmatprep.subr.mxu0 0.0
        %782 = vmatpush1.msra.mxu0 0.0
        %783 = vmatprep.subr.mxu0 0.0
        %784 = vmatpush1.msra.mxu0 0.0
        %785 = vmatprep.subr.mxu0 0.0
        %786 = vmatpush1.msra.mxu0 0.0
        %787 = vmatprep.subr.mxu0 0.0
        %788 = vmatpush1.msra.mxu0 0.0
        %789 = vmatprep.subr.mxu0 0.0
        %790 = vmatpush1.msra.mxu0 0.0
        %791 = vmatprep.subr.mxu0 0.0
        %792 = vmatpush1.msra.mxu0 0.0
        %793 = vmatprep.mubr.f32.mxu0 0.0
        %794 = vmatmul.mubr.f32.gmra.mrb[0].mxu0 %v618
        %v795 = vpop.f32.mrb[0].mxu0
        %v796 = vadd.f32 0.0, %v795
        %v797 = vpop.f32.mrb[0].mxu0
        %798 = vmatprep.mubr.f32.mxu0 0.0
        %799 = vmatmul.mubr.f32.gmra.mrb[0].mxu0 %v619
        %v800 = vpop.f32.mrb[0].mxu0
        %v801 = vadd.f32 0.0, %v800
        %v802 = vpop.f32.mrb[0].mxu0
        %803 = vdwg.mxu0
        %804 = vst [vmem:[#allocation3] sm:$0xff] %v796
        %805 = vst [vmem:[#allocation3 + $0x8] sm:$0xff] %v801
        %v806 = vld [vmem:[#allocation11] sm:$0xff]
        %v807 = vld [vmem:[#allocation11 + $0x8] sm:$0xff]
        %v808 = vld [vmem:[#allocation11 + $0x10] sm:$0xff]
        %v809 = vld [vmem:[#allocation11 + $0x18] sm:$0xff]
        %v810 = vld [vmem:[#allocation11 + $0x20] sm:$0xff]
        %v811 = vld [vmem:[#allocation11 + $0x28] sm:$0xff]
        %v812 = vld [vmem:[#allocation11 + $0x30] sm:$0xff]
        %v813 = vld [vmem:[#allocation11 + $0x38] sm:$0xff]
        %v814 = vld [vmem:[#allocation11 + $0x40] sm:$0xff]
        %v815 = vld [vmem:[#allocation11 + $0x48] sm:$0xff]
        %v816 = vld [vmem:[#allocation11 + $0x50] sm:$0xff]
        %v817 = vld [vmem:[#allocation11 + $0x58] sm:$0xff]
        %v818 = vld [vmem:[#allocation11 + $0x60] sm:$0xff]
        %v819 = vld [vmem:[#allocation11 + $0x68] sm:$0xff]
        %v820 = vld [vmem:[#allocation11 + $0x70] sm:$0xff]
        %v821 = vld [vmem:[#allocation11 + $0x78] sm:$0xff]
        %822 = vmatprep.subr.mxu0 0.0
        %823 = vmatpush1.msra.mxu0 %v806
        %824 = vmatprep.subr.mxu0 0.0
        %825 = vmatpush1.msra.mxu0 %v807
        %826 = vmatprep.subr.mxu0 0.0
        %827 = vmatpush1.msra.mxu0 %v808
        %828 = vmatprep.subr.mxu0 0.0
        %829 = vmatpush1.msra.mxu0 %v809
        %830 = vmatprep.subr.mxu0 0.0
        %831 = vmatpush1.msra.mxu0 %v810
        %832 = vmatprep.subr.mxu0 0.0
        %833 = vmatpush1.msra.mxu0 %v811
        %834 = vmatprep.subr.mxu0 0.0
        %835 = vmatpush1.msra.mxu0 %v812
        %836 = vmatprep.subr.mxu0 0.0
        %837 = vmatpush1.msra.mxu0 %v813
        %838 = vmatprep.subr.mxu0 0.0
        %839 = vmatpush1.msra.mxu0 %v814
        %840 = vmatprep.subr.mxu0 0.0
        %841 = vmatpush1.msra.mxu0 %v815
        %842 = vmatprep.subr.mxu0 0.0
        %843 = vmatpush1.msra.mxu0 %v816
        %844 = vmatprep.subr.mxu0 0.0
        %845 = vmatpush1.msra.mxu0 %v817
        %846 = vmatprep.subr.mxu0 0.0
        %847 = vmatpush1.msra.mxu0 %v818
        %848 = vmatprep.subr.mxu0 0.0
        %849 = vmatpush1.msra.mxu0 %v819
        %850 = vmatprep.subr.mxu0 0.0
        %851 = vmatpush1.msra.mxu0 %v820
        %852 = vmatprep.subr.mxu0 0.0
        %853 = vmatpush1.msra.mxu0 %v821
        %854 = vmatprep.subr.mxu0 0.0
        %855 = vmatpush1.msra.mxu0 0.0
        %856 = vmatprep.subr.mxu0 0.0
        %857 = vmatpush1.msra.mxu0 0.0
        %858 = vmatprep.subr.mxu0 0.0
        %859 = vmatpush1.msra.mxu0 0.0
        %860 = vmatprep.subr.mxu0 0.0
        %861 = vmatpush1.msra.mxu0 0.0
        %862 = vmatprep.subr.mxu0 0.0
        %863 = vmatpush1.msra.mxu0 0.0
        %864 = vmatprep.subr.mxu0 0.0
        %865 = vmatpush1.msra.mxu0 0.0
        %866 = vmatprep.subr.mxu0 0.0
        %867 = vmatpush1.msra.mxu0 0.0
        %868 = vmatprep.subr.mxu0 0.0
        %869 = vmatpush1.msra.mxu0 0.0
        %870 = vmatprep.subr.mxu0 0.0
        %871 = vmatpush1.msra.mxu0 0.0
        %872 = vmatprep.subr.mxu0 0.0
        %873 = vmatpush1.msra.mxu0 0.0
        %874 = vmatprep.subr.mxu0 0.0
        %875 = vmatpush1.msra.mxu0 0.0
        %876 = vmatprep.subr.mxu0 0.0
        %877 = vmatpush1.msra.mxu0 0.0
        %878 = vmatprep.subr.mxu0 0.0
        %879 = vmatpush1.msra.mxu0 0.0
        %880 = vmatprep.subr.mxu0 0.0
        %881 = vmatpush1.msra.mxu0 0.0
        %882 = vmatprep.subr.mxu0 0.0
        %883 = vmatpush1.msra.mxu0 0.0
        %884 = vmatprep.subr.mxu0 0.0
        %885 = vmatpush1.msra.mxu0 0.0
        %886 = vmatprep.mubr.f32.mxu0 0.0
        %887 = vmatmul.mubr.f32.gmra.mrb[0].mxu0 %v618
        %v888 = vpop.f32.mrb[0].mxu0
        %v889 = vadd.f32 0.0, %v888
        %v890 = vpop.f32.mrb[0].mxu0
        %891 = vmatprep.mubr.f32.mxu0 0.0
        %892 = vmatmul.mubr.f32.gmra.mrb[0].mxu0 %v619
        %v893 = vpop.f32.mrb[0].mxu0
        %v894 = vadd.f32 0.0, %v893
        %v895 = vpop.f32.mrb[0].mxu0
        %896 = vdwg.mxu0
        %897 = vst [vmem:[#allocation4] sm:$0xff] %v889
        %898 = vst [vmem:[#allocation4 + $0x8] sm:$0xff] %v894
        %v899 = vld [vmem:[#allocation2] sm:$0xff]
        %v900 = vld [vmem:[#allocation2 + $0x8] sm:$0xff]
        %v901 = vld [vmem:[#allocation3] sm:$0xff]
        %v902 = vld [vmem:[#allocation3 + $0x8] sm:$0xff]
        %v903 = vld [vmem:[#allocation4] sm:$0xff]
        %v904 = vld [vmem:[#allocation4 + $0x8] sm:$0xff]
        %905 = vmatprep.subr.mxu0 0.0
        %906 = vmatpush1.xpose.msra.mxu0 %v901
        %907 = vmatprep.subr.mxu0 0.0
        %908 = vmatpush1.xpose.msra.mxu0 %v902
        %909 = vmatprep.subr.mxu0 0.0
        %910 = vmatpush1.xpose.msra.mxu0 0.0
        %911 = vmatprep.subr.mxu0 0.0
        %912 = vmatpush1.xpose.msra.mxu0 0.0
        %913 = vmatprep.subr.mxu0 0.0
        %914 = vmatpush1.xpose.msra.mxu0 0.0
        %915 = vmatprep.subr.mxu0 0.0
        %916 = vmatpush1.xpose.msra.mxu0 0.0
        %917 = vmatprep.subr.mxu0 0.0
        %918 = vmatpush1.xpose.msra.mxu0 0.0
        %919 = vmatprep.subr.mxu0 0.0
        %920 = vmatpush1.xpose.msra.mxu0 0.0
        %921 = vmatprep.subr.mxu0 0.0
        %922 = vmatpush1.xpose.msra.mxu0 0.0
        %923 = vmatprep.subr.mxu0 0.0
        %924 = vmatpush1.xpose.msra.mxu0 0.0
        %925 = vmatprep.subr.mxu0 0.0
        %926 = vmatpush1.xpose.msra.mxu0 0.0
        %927 = vmatprep.subr.mxu0 0.0
        %928 = vmatpush1.xpose.msra.mxu0 0.0
        %929 = vmatprep.subr.mxu0 0.0
        %930 = vmatpush1.xpose.msra.mxu0 0.0
        %931 = vmatprep.subr.mxu0 0.0
        %932 = vmatpush1.xpose.msra.mxu0 0.0
        %933 = vmatprep.subr.mxu0 0.0
        %934 = vmatpush1.xpose.msra.mxu0 0.0
        %935 = vmatprep.subr.mxu0 0.0
        %936 = vmatpush1.xpose.msra.mxu0 0.0
        %937 = vmatprep.subr.mxu0 0.0
        %938 = vmatpush1.xpose.msra.mxu0 0.0
        %939 = vmatprep.subr.mxu0 0.0
        %940 = vmatpush1.xpose.msra.mxu0 0.0
        %941 = vmatprep.subr.mxu0 0.0
        %942 = vmatpush1.xpose.msra.mxu0 0.0
        %943 = vmatprep.subr.mxu0 0.0
        %944 = vmatpush1.xpose.msra.mxu0 0.0
        %945 = vmatprep.subr.mxu0 0.0
        %946 = vmatpush1.xpose.msra.mxu0 0.0
        %947 = vmatprep.subr.mxu0 0.0
        %948 = vmatpush1.xpose.msra.mxu0 0.0
        %949 = vmatprep.subr.mxu0 0.0
        %950 = vmatpush1.xpose.msra.mxu0 0.0
        %951 = vmatprep.subr.mxu0 0.0
        %952 = vmatpush1.xpose.msra.mxu0 0.0
        %953 = vmatprep.subr.mxu0 0.0
        %954 = vmatpush1.xpose.msra.mxu0 0.0
        %955 = vmatprep.subr.mxu0 0.0
        %956 = vmatpush1.xpose.msra.mxu0 0.0
        %957 = vmatprep.subr.mxu0 0.0
        %958 = vmatpush1.xpose.msra.mxu0 0.0
        %959 = vmatprep.subr.mxu0 0.0
        %960 = vmatpush1.xpose.msra.mxu0 0.0
        %961 = vmatprep.subr.mxu0 0.0
        %962 = vmatpush1.xpose.msra.mxu0 0.0
        %963 = vmatprep.subr.mxu0 0.0
        %964 = vmatpush1.xpose.msra.mxu0 0.0
        %965 = vmatprep.subr.mxu0 0.0
        %966 = vmatpush1.xpose.msra.mxu0 0.0
        %967 = vmatprep.subr.mxu0 0.0
        %968 = vmatpush1.xpose.msra.mxu0 0.0
        %969 = vmatprep.mubr.f32.mxu0 0.0
        %970 = vmatmul.mubr.f32.gmra.mrb[0].mxu0 %v899
        %v971 = vpop.f32.mrb[0].mxu0
        %v972 = vadd.f32 0.0, %v971
        %v973 = vpop.f32.mrb[0].mxu0
        %974 = vmatprep.mubr.f32.mxu0 0.0
        %975 = vmatmul.mubr.f32.gmra.mrb[0].mxu0 %v900
        %v976 = vpop.f32.mrb[0].mxu0
        %v977 = vadd.f32 0.0, %v976
        %v978 = vpop.f32.mrb[0].mxu0
        %979 = vdwg.mxu0
        %vm980 = vcmask 130048
        %v981 = vsel %vm980, %v972, -inf
        %982 = vmax.xlane.f32.xlu0 %v981
        %v983 = vpop.xlane.xlu0 %982
        %v984 = vsel %vm980, %v977, -inf
        %985 = vmax.xlane.f32.xlu0 %v984
        %v986 = vpop.xlane.xlu0 %985
        %v987 = vsub.f32 -inf, %v983
        %v988 = vsub.f32 -inf, %v986
        %v989 = vmul.f32 %v987, 1.442695
        %v990 = vpow.pop %v989
        %v991 = vmul.f32 %v988, 1.442695
        %v992 = vpow.pop %v991
        %v993 = vsub.f32 %v972, %v983
        %v994 = vsub.f32 %v977, %v986
        %v995 = vmul.f32 %v993, 1.442695
        %v996 = vpow.pop %v995
        %v997 = vmul.f32 %v994, 1.442695
        %v998 = vpow.pop %v997
        %v999 = vmul.f32 %v990, 0.0
        %v1000 = vmul.f32 %v992, 0.0
        %v1001 = vsel %vm980, %v996, 0.0
        %1002 = vadd.xlane.f32.xlu0 %v1001
        %v1003 = vpop.xlane.xlu0 %1002
        %v1004 = vsel %vm980, %v998, 0.0
        %1005 = vadd.xlane.f32.xlu0 %v1004
        %v1006 = vpop.xlane.xlu0 %1005
        %v1007 = vadd.f32 %v999, %v1003
        %v1008 = vadd.f32 %v1000, %v1006
        %v1010 = vsel %vm980, %v996, 0
        %v1013 = vsel %vm980, %v998, 0
        %1015 = vmatprep.subr.mxu0 0.0
        %1016 = vmatpush1.msra.mxu0 %v903
        %1017 = vmatprep.subr.mxu0 0.0
        %1018 = vmatpush1.msra.mxu0 %v904
        %1019 = vmatprep.subr.mxu0 0.0
        %1020 = vmatpush1.msra.mxu0 0.0
        %1021 = vmatprep.subr.mxu0 0.0
        %1022 = vmatpush1.msra.mxu0 0.0
        %1023 = vmatprep.subr.mxu0 0.0
        %1024 = vmatpush1.msra.mxu0 0.0
        %1025 = vmatprep.subr.mxu0 0.0
        %1026 = vmatpush1.msra.mxu0 0.0
        %1027 = vmatprep.subr.mxu0 0.0
        %1028 = vmatpush1.msra.mxu0 0.0
        %1029 = vmatprep.subr.mxu0 0.0
        %1030 = vmatpush1.msra.mxu0 0.0
        %1031 = vmatprep.subr.mxu0 0.0
        %1032 = vmatpush1.msra.mxu0 0.0
        %1033 = vmatprep.subr.mxu0 0.0
        %1034 = vmatpush1.msra.mxu0 0.0
        %1035 = vmatprep.subr.mxu0 0.0
        %1036 = vmatpush1.msra.mxu0 0.0
        %1037 = vmatprep.subr.mxu0 0.0
        %1038 = vmatpush1.msra.mxu0 0.0
        %1039 = vmatprep.subr.mxu0 0.0
        %1040 = vmatpush1.msra.mxu0 0.0
        %1041 = vmatprep.subr.mxu0 0.0
        %1042 = vmatpush1.msra.mxu0 0.0
        %1043 = vmatprep.subr.mxu0 0.0
        %1044 = vmatpush1.msra.mxu0 0.0
        %1045 = vmatprep.subr.mxu0 0.0
        %1046 = vmatpush1.msra.mxu0 0.0
        %1047 = vmatprep.subr.mxu0 0.0
        %1048 = vmatpush1.msra.mxu0 0.0
        %1049 = vmatprep.subr.mxu0 0.0
        %1050 = vmatpush1.msra.mxu0 0.0
        %1051 = vmatprep.subr.mxu0 0.0
        %1052 = vmatpush1.msra.mxu0 0.0
        %1053 = vmatprep.subr.mxu0 0.0
        %1054 = vmatpush1.msra.mxu0 0.0
        %1055 = vmatprep.subr.mxu0 0.0
        %1056 = vmatpush1.msra.mxu0 0.0
        %1057 = vmatprep.subr.mxu0 0.0
        %1058 = vmatpush1.msra.mxu0 0.0
        %1059 = vmatprep.subr.mxu0 0.0
        %1060 = vmatpush1.msra.mxu0 0.0
        %1061 = vmatprep.subr.mxu0 0.0
        %1062 = vmatpush1.msra.mxu0 0.0
        %1063 = vmatprep.subr.mxu0 0.0
        %1064 = vmatpush1.msra.mxu0 0.0
        %1065 = vmatprep.subr.mxu0 0.0
        %1066 = vmatpush1.msra.mxu0 0.0
        %1067 = vmatprep.subr.mxu0 0.0
        %1068 = vmatpush1.msra.mxu0 0.0
        %1069 = vmatprep.subr.mxu0 0.0
        %1070 = vmatpush1.msra.mxu0 0.0
        %1071 = vmatprep.subr.mxu0 0.0
        %1072 = vmatpush1.msra.mxu0 0.0
        %1073 = vmatprep.subr.mxu0 0.0
        %1074 = vmatpush1.msra.mxu0 0.0
        %1075 = vmatprep.subr.mxu0 0.0
        %1076 = vmatpush1.msra.mxu0 0.0
        %1077 = vmatprep.subr.mxu0 0.0
        %1078 = vmatpush1.msra.mxu0 0.0
        %1079 = vmatprep.mubr.f32.mxu0 0.0
        %1080 = vmatmul.mubr.f32.gmra.mrb[0].mxu0 %v1010
        %v1081 = vpop.f32.mrb[0].mxu0
        %v1082 = vadd.f32 0.0, %v1081
        %v1083 = vpop.f32.mrb[0].mxu0
        %1084 = vmatprep.mubr.f32.mxu0 0.0
        %1085 = vmatmul.mubr.f32.gmra.mrb[0].mxu0 %v1013
        %v1086 = vpop.f32.mrb[0].mxu0
        %v1087 = vadd.f32 0.0, %v1086
        %v1088 = vpop.f32.mrb[0].mxu0
        %1089 = vdwg.mxu0
        %v1090 = vadd.f32 %v999, %v1082
        %v1091 = vadd.f32 %v1000, %v1087
        %v1092 = vrcp.pop %v1007
        %v1093 = vrcp.pop %v1008
        %v1094 = vmul.f32 %v1090, %v1092
        %v1095 = vmul.f32 %v1091, %v1093
        %v1096 = vld [vmem:[#allocation13] sm:$0xff]
        %v1097 = vld [vmem:[#allocation13 + $0x8] sm:$0xff]
        %v1098 = vld [vmem:[#allocation13 + $0x10] sm:$0xff]
        %v1099 = vld [vmem:[#allocation13 + $0x18] sm:$0xff]
        %v1100 = vld [vmem:[#allocation13 + $0x20] sm:$0xff]
        %v1101 = vld [vmem:[#allocation13 + $0x28] sm:$0xff]
        %v1102 = vld [vmem:[#allocation13 + $0x30] sm:$0xff]
        %v1103 = vld [vmem:[#allocation13 + $0x38] sm:$0xff]
        %v1104 = vld [vmem:[#allocation13 + $0x40] sm:$0xff]
        %v1105 = vld [vmem:[#allocation13 + $0x48] sm:$0xff]
        %v1106 = vld [vmem:[#allocation13 + $0x50] sm:$0xff]
        %v1107 = vld [vmem:[#allocation13 + $0x58] sm:$0xff]
        %v1108 = vld [vmem:[#allocation13 + $0x60] sm:$0xff]
        %v1109 = vld [vmem:[#allocation13 + $0x68] sm:$0xff]
        %v1110 = vld [vmem:[#allocation13 + $0x70] sm:$0xff]
        %v1111 = vld [vmem:[#allocation13 + $0x78] sm:$0xff]
        %v1112 = vld [vmem:[%s7] sm:$0x1]
        %v1114 = vlaneseq
        %v1115 = vshrl.u32 %v1114, 7
        %v1116 = vsub.s32 0, %v1115
        %v1117 = vrot.slane %v1112, %v1116
        %1119 = vmatprep.subr.mxu0 0.0
        %1120 = vmatpush1.msra.mxu0 %v1096
        %1121 = vmatprep.subr.mxu0 0.0
        %1122 = vmatpush1.msra.mxu0 %v1097
        %1123 = vmatprep.subr.mxu0 0.0
        %1124 = vmatpush1.msra.mxu0 %v1098
        %1125 = vmatprep.subr.mxu0 0.0
        %1126 = vmatpush1.msra.mxu0 %v1099
        %1127 = vmatprep.subr.mxu0 0.0
        %1128 = vmatpush1.msra.mxu0 %v1100
        %1129 = vmatprep.subr.mxu0 0.0
        %1130 = vmatpush1.msra.mxu0 %v1101
        %1131 = vmatprep.subr.mxu0 0.0
        %1132 = vmatpush1.msra.mxu0 %v1102
        %1133 = vmatprep.subr.mxu0 0.0
        %1134 = vmatpush1.msra.mxu0 %v1103
        %1135 = vmatprep.subr.mxu0 0.0
        %1136 = vmatpush1.msra.mxu0 %v1104
        %1137 = vmatprep.subr.mxu0 0.0
        %1138 = vmatpush1.msra.mxu0 %v1105
        %1139 = vmatprep.subr.mxu0 0.0
        %1140 = vmatpush1.msra.mxu0 %v1106
        %1141 = vmatprep.subr.mxu0 0.0
        %1142 = vmatpush1.msra.mxu0 %v1107
        %1143 = vmatprep.subr.mxu0 0.0
        %1144 = vmatpush1.msra.mxu0 %v1108
        %1145 = vmatprep.subr.mxu0 0.0
        %1146 = vmatpush1.msra.mxu0 %v1109
        %1147 = vmatprep.subr.mxu0 0.0
        %1148 = vmatpush1.msra.mxu0 %v1110
        %1149 = vmatprep.subr.mxu0 0.0
        %1150 = vmatpush1.msra.mxu0 %v1111
        %1151 = vmatprep.subr.mxu0 0.0
        %1152 = vmatpush1.msra.mxu0 0.0
        %1153 = vmatprep.subr.mxu0 0.0
        %1154 = vmatpush1.msra.mxu0 0.0
        %1155 = vmatprep.subr.mxu0 0.0
        %1156 = vmatpush1.msra.mxu0 0.0
        %1157 = vmatprep.subr.mxu0 0.0
        %1158 = vmatpush1.msra.mxu0 0.0
        %1159 = vmatprep.subr.mxu0 0.0
        %1160 = vmatpush1.msra.mxu0 0.0
        %1161 = vmatprep.subr.mxu0 0.0
        %1162 = vmatpush1.msra.mxu0 0.0
        %1163 = vmatprep.subr.mxu0 0.0
        %1164 = vmatpush1.msra.mxu0 0.0
        %1165 = vmatprep.subr.mxu0 0.0
        %1166 = vmatpush1.msra.mxu0 0.0
        %1167 = vmatprep.subr.mxu0 0.0
        %1168 = vmatpush1.msra.mxu0 0.0
        %1169 = vmatprep.subr.mxu0 0.0
        %1170 = vmatpush1.msra.mxu0 0.0
        %1171 = vmatprep.subr.mxu0 0.0
        %1172 = vmatpush1.msra.mxu0 0.0
        %1173 = vmatprep.subr.mxu0 0.0
        %1174 = vmatpush1.msra.mxu0 0.0
        %1175 = vmatprep.subr.mxu0 0.0
        %1176 = vmatpush1.msra.mxu0 0.0
        %1177 = vmatprep.subr.mxu0 0.0
        %1178 = vmatpush1.msra.mxu0 0.0
        %1179 = vmatprep.subr.mxu0 0.0
        %1180 = vmatpush1.msra.mxu0 0.0
        %1181 = vmatprep.subr.mxu0 0.0
        %1182 = vmatpush1.msra.mxu0 0.0
        %1183 = vmatprep.mubr.f32.mxu0 0.0
        %1184 = vmatmul.mubr.f32.gmra.mrb[0].mxu0 %v1094
        %v1185 = vpop.f32.mrb[0].mxu0
        %v1186 = vadd.f32 %v1117, %v1185
        %v1187 = vpop.f32.mrb[0].mxu0
        %1188 = vmatprep.mubr.f32.mxu0 0.0
        %1189 = vmatmul.mubr.f32.gmra.mrb[0].mxu0 %v1095
        %v1190 = vpop.f32.mrb[0].mxu0
        %v1191 = vadd.f32 %v1117, %v1190
        %v1192 = vpop.f32.mrb[0].mxu0
        %1193 = vdwg.mxu0
        %v1194 = vld [vmem:[#allocation4] sm:$0xff]
        %v1195 = vld [vmem:[#allocation4 + $0x8] sm:$0xff]
        %v1196 = vadd.f32 %v1194, %v1186
        %v1197 = vadd.f32 %v1195, %v1191
        %v1198 = vld [vmem:[%s8] sm:$0x1]
        %v1199 = vld [vmem:[%s9] sm:$0x1]
        %vm1200 = vcmp.lt.s32.totalorder %v578, 16
        %1201 = vadd.xlane.f32.xlu0 %v1196
        %v1202 = vpop.xlane.xlu0 %1201
        %1203 = vadd.xlane.f32.xlu0 %v1197
        %v1204 = vpop.xlane.xlu0 %1203
        %v1205 = vmul.f32 %v1202, 0.0625
        %v1206 = vmul.f32 %v1204, 0.0625
        %v1207 = vsub.f32 %v1196, %v1205
        %v1208 = vsub.f32 %v1197, %v1206
        %v1209 = vsel %vm1200, %v1207, 0.0
        %v1210 = vsel %vm1200, %v1208, 0.0
        %v1211 = vmul.f32 %v1209, %v1209
        %v1212 = vmul.f32 %v1210, %v1210
        %1213 = vadd.xlane.f32.xlu0 %v1211
        %v1214 = vpop.xlane.xlu0 %1213
        %1215 = vadd.xlane.f32.xlu0 %v1212
        %v1216 = vpop.xlane.xlu0 %1215
        %v1217 = vmul.f32 %v1214, 0.0625
        %v1218 = vmul.f32 %v1216, 0.0625
        %v1219 = vadd.f32 %v1217, 1e-05
        %v1220 = vadd.f32 %v1218, 1e-05
        %v1221 = vrsqrt.pop %v1219
        %v1222 = vrsqrt.pop %v1220
        %v1223 = vmul.f32 %v1209, %v1221
        %v1224 = vmul.f32 %v1210, %v1222
        %v1226 = vlaneseq
        %v1227 = vshrl.u32 %v1226, 7
        %v1228 = vsub.s32 0, %v1227
        %v1229 = vrot.slane %v1198, %v1228
        %v1231 = vmul.f32 %v1223, %v1229
        %v1232 = vmul.f32 %v1224, %v1229
        %v1234 = vlaneseq
        %v1235 = vshrl.u32 %v1234, 7
        %v1236 = vsub.s32 0, %v1235
        %v1237 = vrot.slane %v1199, %v1236
        %v1239 = vadd.f32 %v1231, %v1237
        %v1240 = vadd.f32 %v1232, %v1237
        %v1241 = vld [vmem:[#allocation14] sm:$0xff]
        %v1242 = vld [vmem:[#allocation14 + $0x8] sm:$0xff]
        %v1243 = vld [vmem:[#allocation14 + $0x10] sm:$0xff]
        %v1244 = vld [vmem:[#allocation14 + $0x18] sm:$0xff]
        %v1245 = vld [vmem:[#allocation14 + $0x20] sm:$0xff]
        %v1246 = vld [vmem:[#allocation14 + $0x28] sm:$0xff]
        %v1247 = vld [vmem:[#allocation14 + $0x30] sm:$0xff]
        %v1248 = vld [vmem:[#allocation14 + $0x38] sm:$0xff]
        %v1249 = vld [vmem:[#allocation14 + $0x40] sm:$0xff]
        %v1250 = vld [vmem:[#allocation14 + $0x48] sm:$0xff]
        %v1251 = vld [vmem:[#allocation14 + $0x50] sm:$0xff]
        %v1252 = vld [vmem:[#allocation14 + $0x58] sm:$0xff]
        %v1253 = vld [vmem:[#allocation14 + $0x60] sm:$0xff]
        %v1254 = vld [vmem:[#allocation14 + $0x68] sm:$0xff]
        %v1255 = vld [vmem:[#allocation14 + $0x70] sm:$0xff]
        %v1256 = vld [vmem:[#allocation14 + $0x78] sm:$0xff]
        %v1257 = vld [vmem:[%s11] sm:$0x1]
        %v1259 = vlaneseq
        %v1260 = vshrl.u32 %v1259, 7
        %v1261 = vsub.s32 0, %v1260
        %v1262 = vrot.slane %v1257, %v1261
        %1264 = vmatprep.subr.mxu0 0.0
        %1265 = vmatpush1.msra.mxu0 %v1241
        %1266 = vmatprep.subr.mxu0 0.0
        %1267 = vmatpush1.msra.mxu0 %v1242
        %1268 = vmatprep.subr.mxu0 0.0
        %1269 = vmatpush1.msra.mxu0 %v1243
        %1270 = vmatprep.subr.mxu0 0.0
        %1271 = vmatpush1.msra.mxu0 %v1244
        %1272 = vmatprep.subr.mxu0 0.0
        %1273 = vmatpush1.msra.mxu0 %v1245
        %1274 = vmatprep.subr.mxu0 0.0
        %1275 = vmatpush1.msra.mxu0 %v1246
        %1276 = vmatprep.subr.mxu0 0.0
        %1277 = vmatpush1.msra.mxu0 %v1247
        %1278 = vmatprep.subr.mxu0 0.0
        %1279 = vmatpush1.msra.mxu0 %v1248
        %1280 = vmatprep.subr.mxu0 0.0
        %1281 = vmatpush1.msra.mxu0 %v1249
        %1282 = vmatprep.subr.mxu0 0.0
        %1283 = vmatpush1.msra.mxu0 %v1250
        %1284 = vmatprep.subr.mxu0 0.0
        %1285 = vmatpush1.msra.mxu0 %v1251
        %1286 = vmatprep.subr.mxu0 0.0
        %1287 = vmatpush1.msra.mxu0 %v1252
        %1288 = vmatprep.subr.mxu0 0.0
        %1289 = vmatpush1.msra.mxu0 %v1253
        %1290 = vmatprep.subr.mxu0 0.0
        %1291 = vmatpush1.msra.mxu0 %v1254
        %1292 = vmatprep.subr.mxu0 0.0
        %1293 = vmatpush1.msra.mxu0 %v1255
        %1294 = vmatprep.subr.mxu0 0.0
        %1295 = vmatpush1.msra.mxu0 %v1256
        %1296 = vmatprep.subr.mxu0 0.0
        %1297 = vmatpush1.msra.mxu0 0.0
        %1298 = vmatprep.subr.mxu0 0.0
        %1299 = vmatpush1.msra.mxu0 0.0
        %1300 = vmatprep.subr.mxu0 0.0
        %1301 = vmatpush1.msra.mxu0 0.0
        %1302 = vmatprep.subr.mxu0 0.0
        %1303 = vmatpush1.msra.mxu0 0.0
        %1304 = vmatprep.subr.mxu0 0.0
        %1305 = vmatpush1.msra.mxu0 0.0
        %1306 = vmatprep.subr.mxu0 0.0
        %1307 = vmatpush1.msra.mxu0 0.0
        %1308 = vmatprep.subr.mxu0 0.0
        %1309 = vmatpush1.msra.mxu0 0.0
        %1310 = vmatprep.subr.mxu0 0.0
        %1311 = vmatpush1.msra.mxu0 0.0
        %1312 = vmatprep.subr.mxu0 0.0
        %1313 = vmatpush1.msra.mxu0 0.0
        %1314 = vmatprep.subr.mxu0 0.0
        %1315 = vmatpush1.msra.mxu0 0.0
        %1316 = vmatprep.subr.mxu0 0.0
        %1317 = vmatpush1.msra.mxu0 0.0
        %1318 = vmatprep.subr.mxu0 0.0
        %1319 = vmatpush1.msra.mxu0 0.0
        %1320 = vmatprep.subr.mxu0 0.0
        %1321 = vmatpush1.msra.mxu0 0.0
        %1322 = vmatprep.subr.mxu0 0.0
        %1323 = vmatpush1.msra.mxu0 0.0
        %1324 = vmatprep.subr.mxu0 0.0
        %1325 = vmatpush1.msra.mxu0 0.0
        %1326 = vmatprep.subr.mxu0 0.0
        %1327 = vmatpush1.msra.mxu0 0.0
        %1328 = vmatprep.mubr.f32.mxu0 0.0
        %1329 = vmatmul.mubr.f32.gmra.mrb[0].mxu0 %v1239
        %v1330 = vpop.f32.mrb[0].mxu0
        %v1331 = vadd.f32 %v1262, %v1330
        %v1332 = vpop.f32.mrb[0].mxu0
        %1333 = vmatprep.mubr.f32.mxu0 0.0
        %1334 = vmatmul.mubr.f32.gmra.mrb[0].mxu0 %v1240
        %v1335 = vpop.f32.mrb[0].mxu0
        %v1336 = vadd.f32 %v1262, %v1335
        %v1337 = vpop.f32.mrb[0].mxu0
        %1338 = vdwg.mxu0
        %v1339 = vmul.f32 %v1331, 0.5
        %v1340 = vmul.f32 %v1336, 0.5
        %v1341 = vmul.f32 %v1331, 0.70710677
        %v1342 = vmul.f32 %v1336, 0.70710677
        %v1343 = verf.f32.pop %v1341
        %v1344 = verf.f32.pop %v1342
        %v1345 = vadd.f32 %v1343, 1.0
        %v1346 = vadd.f32 %v1344, 1.0
        %v1347 = vmul.f32 %v1339, %v1345
        %v1348 = vmul.f32 %v1340, %v1346
        %v1349 = vld [vmem:[#allocation16] sm:$0xff]
        %v1350 = vld [vmem:[#allocation16 + $0x8] sm:$0xff]
        %v1351 = vld [vmem:[#allocation16 + $0x10] sm:$0xff]
        %v1352 = vld [vmem:[#allocation16 + $0x18] sm:$0xff]
        %v1353 = vld [vmem:[#allocation16 + $0x20] sm:$0xff]
        %v1354 = vld [vmem:[#allocation16 + $0x28] sm:$0xff]
        %v1355 = vld [vmem:[#allocation16 + $0x30] sm:$0xff]
        %v1356 = vld [vmem:[#allocation16 + $0x38] sm:$0xff]
        %v1357 = vld [vmem:[#allocation16 + $0x40] sm:$0xff]
        %v1358 = vld [vmem:[#allocation16 + $0x48] sm:$0xff]
        %v1359 = vld [vmem:[#allocation16 + $0x50] sm:$0xff]
        %v1360 = vld [vmem:[#allocation16 + $0x58] sm:$0xff]
        %v1361 = vld [vmem:[#allocation16 + $0x60] sm:$0xff]
        %v1362 = vld [vmem:[#allocation16 + $0x68] sm:$0xff]
        %v1363 = vld [vmem:[#allocation16 + $0x70] sm:$0xff]
        %v1364 = vld [vmem:[#allocation16 + $0x78] sm:$0xff]
        %v1365 = vld [vmem:[%s13] sm:$0x1]
        %v1367 = vlaneseq
        %v1368 = vshrl.u32 %v1367, 7
        %v1369 = vsub.s32 0, %v1368
        %v1370 = vrot.slane %v1365, %v1369
        %1372 = vmatprep.subr.mxu0 0.0
        %1373 = vmatpush1.msra.mxu0 %v1349
        %1374 = vmatprep.subr.mxu0 0.0
        %1375 = vmatpush1.msra.mxu0 %v1350
        %1376 = vmatprep.subr.mxu0 0.0
        %1377 = vmatpush1.msra.mxu0 %v1351
        %1378 = vmatprep.subr.mxu0 0.0
        %1379 = vmatpush1.msra.mxu0 %v1352
        %1380 = vmatprep.subr.mxu0 0.0
        %1381 = vmatpush1.msra.mxu0 %v1353
        %1382 = vmatprep.subr.mxu0 0.0
        %1383 = vmatpush1.msra.mxu0 %v1354
        %1384 = vmatprep.subr.mxu0 0.0
        %1385 = vmatpush1.msra.mxu0 %v1355
        %1386 = vmatprep.subr.mxu0 0.0
        %1387 = vmatpush1.msra.mxu0 %v1356
        %1388 = vmatprep.subr.mxu0 0.0
        %1389 = vmatpush1.msra.mxu0 %v1357
        %1390 = vmatprep.subr.mxu0 0.0
        %1391 = vmatpush1.msra.mxu0 %v1358
        %1392 = vmatprep.subr.mxu0 0.0
        %1393 = vmatpush1.msra.mxu0 %v1359
        %1394 = vmatprep.subr.mxu0 0.0
        %1395 = vmatpush1.msra.mxu0 %v1360
        %1396 = vmatprep.subr.mxu0 0.0
        %1397 = vmatpush1.msra.mxu0 %v1361
        %1398 = vmatprep.subr.mxu0 0.0
        %1399 = vmatpush1.msra.mxu0 %v1362
        %1400 = vmatprep.subr.mxu0 0.0
        %1401 = vmatpush1.msra.mxu0 %v1363
        %1402 = vmatprep.subr.mxu0 0.0
        %1403 = vmatpush1.msra.mxu0 %v1364
        %1404 = vmatprep.subr.mxu0 0.0
        %1405 = vmatpush1.msra.mxu0 0.0
        %1406 = vmatprep.subr.mxu0 0.0
        %1407 = vmatpush1.msra.mxu0 0.0
        %1408 = vmatprep.subr.mxu0 0.0
        %1409 = vmatpush1.msra.mxu0 0.0
        %1410 = vmatprep.subr.mxu0 0.0
        %1411 = vmatpush1.msra.mxu0 0.0
        %1412 = vmatprep.subr.mxu0 0.0
        %1413 = vmatpush1.msra.mxu0 0.0
        %1414 = vmatprep.subr.mxu0 0.0
        %1415 = vmatpush1.msra.mxu0 0.0
        %1416 = vmatprep.subr.mxu0 0.0
        %1417 = vmatpush1.msra.mxu0 0.0
        %1418 = vmatprep.subr.mxu0 0.0
        %1419 = vmatpush1.msra.mxu0 0.0
        %1420 = vmatprep.subr.mxu0 0.0
        %1421 = vmatpush1.msra.mxu0 0.0
        %1422 = vmatprep.subr.mxu0 0.0
        %1423 = vmatpush1.msra.mxu0 0.0
        %1424 = vmatprep.subr.mxu0 0.0
        %1425 = vmatpush1.msra.mxu0 0.0
        %1426 = vmatprep.subr.mxu0 0.0
        %1427 = vmatpush1.msra.mxu0 0.0
        %1428 = vmatprep.subr.mxu0 0.0
        %1429 = vmatpush1.msra.mxu0 0.0
        %1430 = vmatprep.subr.mxu0 0.0
        %1431 = vmatpush1.msra.mxu0 0.0
        %1432 = vmatprep.subr.mxu0 0.0
        %1433 = vmatpush1.msra.mxu0 0.0
        %1434 = vmatprep.subr.mxu0 0.0
        %1435 = vmatpush1.msra.mxu0 0.0
        %1436 = vmatprep.mubr.f32.mxu0 0.0
        %1437 = vmatmul.mubr.f32.gmra.mrb[0].mxu0 %v1347
        %v1438 = vpop.f32.mrb[0].mxu0
        %v1439 = vadd.f32 %v1370, %v1438
        %v1440 = vpop.f32.mrb[0].mxu0
        %1441 = vmatprep.mubr.f32.mxu0 0.0
        %1442 = vmatmul.mubr.f32.gmra.mrb[0].mxu0 %v1348
        %v1443 = vpop.f32.mrb[0].mxu0
        %v1444 = vadd.f32 %v1370, %v1443
        %v1445 = vpop.f32.mrb[0].mxu0
        %1446 = vdwg.mxu0
        %v1447 = vadd.f32 %v1196, %v1439
        %v1448 = vadd.f32 %v1197, %v1444
        %1449 = vst [vmem:[%s572] sm:$0xff] %v1447
        %1450 = vst [vmem:[%s572 + $0x8] sm:$0xff] %v1448
        %s1451 = sand.u32 %s341, 1
        %s1452 = scalar_lea.sflag [#allocation7], %s1451
        %s1453 = sand.u32 %s341, 1
        %s1454 = smul.addr %s1453, 16
        %s1455 = scalar_lea.vmem [#allocation17], %s1454
        // Predicated region
        $region105: #{tpu_custom_call.1} parent=75 // pred_check
          %p1456 = pneg %p351
        $region106: #{tpu_custom_call.1} parent=75 // pred_check_branch
          %1458 = sbr.rel (%p1456) target = $region108
        $region107: #{tpu_custom_call.1} parent=75 // pred_region
          %s1460 = ssub.s32 256, 256
          %1461 = vsyncadd %s1452, %s1460
          %s1462 = smul.addr %s34, 2
          %s1463 = smul.addr %s1462, 128
          %s1464 = scalar_lea.hbm %s14, %s1463
          %s1465 = sshll.u32 %s1455, 4
          %s1466 = int_to_ptr.vmem [resolvable:$true] %s1465
          %1471 = dma.vmem_to_hbm [thread:$0]  %s1466, 256, %s1464, %s1452, 128, 128, 8
        $region108: #{tpu_custom_call.1} parent=75 // pred_fallthru
          _
      $region76: #{tpu_custom_call.1} parent=5 // pred_fallthru
        _
      %p1472 = scmp.le.s32.totalorder 2, %s29
      // Predicated region
      $region109: #{tpu_custom_call.1} parent=5 // pred_check
        %p1473 = pneg %p1472
      $region110: #{tpu_custom_call.1} parent=5 // pred_check_branch
        %1475 = sbr.rel (%p1473) target = $region112
      $region111: #{tpu_custom_call.1} parent=5 // pred_region
        %s1476 = ssub.s32 %s29, 2
        // Predicated region
        $region113: #{tpu_custom_call.1} parent=111 // pred_check
          %p1477 = pneg %p357
        $region114: #{tpu_custom_call.1} parent=111 // pred_check_branch
          %1479 = sbr.rel (%p1477) target = $region116
        $region115: #{tpu_custom_call.1} parent=111 // pred_region
          %s1480 = sand.u32 %s342, 1
          %s1481 = scalar_lea.sflag [#allocation7], %s1480
          %s1482 = sand.u32 %s342, 1
          %s1483 = smul.addr %s1482, 16
          %s1484 = scalar_lea.vmem [#allocation17], %s1483
          %1485 = dma.done %s1481, 256
        $region116: #{tpu_custom_call.1} parent=111 // pred_fallthru
          _
      $region112: #{tpu_custom_call.1} parent=5 // pred_fallthru
        _
    $region6: #{tpu_custom_call.1} parent=1 // loop_footer
      %s33 = sadd.s32 1, %s29
    $region7: #{tpu_custom_call.1} parent=1 // loop_footer_branch
      %28 = sbr.rel target = $region3
    $region8: #{tpu_custom_call.1} parent=1 // loop_exit
      _
    %1486 = vsyncpa [#allocation6], 1
    %s1487 = scalar_lea.sflag [#allocation6], 1
    %1488 = vsyncpa %s1487, 1
    %1489 = vsyncpa [#allocation9], 1
    %1490 = vsyncpa [#allocation12], 1
    %1491 = vsyncpa [#allocation15], 1
    %1492 = vsyncpa [#allocation7], 1
    %s1493 = scalar_lea.sflag [#allocation7], 1
    %1494 = vsyncpa %s1493, 1

</llo_original>
